<compile_context>
chip_gen: v5e
topology: v5e:2x2
jax: 0.10.0
libtpu: 0.0.40
codegen_flags: <defaults>
</compile_context>

<pallas_src>
import functools
import math

import jax
import jax.numpy as jnp
from jax.experimental import pallas as pl
from jax.experimental.pallas import tpu as pltpu

BN_EPS = 1e-5
MATMUL_DTYPE = jnp.bfloat16      # MXU-native dot inputs; accumulation / BN / ReLU stay f32

# tap offset k in {0,1,2}  ->  (slice start along the half-resolution axis, parity index)
_TAP = ((0, 0), (0, 1), (1, 0))


# ------------------------------ fused Pallas kernel ------------------------------ #
def _make_stem_kernel(B, spatial, chans):
    """Build the fused ConvStem kernel.

    spatial[s] : (H, W) of the stage-s input (s = 0..depth-1); spatial[depth] = final.
    chans[s]   : channel count of the stage-s input; chans[depth] = last stage width.

    Activation layout everywhere inside the kernel (input and inter-stage scratch):
        (B, H/2+1, W/2+1, 4*C)  bf16,
    i.e. the zero-padded image, split by (row-parity, col-parity) folded together with the
    channel axis into one lane-dense trailing dim (index = row_par*2*C + col_par*C + c).
    """
    depth = len(spatial) - 1

    def kernel(*refs):
        x_ref = refs[0]                                   # (B, H/2+1, W/2+1, 4*C0) bf16
        stage_refs = refs[1:1 + 3 * depth]                # (w, gamma, beta) per stage
        projw_ref = refs[1 + 3 * depth]                   # (C_last, E) bf16
        projb_ref = refs[2 + 3 * depth]                   # (1, E) f32
        out_ref = refs[3 + 3 * depth]                     # (B*Hf*Wf, E) f32
        pad_refs = refs[4 + 3 * depth:]                   # depth-1 bf16 VMEM scratches

        cur = x_ref
        y = None
        for s in range(depth):
            w_ref, g_ref, b_ref = stage_refs[3 * s:3 * s + 3]
            ho, wo = spatial[s + 1]
            cin, cout = chans[s], chans[s + 1]
            m = B * ho * wo

            # ---- 3x3 / stride-2 / pad-1 conv: 9 per-tap MXU matmuls accumulated in f32.
            #      Every tap is a contiguous static slice; no im2col concat / temporary.
            acc = jnp.zeros((m, cout), jnp.float32)
            for kh in range(3):
                ah, ph = _TAP[kh]
                for kw in range(3):
                    aw, qw = _TAP[kw]
                    t = ph * 2 + qw                       # parity quadrant in the lane axis
                    tap = cur[:, ah:ah + ho, aw:aw + wo, t * cin:(t + 1) * cin]
                    acc = acc + jnp.dot(tap.reshape(m, cin), w_ref[kh * 3 + kw],
                                        preferred_element_type=jnp.float32)

            # ---- BatchNorm (training-mode batch stats): two-pass, reductions on the MXU.
            #      ones has 8 identical rows to keep the MXU M-tile aligned; row 0 is used.
            inv_m = 1.0 / m
            ones = jnp.ones((8, m), jnp.float32)
            mean = jnp.dot(ones, acc, preferred_element_type=jnp.float32)[0:1, :] * inv_m
            yc = acc - mean
            var = jnp.dot(ones, yc * yc, preferred_element_type=jnp.float32)[0:1, :] * inv_m
            scale = g_ref[...] * jax.lax.rsqrt(var + BN_EPS)
            y = jnp.maximum(yc * scale + b_ref[...], 0.0)          # (m, cout) f32

            # ---- hand the activation to the next stage: parity-fold scatter in VMEM.
            if s + 1 < depth:
                pad = pad_refs[s]                 # (B, ho//2+1, wo//2+1, 4*cout) bf16
                h2, w2 = ho // 2, wo // 2

                # Zero ONLY the halo (the conv zero-padding); the interior is fully
                # overwritten by the 4 parity scatters right below.
                zrow = jnp.zeros((B, 1, w2 + 1, cout), pad.dtype)
                zcol = jnp.zeros((B, h2 + 1, 1, cout), pad.dtype)
                for q, (hr, wc) in enumerate(((0, 0), (0, w2), (h2, 0), (h2, w2))):
                    pad[:, hr:hr + 1, :, q * cout:(q + 1) * cout] = zrow
                    pad[:, :, wc:wc + 1, q * cout:(q + 1) * cout] = zcol

                # output pixel (2a+p, 2b+q) -> padded (+1) -> parity quadrant (1-p, 1-q)
                ys = y.astype(pad.dtype).reshape(B, h2, 2, w2, 2, cout)
                pad[:, 1:h2 + 1, 1:w2 + 1, 0 * cout:1 * cout] = ys[:, :, 1, :, 1, :]
                pad[:, 1:h2 + 1, 0:w2,     1 * cout:2 * cout] = ys[:, :, 1, :, 0, :]
                pad[:, 0:h2,     1:w2 + 1, 2 * cout:3 * cout] = ys[:, :, 0, :, 1, :]
                pad[:, 0:h2,     0:w2,     3 * cout:4 * cout] = ys[:, :, 0, :, 0, :]
                cur = pad

        # ---- fused trailing 1x1 conv + bias (projection to embed_dim).
        out = jnp.dot(y.astype(projw_ref.dtype), projw_ref[...],
                      preferred_element_type=jnp.float32) + projb_ref[...]
        out_ref[...] = out.astype(out_ref.dtype)

    return kernel


# --------------------------------- JAX wrapper ----------------------------------- #
def _pad_parity_fold(x_nhwc):
    """NHWC -> zero-pad(1) -> (B, (H+2)//2, (W+2)//2, 4*C); lane = [row_par, col_par, c]."""
    B, H, W, C = x_nhwc.shape
    xp = jnp.pad(x_nhwc, ((0, 0), (1, 1), (1, 1), (0, 0)))
    xp = xp.reshape(B, (H + 2) // 2, 2, (W + 2) // 2, 2, C)
    xp = jnp.transpose(xp, (0, 1, 3, 2, 4, 5))                 # (B, h2+1, w2+1, 2, 2, C)
    return xp.reshape(B, (H + 2) // 2, (W + 2) // 2, 4 * C)


def _nbytes(shape, dtype):
    return math.prod(shape) * jnp.dtype(dtype).itemsize


@functools.partial(jax.jit, static_argnames=("flatten",))
def conv_stem_forward(x_nchw, params, flatten=True):
    """ConvStem.forward: [Conv3x3(s2,p1)+BN+ReLU]*depth -> Conv1x1+bias -> flatten -> Identity."""
    depth = len(params["stages"])
    x = jnp.transpose(x_nchw, (0, 2, 3, 1)).astype(MATMUL_DTYPE)     # NCHW -> NHWC, bf16
    B, H, W, C0 = x.shape
    assert H % (2 ** depth) == 0 and W % (2 ** depth) == 0, "spatial dims must halve cleanly"

    spatial = [(H >> s, W >> s) for s in range(depth + 1)]
    chans = [C0] + [w.shape[0] for (w, _, _) in params["stages"]]
    embed_dim = params["proj_w"].shape[0]
    Hf, Wf = spatial[-1]
    m_final = B * Hf * Wf

    # Tiny trace-time weight re-layouts (free layout plumbing; no activation transposes).
    stage_args = []
    for (w, g, b) in params["stages"]:
        cout, cin = w.shape[0], w.shape[1]
        wt = jnp.transpose(w, (2, 3, 1, 0)).reshape(9, cin, cout).astype(MATMUL_DTYPE)
        stage_args += [wt,
                       g.reshape(1, cout).astype(jnp.float32),
                       b.reshape(1, cout).astype(jnp.float32)]
    c_last = chans[-1]
    proj_w = jnp.transpose(params["proj_w"].reshape(embed_dim, c_last)).astype(MATMUL_DTYPE)
    proj_b = params["proj_b"].reshape(1, embed_dim).astype(jnp.float32)

    xs = _pad_parity_fold(x)

    # VMEM scratch holding each intermediate activation in the parity-folded padded layout.
    scratch_dims = [(B, spatial[s][0] // 2 + 1, spatial[s][1] // 2 + 1, 4 * chans[s])
                    for s in range(1, depth)]
    scratch = [pltpu.VMEM(shp, MATMUL_DTYPE) for shp in scratch_dims]

    # Explicit VMEM budget (inputs + weights + scratch + f32 working sets) with slack,
    # instead of relying on the 16/32 MiB scoped defaults.
    budget = _nbytes(xs.shape, MATMUL_DTYPE) + _nbytes((m_final, embed_dim), jnp.float32)
    budget += sum(_nbytes(a.shape, a.dtype) for a in stage_args)
    budget += _nbytes(proj_w.shape, MATMUL_DTYPE) + _nbytes(proj_b.shape, jnp.float32)
    budget += sum(_nbytes(shp, MATMUL_DTYPE) for shp in scratch_dims)
    for s in range(depth):
        ms = B * spatial[s + 1][0] * spatial[s + 1][1]
        budget += 3 * ms * chans[s + 1] * 4          # f32 conv accumulator / BN working set
        budget += 2 * ms * chans[s] * 2              # bf16 tap temporaries
    vmem_limit = int(min(max(2 * budget + (4 << 20), 16 << 20), 96 << 20))

    vmem = pl.BlockSpec(memory_space=pltpu.MemorySpace.VMEM)
    out2d = pl.pallas_call(
        _make_stem_kernel(B, spatial, chans),
        out_shape=jax.ShapeDtypeStruct((m_final, embed_dim), jnp.float32),
        in_specs=[vmem] * (1 + 3 * depth + 2),
        out_specs=vmem,
        scratch_shapes=scratch,
        compiler_params=pltpu.CompilerParams(vmem_limit_bytes=vmem_limit),
    )(xs, *stage_args, proj_w, proj_b)

    if flatten:
        return out2d.reshape(B, Hf * Wf, embed_dim)       # == x.flatten(2).transpose(1, 2)
    return jnp.transpose(out2d.reshape(B, Hf, Wf, embed_dim), (0, 3, 1, 2))   # back to NCHW
    # norm = nn.Identity() (norm_layer=None)


# ------------------------------ pure-JAX reference -------------------------------- #
def _ref_forward(x_nchw, params):
    """Reference with identical math: bf16 conv inputs, f32 accumulation / BN / ReLU."""
    x = x_nchw
    for (w, g, b) in params["stages"]:
        y = jax.lax.conv_general_dilated(
            x.astype(MATMUL_DTYPE), w.astype(MATMUL_DTYPE),
            window_strides=(2, 2), padding=((1, 1), (1, 1)),
            dimension_numbers=("NCHW", "OIHW", "NCHW"),
            preferred_element_type=jnp.float32)
        mean = jnp.mean(y, axis=(0, 2, 3), keepdims=True)
        var = jnp.mean(jnp.square(y - mean), axis=(0, 2, 3), keepdims=True)
        y = (y - mean) * jax.lax.rsqrt(var + BN_EPS)
        y = y * g.reshape(1, -1, 1, 1) + b.reshape(1, -1, 1, 1)
        x = jnp.maximum(y, 0.0)
    y = jax.lax.conv_general_dilated(
        x.astype(MATMUL_DTYPE), params["proj_w"].astype(MATMUL_DTYPE),
        window_strides=(1, 1), padding=((0, 0), (0, 0)),
        dimension_numbers=("NCHW", "OIHW", "NCHW"),
        preferred_element_type=jnp.float32)
    y = y + params["proj_b"].reshape(1, -1, 1, 1)
    B, E, H, W = y.shape
    return jnp.transpose(y.reshape(B, E, H * W), (0, 2, 1))


# ------------------------------------- main --------------------------------------- #
if __name__ == "__main__":
    # Small ConvStem config: in_chans=4, embed_dim=32, embed_init_compr=4, depth=2,
    # embed_step_expn=2, norm_layer=None (Identity), flatten=True, ReLU activation.
    in_chans, embed_dim, embed_init_compr, depth, embed_step_expn = 4, 32, 4, 2, 2
    assert embed_dim % embed_init_compr == 0

    key = jax.random.PRNGKey(0)
    ks = jax.random.split(key, 3 * depth + 3)

    stages = []
    cin, cout = in_chans, embed_dim // embed_init_compr
    ki = 0
    for _ in range(depth):
        w = 0.1 * jax.random.normal(ks[ki], (cout, cin, 3, 3), jnp.float32); ki += 1
        g = 1.0 + 0.1 * jax.random.normal(ks[ki], (cout,), jnp.float32);     ki += 1
        b = 0.1 * jax.random.normal(ks[ki], (cout,), jnp.float32);           ki += 1
        stages.append((w, g, b))
        cin, cout = cout, cout * embed_step_expn
    proj_w = 0.1 * jax.random.normal(ks[ki], (embed_dim, cin, 1, 1), jnp.float32); ki += 1
    proj_b = 0.1 * jax.random.normal(ks[ki], (embed_dim,), jnp.float32);           ki += 1
    params = {"stages": stages, "proj_w": proj_w, "proj_b": proj_b}

    x = jax.random.normal(ks[ki], (2, in_chans, 16, 16), jnp.float32)   # NCHW like PyTorch

    out = jax.block_until_ready(conv_stem_forward(x, params, flatten=True))
    ref = jax.block_until_ready(_ref_forward(x, params))

    assert out.shape == (2, (16 // (2 ** depth)) ** 2, embed_dim), out.shape   # (2, 16, 32)
    max_err = float(jnp.max(jnp.abs(out - ref)))
    assert jnp.allclose(out, ref, atol=1e-2, rtol=1e-2), max_err

    print("KERNEL_OK")
</pallas_src>

<mosaic_0001>
module attributes {stable_mosaic.version = 11 : i64} {
  func.func @kernel(%arg0: memref<2x9x9x16xbf16, #tpu.memory_space<vmem>>, %arg1: memref<9x4x8xbf16, #tpu.memory_space<vmem>>, %arg2: memref<1x8xf32, #tpu.memory_space<vmem>>, %arg3: memref<1x8xf32, #tpu.memory_space<vmem>>, %arg4: memref<9x8x16xbf16, #tpu.memory_space<vmem>>, %arg5: memref<1x16xf32, #tpu.memory_space<vmem>>, %arg6: memref<1x16xf32, #tpu.memory_space<vmem>>, %arg7: memref<16x32xbf16, #tpu.memory_space<vmem>>, %arg8: memref<1x32xf32, #tpu.memory_space<vmem>>, %arg9: memref<32x32xf32, #tpu.memory_space<vmem>>, %arg10: memref<2x5x5x32xbf16, #tpu.memory_space<vmem>>) attributes {dimension_semantics = [], scalar_prefetch = 0 : i64, scratch_operands = 1 : i64, tpu.core_type = #tpu.core_type<tc>} {
    %cst = arith.constant 0.000000e+00 : f32
    %0 = vector.broadcast %cst : f32 to vector<128x8xf32>
    %c0 = arith.constant 0 : index
    %c0_0 = arith.constant 0 : index
    %c0_1 = arith.constant 0 : index
    %c0_2 = arith.constant 0 : index
    %1 = vector.load %arg0[%c0, %c0_0, %c0_1, %c0_2] : memref<2x9x9x16xbf16, #tpu.memory_space<vmem>>, vector<2x8x8x4xbf16>
    %2 = vector.shape_cast %1 : vector<2x8x8x4xbf16> to vector<128x4xbf16>
    %c0_3 = arith.constant 0 : index
    %c0_4 = arith.constant 0 : index
    %c0_5 = arith.constant 0 : index
    %3 = vector.load %arg1[%c0_3, %c0_4, %c0_5] : memref<9x4x8xbf16, #tpu.memory_space<vmem>>, vector<1x4x8xbf16>
    %4 = vector.shape_cast %3 : vector<1x4x8xbf16> to vector<4x8xbf16>
    %cst_6 = arith.constant dense<0.000000e+00> : vector<128x8xf32>
    %5 = tpu.matmul %2, %4, %cst_6 {dimension_numbers = #tpu.dot_dimension_numbers<[1], [0], [0], [1], [0, 0, 1, 1], [], []>} : vector<128x4xbf16>, vector<4x8xbf16>, vector<128x8xf32> -> vector<128x8xf32>
    %6 = arith.addf %0, %5 : vector<128x8xf32>
    %c0_7 = arith.constant 0 : index
    %c0_8 = arith.constant 0 : index
    %c0_9 = arith.constant 0 : index
    %c4 = arith.constant 4 : index
    %7 = vector.load %arg0[%c0_7, %c0_8, %c0_9, %c4] : memref<2x9x9x16xbf16, #tpu.memory_space<vmem>>, vector<2x8x8x4xbf16>
    %8 = vector.shape_cast %7 : vector<2x8x8x4xbf16> to vector<128x4xbf16>
    %c1 = arith.constant 1 : index
    %c0_10 = arith.constant 0 : index
    %c0_11 = arith.constant 0 : index
    %9 = vector.load %arg1[%c1, %c0_10, %c0_11] : memref<9x4x8xbf16, #tpu.memory_space<vmem>>, vector<1x4x8xbf16>
    %10 = vector.shape_cast %9 : vector<1x4x8xbf16> to vector<4x8xbf16>
    %cst_12 = arith.constant dense<0.000000e+00> : vector<128x8xf32>
    %11 = tpu.matmul %8, %10, %cst_12 {dimension_numbers = #tpu.dot_dimension_numbers<[1], [0], [0], [1], [0, 0, 1, 1], [], []>} : vector<128x4xbf16>, vector<4x8xbf16>, vector<128x8xf32> -> vector<128x8xf32>
    %12 = arith.addf %6, %11 : vector<128x8xf32>
    %c0_13 = arith.constant 0 : index
    %c0_14 = arith.constant 0 : index
    %c1_15 = arith.constant 1 : index
    %c0_16 = arith.constant 0 : index
    %13 = vector.load %arg0[%c0_13, %c0_14, %c1_15, %c0_16] : memref<2x9x9x16xbf16, #tpu.memory_space<vmem>>, vector<2x8x8x4xbf16>
    %14 = vector.shape_cast %13 : vector<2x8x8x4xbf16> to vector<128x4xbf16>
    %c2 = arith.constant 2 : index
    %c0_17 = arith.constant 0 : index
    %c0_18 = arith.constant 0 : index
    %15 = vector.load %arg1[%c2, %c0_17, %c0_18] : memref<9x4x8xbf16, #tpu.memory_space<vmem>>, vector<1x4x8xbf16>
    %16 = vector.shape_cast %15 : vector<1x4x8xbf16> to vector<4x8xbf16>
    %cst_19 = arith.constant dense<0.000000e+00> : vector<128x8xf32>
    %17 = tpu.matmul %14, %16, %cst_19 {dimension_numbers = #tpu.dot_dimension_numbers<[1], [0], [0], [1], [0, 0, 1, 1], [], []>} : vector<128x4xbf16>, vector<4x8xbf16>, vector<128x8xf32> -> vector<128x8xf32>
    %18 = arith.addf %12, %17 : vector<128x8xf32>
    %c0_20 = arith.constant 0 : index
    %c0_21 = arith.constant 0 : index
    %c0_22 = arith.constant 0 : index
    %c8 = arith.constant 8 : index
    %19 = vector.load %arg0[%c0_20, %c0_21, %c0_22, %c8] : memref<2x9x9x16xbf16, #tpu.memory_space<vmem>>, vector<2x8x8x4xbf16>
    %20 = vector.shape_cast %19 : vector<2x8x8x4xbf16> to vector<128x4xbf16>
    %c3 = arith.constant 3 : index
    %c0_23 = arith.constant 0 : index
    %c0_24 = arith.constant 0 : index
    %21 = vector.load %arg1[%c3, %c0_23, %c0_24] : memref<9x4x8xbf16, #tpu.memory_space<vmem>>, vector<1x4x8xbf16>
    %22 = vector.shape_cast %21 : vector<1x4x8xbf16> to vector<4x8xbf16>
    %cst_25 = arith.constant dense<0.000000e+00> : vector<128x8xf32>
    %23 = tpu.matmul %20, %22, %cst_25 {dimension_numbers = #tpu.dot_dimension_numbers<[1], [0], [0], [1], [0, 0, 1, 1], [], []>} : vector<128x4xbf16>, vector<4x8xbf16>, vector<128x8xf32> -> vector<128x8xf32>
    %24 = arith.addf %18, %23 : vector<128x8xf32>
    %c0_26 = arith.constant 0 : index
    %c0_27 = arith.constant 0 : index
    %c0_28 = arith.constant 0 : index
    %c12 = arith.constant 12 : index
    %25 = vector.load %arg0[%c0_26, %c0_27, %c0_28, %c12] : memref<2x9x9x16xbf16, #tpu.memory_space<vmem>>, vector<2x8x8x4xbf16>
    %26 = vector.shape_cast %25 : vector<2x8x8x4xbf16> to vector<128x4xbf16>
    %c4_29 = arith.constant 4 : index
    %c0_30 = arith.constant 0 : index
    %c0_31 = arith.constant 0 : index
    %27 = vector.load %arg1[%c4_29, %c0_30, %c0_31] : memref<9x4x8xbf16, #tpu.memory_space<vmem>>, vector<1x4x8xbf16>
    %28 = vector.shape_cast %27 : vector<1x4x8xbf16> to vector<4x8xbf16>
    %cst_32 = arith.constant dense<0.000000e+00> : vector<128x8xf32>
    %29 = tpu.matmul %26, %28, %cst_32 {dimension_numbers = #tpu.dot_dimension_numbers<[1], [0], [0], [1], [0, 0, 1, 1], [], []>} : vector<128x4xbf16>, vector<4x8xbf16>, vector<128x8xf32> -> vector<128x8xf32>
    %30 = arith.addf %24, %29 : vector<128x8xf32>
    %c0_33 = arith.constant 0 : index
    %c0_34 = arith.constant 0 : index
    %c1_35 = arith.constant 1 : index
    %c8_36 = arith.constant 8 : index
    %31 = vector.load %arg0[%c0_33, %c0_34, %c1_35, %c8_36] : memref<2x9x9x16xbf16, #tpu.memory_space<vmem>>, vector<2x8x8x4xbf16>
    %32 = vector.shape_cast %31 : vector<2x8x8x4xbf16> to vector<128x4xbf16>
    %c5 = arith.constant 5 : index
    %c0_37 = arith.constant 0 : index
    %c0_38 = arith.constant 0 : index
    %33 = vector.load %arg1[%c5, %c0_37, %c0_38] : memref<9x4x8xbf16, #tpu.memory_space<vmem>>, vector<1x4x8xbf16>
    %34 = vector.shape_cast %33 : vector<1x4x8xbf16> to vector<4x8xbf16>
    %cst_39 = arith.constant dense<0.000000e+00> : vector<128x8xf32>
    %35 = tpu.matmul %32, %34, %cst_39 {dimension_numbers = #tpu.dot_dimension_numbers<[1], [0], [0], [1], [0, 0, 1, 1], [], []>} : vector<128x4xbf16>, vector<4x8xbf16>, vector<128x8xf32> -> vector<128x8xf32>
    %36 = arith.addf %30, %35 : vector<128x8xf32>
    %c0_40 = arith.constant 0 : index
    %c1_41 = arith.constant 1 : index
    %c0_42 = arith.constant 0 : index
    %c0_43 = arith.constant 0 : index
    %37 = vector.load %arg0[%c0_40, %c1_41, %c0_42, %c0_43] : memref<2x9x9x16xbf16, #tpu.memory_space<vmem>>, vector<2x8x8x4xbf16>
    %38 = vector.shape_cast %37 : vector<2x8x8x4xbf16> to vector<128x4xbf16>
    %c6 = arith.constant 6 : index
    %c0_44 = arith.constant 0 : index
    %c0_45 = arith.constant 0 : index
    %39 = vector.load %arg1[%c6, %c0_44, %c0_45] : memref<9x4x8xbf16, #tpu.memory_space<vmem>>, vector<1x4x8xbf16>
    %40 = vector.shape_cast %39 : vector<1x4x8xbf16> to vector<4x8xbf16>
    %cst_46 = arith.constant dense<0.000000e+00> : vector<128x8xf32>
    %41 = tpu.matmul %38, %40, %cst_46 {dimension_numbers = #tpu.dot_dimension_numbers<[1], [0], [0], [1], [0, 0, 1, 1], [], []>} : vector<128x4xbf16>, vector<4x8xbf16>, vector<128x8xf32> -> vector<128x8xf32>
    %42 = arith.addf %36, %41 : vector<128x8xf32>
    %c0_47 = arith.constant 0 : index
    %c1_48 = arith.constant 1 : index
    %c0_49 = arith.constant 0 : index
    %c4_50 = arith.constant 4 : index
    %43 = vector.load %arg0[%c0_47, %c1_48, %c0_49, %c4_50] : memref<2x9x9x16xbf16, #tpu.memory_space<vmem>>, vector<2x8x8x4xbf16>
    %44 = vector.shape_cast %43 : vector<2x8x8x4xbf16> to vector<128x4xbf16>
    %c7 = arith.constant 7 : index
    %c0_51 = arith.constant 0 : index
    %c0_52 = arith.constant 0 : index
    %45 = vector.load %arg1[%c7, %c0_51, %c0_52] : memref<9x4x8xbf16, #tpu.memory_space<vmem>>, vector<1x4x8xbf16>
    %46 = vector.shape_cast %45 : vector<1x4x8xbf16> to vector<4x8xbf16>
    %cst_53 = arith.constant dense<0.000000e+00> : vector<128x8xf32>
    %47 = tpu.matmul %44, %46, %cst_53 {dimension_numbers = #tpu.dot_dimension_numbers<[1], [0], [0], [1], [0, 0, 1, 1], [], []>} : vector<128x4xbf16>, vector<4x8xbf16>, vector<128x8xf32> -> vector<128x8xf32>
    %48 = arith.addf %42, %47 : vector<128x8xf32>
    %c0_54 = arith.constant 0 : index
    %c1_55 = arith.constant 1 : index
    %c1_56 = arith.constant 1 : index
    %c0_57 = arith.constant 0 : index
    %49 = vector.load %arg0[%c0_54, %c1_55, %c1_56, %c0_57] : memref<2x9x9x16xbf16, #tpu.memory_space<vmem>>, vector<2x8x8x4xbf16>
    %50 = vector.shape_cast %49 : vector<2x8x8x4xbf16> to vector<128x4xbf16>
    %c8_58 = arith.constant 8 : index
    %c0_59 = arith.constant 0 : index
    %c0_60 = arith.constant 0 : index
    %51 = vector.load %arg1[%c8_58, %c0_59, %c0_60] : memref<9x4x8xbf16, #tpu.memory_space<vmem>>, vector<1x4x8xbf16>
    %52 = vector.shape_cast %51 : vector<1x4x8xbf16> to vector<4x8xbf16>
    %cst_61 = arith.constant dense<0.000000e+00> : vector<128x8xf32>
    %53 = tpu.matmul %50, %52, %cst_61 {dimension_numbers = #tpu.dot_dimension_numbers<[1], [0], [0], [1], [0, 0, 1, 1], [], []>} : vector<128x4xbf16>, vector<4x8xbf16>, vector<128x8xf32> -> vector<128x8xf32>
    %54 = arith.addf %48, %53 : vector<128x8xf32>
    %cst_62 = arith.constant 1.000000e+00 : f32
    %55 = vector.broadcast %cst_62 : f32 to vector<8x128xf32>
    %cst_63 = arith.constant dense<0.000000e+00> : vector<8x8xf32>
    %56 = tpu.matmul %55, %54, %cst_63 {dimension_numbers = #tpu.dot_dimension_numbers<[1], [0], [0], [1], [0, 0, 1, 1], [], []>} : vector<8x128xf32>, vector<128x8xf32>, vector<8x8xf32> -> vector<8x8xf32>
    %57 = vector.extract_strided_slice %56 {offsets = [0, 0], sizes = [1, 8], strides = [1, 1]} : vector<8x8xf32> to vector<1x8xf32>
    %cst_64 = arith.constant 7.812500e-03 : f32
    %58 = vector.broadcast %cst_64 : f32 to vector<1x8xf32>
    %59 = arith.mulf %57, %58 : vector<1x8xf32>
    %60 = vector.broadcast %59 : vector<1x8xf32> to vector<128x8xf32>
    %61 = arith.subf %54, %60 : vector<128x8xf32>
    %62 = arith.mulf %61, %61 : vector<128x8xf32>
    %cst_65 = arith.constant dense<0.000000e+00> : vector<8x8xf32>
    %63 = tpu.matmul %55, %62, %cst_65 {dimension_numbers = #tpu.dot_dimension_numbers<[1], [0], [0], [1], [0, 0, 1, 1], [], []>} : vector<8x128xf32>, vector<128x8xf32>, vector<8x8xf32> -> vector<8x8xf32>
    %64 = vector.extract_strided_slice %63 {offsets = [0, 0], sizes = [1, 8], strides = [1, 1]} : vector<8x8xf32> to vector<1x8xf32>
    %cst_66 = arith.constant 7.812500e-03 : f32
    %65 = vector.broadcast %cst_66 : f32 to vector<1x8xf32>
    %66 = arith.mulf %64, %65 : vector<1x8xf32>
    %c0_67 = arith.constant 0 : index
    %c0_68 = arith.constant 0 : index
    %67 = vector.load %arg2[%c0_67, %c0_68] : memref<1x8xf32, #tpu.memory_space<vmem>>, vector<1x8xf32>
    %cst_69 = arith.constant 9.99999974E-6 : f32
    %68 = vector.broadcast %cst_69 : f32 to vector<1x8xf32>
    %69 = arith.addf %66, %68 : vector<1x8xf32>
    %70 = math.rsqrt %69 : vector<1x8xf32>
    %71 = arith.mulf %67, %70 : vector<1x8xf32>
    %72 = vector.broadcast %71 : vector<1x8xf32> to vector<128x8xf32>
    %73 = arith.mulf %61, %72 : vector<128x8xf32>
    %c0_70 = arith.constant 0 : index
    %c0_71 = arith.constant 0 : index
    %74 = vector.load %arg3[%c0_70, %c0_71] : memref<1x8xf32, #tpu.memory_space<vmem>>, vector<1x8xf32>
    %75 = vector.broadcast %74 : vector<1x8xf32> to vector<128x8xf32>
    %76 = arith.addf %73, %75 : vector<128x8xf32>
    %cst_72 = arith.constant 0.000000e+00 : f32
    %77 = vector.broadcast %cst_72 : f32 to vector<128x8xf32>
    %78 = arith.maximumf %76, %77 : vector<128x8xf32>
    %cst_73 = arith.constant 0.000000e+00 : bf16
    %79 = vector.broadcast %cst_73 : bf16 to vector<2x1x5x8xbf16>
    %cst_74 = arith.constant 0.000000e+00 : bf16
    %80 = vector.broadcast %cst_74 : bf16 to vector<2x5x1x8xbf16>
    %c0_75 = arith.constant 0 : index
    %c0_76 = arith.constant 0 : index
    %c0_77 = arith.constant 0 : index
    %c0_78 = arith.constant 0 : index
    %81 = vector.load %arg10[%c0_75, %c0_76, %c0_77, %c0_78] : memref<2x5x5x32xbf16, #tpu.memory_space<vmem>>, vector<2x1x5x8xbf16>
    tpu.vector_store %arg10[%c0_75, %c0_76, %c0_77, %c0_78], %79 {strides = array<i32>} : memref<2x5x5x32xbf16, #tpu.memory_space<vmem>>, vector<2x1x5x8xbf16>,
    %c0_79 = arith.constant 0 : index
    %c0_80 = arith.constant 0 : index
    %c0_81 = arith.constant 0 : index
    %c0_82 = arith.constant 0 : index
    %82 = vector.load %arg10[%c0_79, %c0_80, %c0_81, %c0_82] : memref<2x5x5x32xbf16, #tpu.memory_space<vmem>>, vector<2x5x1x8xbf16>
    tpu.vector_store %arg10[%c0_79, %c0_80, %c0_81, %c0_82], %80 {strides = array<i32>} : memref<2x5x5x32xbf16, #tpu.memory_space<vmem>>, vector<2x5x1x8xbf16>,
    %c0_83 = arith.constant 0 : index
    %c0_84 = arith.constant 0 : index
    %c0_85 = arith.constant 0 : index
    %c8_86 = arith.constant 8 : index
    %83 = vector.load %arg10[%c0_83, %c0_84, %c0_85, %c8_86] : memref<2x5x5x32xbf16, #tpu.memory_space<vmem>>, vector<2x1x5x8xbf16>
    tpu.vector_store %arg10[%c0_83, %c0_84, %c0_85, %c8_86], %79 {strides = array<i32>} : memref<2x5x5x32xbf16, #tpu.memory_space<vmem>>, vector<2x1x5x8xbf16>,
    %c0_87 = arith.constant 0 : index
    %c0_88 = arith.constant 0 : index
    %c4_89 = arith.constant 4 : index
    %c8_90 = arith.constant 8 : index
    %84 = vector.load %arg10[%c0_87, %c0_88, %c4_89, %c8_90] : memref<2x5x5x32xbf16, #tpu.memory_space<vmem>>, vector<2x5x1x8xbf16>
    tpu.vector_store %arg10[%c0_87, %c0_88, %c4_89, %c8_90], %80 {strides = array<i32>} : memref<2x5x5x32xbf16, #tpu.memory_space<vmem>>, vector<2x5x1x8xbf16>,
    %c0_91 = arith.constant 0 : index
    %c4_92 = arith.constant 4 : index
    %c0_93 = arith.constant 0 : index
    %c16 = arith.constant 16 : index
    %85 = vector.load %arg10[%c0_91, %c4_92, %c0_93, %c16] : memref<2x5x5x32xbf16, #tpu.memory_space<vmem>>, vector<2x1x5x8xbf16>
    tpu.vector_store %arg10[%c0_91, %c4_92, %c0_93, %c16], %79 {strides = array<i32>} : memref<2x5x5x32xbf16, #tpu.memory_space<vmem>>, vector<2x1x5x8xbf16>,
    %c0_94 = arith.constant 0 : index
    %c0_95 = arith.constant 0 : index
    %c0_96 = arith.constant 0 : index
    %c16_97 = arith.constant 16 : index
    %86 = vector.load %arg10[%c0_94, %c0_95, %c0_96, %c16_97] : memref<2x5x5x32xbf16, #tpu.memory_space<vmem>>, vector<2x5x1x8xbf16>
    tpu.vector_store %arg10[%c0_94, %c0_95, %c0_96, %c16_97], %80 {strides = array<i32>} : memref<2x5x5x32xbf16, #tpu.memory_space<vmem>>, vector<2x5x1x8xbf16>,
    %c0_98 = arith.constant 0 : index
    %c4_99 = arith.constant 4 : index
    %c0_100 = arith.constant 0 : index
    %c24 = arith.constant 24 : index
    %87 = vector.load %arg10[%c0_98, %c4_99, %c0_100, %c24] : memref<2x5x5x32xbf16, #tpu.memory_space<vmem>>, vector<2x1x5x8xbf16>
    tpu.vector_store %arg10[%c0_98, %c4_99, %c0_100, %c24], %79 {strides = array<i32>} : memref<2x5x5x32xbf16, #tpu.memory_space<vmem>>, vector<2x1x5x8xbf16>,
    %c0_101 = arith.constant 0 : index
    %c0_102 = arith.constant 0 : index
    %c4_103 = arith.constant 4 : index
    %c24_104 = arith.constant 24 : index
    %88 = vector.load %arg10[%c0_101, %c0_102, %c4_103, %c24_104] : memref<2x5x5x32xbf16, #tpu.memory_space<vmem>>, vector<2x5x1x8xbf16>
    tpu.vector_store %arg10[%c0_101, %c0_102, %c4_103, %c24_104], %80 {strides = array<i32>} : memref<2x5x5x32xbf16, #tpu.memory_space<vmem>>, vector<2x5x1x8xbf16>,
    %89 = arith.truncf %78 : vector<128x8xf32> to vector<128x8xbf16>
    %90 = vector.shape_cast %89 : vector<128x8xbf16> to vector<2x4x2x4x2x8xbf16>
    %91 = vector.extract_strided_slice %90 {offsets = [0, 0, 1, 0, 1, 0], sizes = [2, 4, 1, 4, 1, 8], strides = [1, 1, 1, 1, 1, 1]} : vector<2x4x2x4x2x8xbf16> to vector<2x4x1x4x1x8xbf16>
    %92 = vector.shape_cast %91 : vector<2x4x1x4x1x8xbf16> to vector<2x4x4x8xbf16>
    %c0_105 = arith.constant 0 : index
    %c1_106 = arith.constant 1 : index
    %c1_107 = arith.constant 1 : index
    %c0_108 = arith.constant 0 : index
    %93 = vector.load %arg10[%c0_105, %c1_106, %c1_107, %c0_108] : memref<2x5x5x32xbf16, #tpu.memory_space<vmem>>, vector<2x4x4x8xbf16>
    tpu.vector_store %arg10[%c0_105, %c1_106, %c1_107, %c0_108], %92 {strides = array<i32>} : memref<2x5x5x32xbf16, #tpu.memory_space<vmem>>, vector<2x4x4x8xbf16>,
    %94 = vector.extract_strided_slice %90 {offsets = [0, 0, 1, 0, 0, 0], sizes = [2, 4, 1, 4, 1, 8], strides = [1, 1, 1, 1, 1, 1]} : vector<2x4x2x4x2x8xbf16> to vector<2x4x1x4x1x8xbf16>
    %95 = vector.shape_cast %94 : vector<2x4x1x4x1x8xbf16> to vector<2x4x4x8xbf16>
    %c0_109 = arith.constant 0 : index
    %c1_110 = arith.constant 1 : index
    %c0_111 = arith.constant 0 : index
    %c8_112 = arith.constant 8 : index
    %96 = vector.load %arg10[%c0_109, %c1_110, %c0_111, %c8_112] : memref<2x5x5x32xbf16, #tpu.memory_space<vmem>>, vector<2x4x4x8xbf16>
    tpu.vector_store %arg10[%c0_109, %c1_110, %c0_111, %c8_112], %95 {strides = array<i32>} : memref<2x5x5x32xbf16, #tpu.memory_space<vmem>>, vector<2x4x4x8xbf16>,
    %97 = vector.extract_strided_slice %90 {offsets = [0, 0, 0, 0, 1, 0], sizes = [2, 4, 1, 4, 1, 8], strides = [1, 1, 1, 1, 1, 1]} : vector<2x4x2x4x2x8xbf16> to vector<2x4x1x4x1x8xbf16>
    %98 = vector.shape_cast %97 : vector<2x4x1x4x1x8xbf16> to vector<2x4x4x8xbf16>
    %c0_113 = arith.constant 0 : index
    %c0_114 = arith.constant 0 : index
    %c1_115 = arith.constant 1 : index
    %c16_116 = arith.constant 16 : index
    %99 = vector.load %arg10[%c0_113, %c0_114, %c1_115, %c16_116] : memref<2x5x5x32xbf16, #tpu.memory_space<vmem>>, vector<2x4x4x8xbf16>
    tpu.vector_store %arg10[%c0_113, %c0_114, %c1_115, %c16_116], %98 {strides = array<i32>} : memref<2x5x5x32xbf16, #tpu.memory_space<vmem>>, vector<2x4x4x8xbf16>,
    %100 = vector.extract_strided_slice %90 {offsets = [0, 0, 0, 0, 0, 0], sizes = [2, 4, 1, 4, 1, 8], strides = [1, 1, 1, 1, 1, 1]} : vector<2x4x2x4x2x8xbf16> to vector<2x4x1x4x1x8xbf16>
    %101 = vector.shape_cast %100 : vector<2x4x1x4x1x8xbf16> to vector<2x4x4x8xbf16>
    %c0_117 = arith.constant 0 : index
    %c0_118 = arith.constant 0 : index
    %c0_119 = arith.constant 0 : index
    %c24_120 = arith.constant 24 : index
    %102 = vector.load %arg10[%c0_117, %c0_118, %c0_119, %c24_120] : memref<2x5x5x32xbf16, #tpu.memory_space<vmem>>, vector<2x4x4x8xbf16>
    tpu.vector_store %arg10[%c0_117, %c0_118, %c0_119, %c24_120], %101 {strides = array<i32>} : memref<2x5x5x32xbf16, #tpu.memory_space<vmem>>, vector<2x4x4x8xbf16>,
    %cst_121 = arith.constant 0.000000e+00 : f32
    %103 = vector.broadcast %cst_121 : f32 to vector<32x16xf32>
    %c0_122 = arith.constant 0 : index
    %c0_123 = arith.constant 0 : index
    %c0_124 = arith.constant 0 : index
    %c0_125 = arith.constant 0 : index
    %104 = vector.load %arg10[%c0_122, %c0_123, %c0_124, %c0_125] : memref<2x5x5x32xbf16, #tpu.memory_space<vmem>>, vector<2x4x4x8xbf16>
    %105 = vector.shape_cast %104 : vector<2x4x4x8xbf16> to vector<32x8xbf16>
    %c0_126 = arith.constant 0 : index
    %c0_127 = arith.constant 0 : index
    %c0_128 = arith.constant 0 : index
    %106 = vector.load %arg4[%c0_126, %c0_127, %c0_128] : memref<9x8x16xbf16, #tpu.memory_space<vmem>>, vector<1x8x16xbf16>
    %107 = vector.shape_cast %106 : vector<1x8x16xbf16> to vector<8x16xbf16>
    %cst_129 = arith.constant dense<0.000000e+00> : vector<32x16xf32>
    %108 = tpu.matmul %105, %107, %cst_129 {dimension_numbers = #tpu.dot_dimension_numbers<[1], [0], [0], [1], [0, 0, 1, 1], [], []>} : vector<32x8xbf16>, vector<8x16xbf16>, vector<32x16xf32> -> vector<32x16xf32>
    %109 = arith.addf %103, %108 : vector<32x16xf32>
    %c0_130 = arith.constant 0 : index
    %c0_131 = arith.constant 0 : index
    %c0_132 = arith.constant 0 : index
    %c8_133 = arith.constant 8 : index
    %110 = vector.load %arg10[%c0_130, %c0_131, %c0_132, %c8_133] : memref<2x5x5x32xbf16, #tpu.memory_space<vmem>>, vector<2x4x4x8xbf16>
    %111 = vector.shape_cast %110 : vector<2x4x4x8xbf16> to vector<32x8xbf16>
    %c1_134 = arith.constant 1 : index
    %c0_135 = arith.constant 0 : index
    %c0_136 = arith.constant 0 : index
    %112 = vector.load %arg4[%c1_134, %c0_135, %c0_136] : memref<9x8x16xbf16, #tpu.memory_space<vmem>>, vector<1x8x16xbf16>
    %113 = vector.shape_cast %112 : vector<1x8x16xbf16> to vector<8x16xbf16>
    %cst_137 = arith.constant dense<0.000000e+00> : vector<32x16xf32>
    %114 = tpu.matmul %111, %113, %cst_137 {dimension_numbers = #tpu.dot_dimension_numbers<[1], [0], [0], [1], [0, 0, 1, 1], [], []>} : vector<32x8xbf16>, vector<8x16xbf16>, vector<32x16xf32> -> vector<32x16xf32>
    %115 = arith.addf %109, %114 : vector<32x16xf32>
    %c0_138 = arith.constant 0 : index
    %c0_139 = arith.constant 0 : index
    %c1_140 = arith.constant 1 : index
    %c0_141 = arith.constant 0 : index
    %116 = vector.load %arg10[%c0_138, %c0_139, %c1_140, %c0_141] : memref<2x5x5x32xbf16, #tpu.memory_space<vmem>>, vector<2x4x4x8xbf16>
    %117 = vector.shape_cast %116 : vector<2x4x4x8xbf16> to vector<32x8xbf16>
    %c2_142 = arith.constant 2 : index
    %c0_143 = arith.constant 0 : index
    %c0_144 = arith.constant 0 : index
    %118 = vector.load %arg4[%c2_142, %c0_143, %c0_144] : memref<9x8x16xbf16, #tpu.memory_space<vmem>>, vector<1x8x16xbf16>
    %119 = vector.shape_cast %118 : vector<1x8x16xbf16> to vector<8x16xbf16>
    %cst_145 = arith.constant dense<0.000000e+00> : vector<32x16xf32>
    %120 = tpu.matmul %117, %119, %cst_145 {dimension_numbers = #tpu.dot_dimension_numbers<[1], [0], [0], [1], [0, 0, 1, 1], [], []>} : vector<32x8xbf16>, vector<8x16xbf16>, vector<32x16xf32> -> vector<32x16xf32>
    %121 = arith.addf %115, %120 : vector<32x16xf32>
    %c0_146 = arith.constant 0 : index
    %c0_147 = arith.constant 0 : index
    %c0_148 = arith.constant 0 : index
    %c16_149 = arith.constant 16 : index
    %122 = vector.load %arg10[%c0_146, %c0_147, %c0_148, %c16_149] : memref<2x5x5x32xbf16, #tpu.memory_space<vmem>>, vector<2x4x4x8xbf16>
    %123 = vector.shape_cast %122 : vector<2x4x4x8xbf16> to vector<32x8xbf16>
    %c3_150 = arith.constant 3 : index
    %c0_151 = arith.constant 0 : index
    %c0_152 = arith.constant 0 : index
    %124 = vector.load %arg4[%c3_150, %c0_151, %c0_152] : memref<9x8x16xbf16, #tpu.memory_space<vmem>>, vector<1x8x16xbf16>
    %125 = vector.shape_cast %124 : vector<1x8x16xbf16> to vector<8x16xbf16>
    %cst_153 = arith.constant dense<0.000000e+00> : vector<32x16xf32>
    %126 = tpu.matmul %123, %125, %cst_153 {dimension_numbers = #tpu.dot_dimension_numbers<[1], [0], [0], [1], [0, 0, 1, 1], [], []>} : vector<32x8xbf16>, vector<8x16xbf16>, vector<32x16xf32> -> vector<32x16xf32>
    %127 = arith.addf %121, %126 : vector<32x16xf32>
    %c0_154 = arith.constant 0 : index
    %c0_155 = arith.constant 0 : index
    %c0_156 = arith.constant 0 : index
    %c24_157 = arith.constant 24 : index
    %128 = vector.load %arg10[%c0_154, %c0_155, %c0_156, %c24_157] : memref<2x5x5x32xbf16, #tpu.memory_space<vmem>>, vector<2x4x4x8xbf16>
    %129 = vector.shape_cast %128 : vector<2x4x4x8xbf16> to vector<32x8xbf16>
    %c4_158 = arith.constant 4 : index
    %c0_159 = arith.constant 0 : index
    %c0_160 = arith.constant 0 : index
    %130 = vector.load %arg4[%c4_158, %c0_159, %c0_160] : memref<9x8x16xbf16, #tpu.memory_space<vmem>>, vector<1x8x16xbf16>
    %131 = vector.shape_cast %130 : vector<1x8x16xbf16> to vector<8x16xbf16>
    %cst_161 = arith.constant dense<0.000000e+00> : vector<32x16xf32>
    %132 = tpu.matmul %129, %131, %cst_161 {dimension_numbers = #tpu.dot_dimension_numbers<[1], [0], [0], [1], [0, 0, 1, 1], [], []>} : vector<32x8xbf16>, vector<8x16xbf16>, vector<32x16xf32> -> vector<32x16xf32>
    %133 = arith.addf %127, %132 : vector<32x16xf32>
    %c0_162 = arith.constant 0 : index
    %c0_163 = arith.constant 0 : index
    %c1_164 = arith.constant 1 : index
    %c16_165 = arith.constant 16 : index
    %134 = vector.load %arg10[%c0_162, %c0_163, %c1_164, %c16_165] : memref<2x5x5x32xbf16, #tpu.memory_space<vmem>>, vector<2x4x4x8xbf16>
    %135 = vector.shape_cast %134 : vector<2x4x4x8xbf16> to vector<32x8xbf16>
    %c5_166 = arith.constant 5 : index
    %c0_167 = arith.constant 0 : index
    %c0_168 = arith.constant 0 : index
    %136 = vector.load %arg4[%c5_166, %c0_167, %c0_168] : memref<9x8x16xbf16, #tpu.memory_space<vmem>>, vector<1x8x16xbf16>
    %137 = vector.shape_cast %136 : vector<1x8x16xbf16> to vector<8x16xbf16>
    %cst_169 = arith.constant dense<0.000000e+00> : vector<32x16xf32>
    %138 = tpu.matmul %135, %137, %cst_169 {dimension_numbers = #tpu.dot_dimension_numbers<[1], [0], [0], [1], [0, 0, 1, 1], [], []>} : vector<32x8xbf16>, vector<8x16xbf16>, vector<32x16xf32> -> vector<32x16xf32>
    %139 = arith.addf %133, %138 : vector<32x16xf32>
    %c0_170 = arith.constant 0 : index
    %c1_171 = arith.constant 1 : index
    %c0_172 = arith.constant 0 : index
    %c0_173 = arith.constant 0 : index
    %140 = vector.load %arg10[%c0_170, %c1_171, %c0_172, %c0_173] : memref<2x5x5x32xbf16, #tpu.memory_space<vmem>>, vector<2x4x4x8xbf16>
    %141 = vector.shape_cast %140 : vector<2x4x4x8xbf16> to vector<32x8xbf16>
    %c6_174 = arith.constant 6 : index
    %c0_175 = arith.constant 0 : index
    %c0_176 = arith.constant 0 : index
    %142 = vector.load %arg4[%c6_174, %c0_175, %c0_176] : memref<9x8x16xbf16, #tpu.memory_space<vmem>>, vector<1x8x16xbf16>
    %143 = vector.shape_cast %142 : vector<1x8x16xbf16> to vector<8x16xbf16>
    %cst_177 = arith.constant dense<0.000000e+00> : vector<32x16xf32>
    %144 = tpu.matmul %141, %143, %cst_177 {dimension_numbers = #tpu.dot_dimension_numbers<[1], [0], [0], [1], [0, 0, 1, 1], [], []>} : vector<32x8xbf16>, vector<8x16xbf16>, vector<32x16xf32> -> vector<32x16xf32>
    %145 = arith.addf %139, %144 : vector<32x16xf32>
    %c0_178 = arith.constant 0 : index
    %c1_179 = arith.constant 1 : index
    %c0_180 = arith.constant 0 : index
    %c8_181 = arith.constant 8 : index
    %146 = vector.load %arg10[%c0_178, %c1_179, %c0_180, %c8_181] : memref<2x5x5x32xbf16, #tpu.memory_space<vmem>>, vector<2x4x4x8xbf16>
    %147 = vector.shape_cast %146 : vector<2x4x4x8xbf16> to vector<32x8xbf16>
    %c7_182 = arith.constant 7 : index
    %c0_183 = arith.constant 0 : index
    %c0_184 = arith.constant 0 : index
    %148 = vector.load %arg4[%c7_182, %c0_183, %c0_184] : memref<9x8x16xbf16, #tpu.memory_space<vmem>>, vector<1x8x16xbf16>
    %149 = vector.shape_cast %148 : vector<1x8x16xbf16> to vector<8x16xbf16>
    %cst_185 = arith.constant dense<0.000000e+00> : vector<32x16xf32>
    %150 = tpu.matmul %147, %149, %cst_185 {dimension_numbers = #tpu.dot_dimension_numbers<[1], [0], [0], [1], [0, 0, 1, 1], [], []>} : vector<32x8xbf16>, vector<8x16xbf16>, vector<32x16xf32> -> vector<32x16xf32>
    %151 = arith.addf %145, %150 : vector<32x16xf32>
    %c0_186 = arith.constant 0 : index
    %c1_187 = arith.constant 1 : index
    %c1_188 = arith.constant 1 : index
    %c0_189 = arith.constant 0 : index
    %152 = vector.load %arg10[%c0_186, %c1_187, %c1_188, %c0_189] : memref<2x5x5x32xbf16, #tpu.memory_space<vmem>>, vector<2x4x4x8xbf16>
    %153 = vector.shape_cast %152 : vector<2x4x4x8xbf16> to vector<32x8xbf16>
    %c8_190 = arith.constant 8 : index
    %c0_191 = arith.constant 0 : index
    %c0_192 = arith.constant 0 : index
    %154 = vector.load %arg4[%c8_190, %c0_191, %c0_192] : memref<9x8x16xbf16, #tpu.memory_space<vmem>>, vector<1x8x16xbf16>
    %155 = vector.shape_cast %154 : vector<1x8x16xbf16> to vector<8x16xbf16>
    %cst_193 = arith.constant dense<0.000000e+00> : vector<32x16xf32>
    %156 = tpu.matmul %153, %155, %cst_193 {dimension_numbers = #tpu.dot_dimension_numbers<[1], [0], [0], [1], [0, 0, 1, 1], [], []>} : vector<32x8xbf16>, vector<8x16xbf16>, vector<32x16xf32> -> vector<32x16xf32>
    %157 = arith.addf %151, %156 : vector<32x16xf32>
    %cst_194 = arith.constant 1.000000e+00 : f32
    %158 = vector.broadcast %cst_194 : f32 to vector<8x32xf32>
    %cst_195 = arith.constant dense<0.000000e+00> : vector<8x16xf32>
    %159 = tpu.matmul %158, %157, %cst_195 {dimension_numbers = #tpu.dot_dimension_numbers<[1], [0], [0], [1], [0, 0, 1, 1], [], []>} : vector<8x32xf32>, vector<32x16xf32>, vector<8x16xf32> -> vector<8x16xf32>
    %160 = vector.extract_strided_slice %159 {offsets = [0, 0], sizes = [1, 16], strides = [1, 1]} : vector<8x16xf32> to vector<1x16xf32>
    %cst_196 = arith.constant 3.125000e-02 : f32
    %161 = vector.broadcast %cst_196 : f32 to vector<1x16xf32>
    %162 = arith.mulf %160, %161 : vector<1x16xf32>
    %163 = vector.broadcast %162 : vector<1x16xf32> to vector<32x16xf32>
    %164 = arith.subf %157, %163 : vector<32x16xf32>
    %165 = arith.mulf %164, %164 : vector<32x16xf32>
    %cst_197 = arith.constant dense<0.000000e+00> : vector<8x16xf32>
    %166 = tpu.matmul %158, %165, %cst_197 {dimension_numbers = #tpu.dot_dimension_numbers<[1], [0], [0], [1], [0, 0, 1, 1], [], []>} : vector<8x32xf32>, vector<32x16xf32>, vector<8x16xf32> -> vector<8x16xf32>
    %167 = vector.extract_strided_slice %166 {offsets = [0, 0], sizes = [1, 16], strides = [1, 1]} : vector<8x16xf32> to vector<1x16xf32>
    %cst_198 = arith.constant 3.125000e-02 : f32
    %168 = vector.broadcast %cst_198 : f32 to vector<1x16xf32>
    %169 = arith.mulf %167, %168 : vector<1x16xf32>
    %c0_199 = arith.constant 0 : index
    %c0_200 = arith.constant 0 : index
    %170 = vector.load %arg5[%c0_199, %c0_200] : memref<1x16xf32, #tpu.memory_space<vmem>>, vector<1x16xf32>
    %cst_201 = arith.constant 9.99999974E-6 : f32
    %171 = vector.broadcast %cst_201 : f32 to vector<1x16xf32>
    %172 = arith.addf %169, %171 : vector<1x16xf32>
    %173 = math.rsqrt %172 : vector<1x16xf32>
    %174 = arith.mulf %170, %173 : vector<1x16xf32>
    %175 = vector.broadcast %174 : vector<1x16xf32> to vector<32x16xf32>
    %176 = arith.mulf %164, %175 : vector<32x16xf32>
    %c0_202 = arith.constant 0 : index
    %c0_203 = arith.constant 0 : index
    %177 = vector.load %arg6[%c0_202, %c0_203] : memref<1x16xf32, #tpu.memory_space<vmem>>, vector<1x16xf32>
    %178 = vector.broadcast %177 : vector<1x16xf32> to vector<32x16xf32>
    %179 = arith.addf %176, %178 : vector<32x16xf32>
    %cst_204 = arith.constant 0.000000e+00 : f32
    %180 = vector.broadcast %cst_204 : f32 to vector<32x16xf32>
    %181 = arith.maximumf %179, %180 : vector<32x16xf32>
    %182 = arith.truncf %181 : vector<32x16xf32> to vector<32x16xbf16>
    %c0_205 = arith.constant 0 : index
    %c0_206 = arith.constant 0 : index
    %183 = vector.load %arg7[%c0_205, %c0_206] : memref<16x32xbf16, #tpu.memory_space<vmem>>, vector<16x32xbf16>
    %cst_207 = arith.constant dense<0.000000e+00> : vector<32x32xf32>
    %184 = tpu.matmul %182, %183, %cst_207 {dimension_numbers = #tpu.dot_dimension_numbers<[1], [0], [0], [1], [0, 0, 1, 1], [], []>} : vector<32x16xbf16>, vector<16x32xbf16>, vector<32x32xf32> -> vector<32x32xf32>
    %c0_208 = arith.constant 0 : index
    %c0_209 = arith.constant 0 : index
    %185 = vector.load %arg8[%c0_208, %c0_209] : memref<1x32xf32, #tpu.memory_space<vmem>>, vector<1x32xf32>
    %186 = vector.broadcast %185 : vector<1x32xf32> to vector<32x32xf32>
    %187 = arith.addf %184, %186 : vector<32x32xf32>
    %c0_210 = arith.constant 0 : index
    %c0_211 = arith.constant 0 : index
    %188 = vector.load %arg9[%c0_210, %c0_211] : memref<32x32xf32, #tpu.memory_space<vmem>>, vector<32x32xf32>
    tpu.vector_store %arg9[%c0_210, %c0_211], %187 {strides = array<i32>} : memref<32x32xf32, #tpu.memory_space<vmem>>, vector<32x32xf32>,
    return
  }
}

</mosaic_0001>

<llo_original>
// kernel: conv_stem_forward.1
$region0: #{conv_stem_forward.1}
  #allocation0 [shape = 'u32[]', space=smem, size = 0x4, offset = 0x4, fixed_abs, tag = 'smem constant byte address 0x4 - core index']
  #allocation1 [shape = 'u32[72,128]{1,0:T(1,128)}', space=vmem, size = 0x9000, scoped, tag = 'internal scratch']
  #allocation2 [shape = 'bf16[2,5,5,32]{3,2,1,0:T(8,128)(2,1)}', space=vmem, size = 0x5000, scoped, tag = 'scratch operand']
  %s0 = inlined_call_operand.vmem [shape: bf16[2,9,9,16], index: 0, kind: input, shape index: {}]
  %s1 = inlined_call_operand.vmem [shape: bf16[9,4,8], index: 1, kind: input, shape index: {}]
  %s2 = inlined_call_operand.vmem [shape: f32[1,8], index: 2, kind: input, shape index: {}]
  %s3 = inlined_call_operand.vmem [shape: f32[1,8], index: 3, kind: input, shape index: {}]
  %s4 = inlined_call_operand.vmem [shape: bf16[9,8,16], index: 4, kind: input, shape index: {}]
  %s5 = inlined_call_operand.vmem [shape: f32[1,16], index: 5, kind: input, shape index: {}]
  %s6 = inlined_call_operand.vmem [shape: f32[1,16], index: 6, kind: input, shape index: {}]
  %s7 = inlined_call_operand.vmem [shape: bf16[16,32], index: 7, kind: input, shape index: {}]
  %s8 = inlined_call_operand.vmem [shape: f32[1,32], index: 8, kind: input, shape index: {}]
  %s9 = inlined_call_operand.hbm [shape: f32[32,32], index: 9, kind: output, shape index: {}]
  %s10 = sld [smem:[#allocation0]]
  $region46: #{conv_stem_forward.1} parent=0
    _
  %s12 = ssub.s32 1, %s10
  %s13 = scalar_select 0, %s12, %s10
  $region1: #{conv_stem_forward.1} parent=0
    #allocation3 [shape = 'u8[16384]{0}', space=vmem, size = 0x4000, scoped, tag = 'output window, operand 0, single buffered']
    #allocation4 [shape = 's32[1]{0}', space=sflag, size = 0x4, scoped, tag = 'scoped memory for conv_stem_forward.1']
    %14 = vsyncpa [#allocation4], 0
    // Predicated region
    $region2: #{conv_stem_forward.1} parent=1 // pred_check
      _
    $region3: #{conv_stem_forward.1} parent=1 // pred_check_branch
      %16 = sbr.rel (0) target = $region5
    $region4: #{conv_stem_forward.1} parent=1 // pred_region
      _
    $region5: #{conv_stem_forward.1} parent=1 // pred_fallthru
      _
    // Predicated region
    $region6: #{conv_stem_forward.1} parent=1 // pred_check
      _
    $region7: #{conv_stem_forward.1} parent=1 // pred_check_branch
      %18 = sbr.rel (0) target = $region9
    $region8: #{conv_stem_forward.1} parent=1 // pred_region
      _
    $region9: #{conv_stem_forward.1} parent=1 // pred_fallthru
      _
    // Predicated region
    $region10: #{conv_stem_forward.1} parent=1 // pred_check
      _
    $region11: #{conv_stem_forward.1} parent=1 // pred_check_branch
      %20 = sbr.rel (0) target = $region13
    $region12: #{conv_stem_forward.1} parent=1 // pred_region
      _
    $region13: #{conv_stem_forward.1} parent=1 // pred_fallthru
      _
    // Predicated region
    $region14: #{conv_stem_forward.1} parent=1 // pred_check
      _
    $region15: #{conv_stem_forward.1} parent=1 // pred_check_branch
      %22 = sbr.rel (0) target = $region17
    $region16: #{conv_stem_forward.1} parent=1 // pred_region
      _
    $region17: #{conv_stem_forward.1} parent=1 // pred_fallthru
      _
    // Predicated region
    $region18: #{conv_stem_forward.1} parent=1 // pred_check
      _
    $region19: #{conv_stem_forward.1} parent=1 // pred_check_branch
      %24 = sbr.rel (0) target = $region21
    $region20: #{conv_stem_forward.1} parent=1 // pred_region
      _
    $region21: #{conv_stem_forward.1} parent=1 // pred_fallthru
      _
    // Predicated region
    $region22: #{conv_stem_forward.1} parent=1 // pred_check
      _
    $region23: #{conv_stem_forward.1} parent=1 // pred_check_branch
      %26 = sbr.rel (0) target = $region25
    $region24: #{conv_stem_forward.1} parent=1 // pred_region
      _
    $region25: #{conv_stem_forward.1} parent=1 // pred_fallthru
      _
    // Predicated region
    $region26: #{conv_stem_forward.1} parent=1 // pred_check
      _
    $region27: #{conv_stem_forward.1} parent=1 // pred_check_branch
      %28 = sbr.rel (0) target = $region29
    $region28: #{conv_stem_forward.1} parent=1 // pred_region
      _
    $region29: #{conv_stem_forward.1} parent=1 // pred_fallthru
      _
    // Predicated region
    $region30: #{conv_stem_forward.1} parent=1 // pred_check
      _
    $region31: #{conv_stem_forward.1} parent=1 // pred_check_branch
      %30 = sbr.rel (0) target = $region33
    $region32: #{conv_stem_forward.1} parent=1 // pred_region
      _
    $region33: #{conv_stem_forward.1} parent=1 // pred_fallthru
      _
    // Predicated region
    $region34: #{conv_stem_forward.1} parent=1 // pred_check
      _
    $region35: #{conv_stem_forward.1} parent=1 // pred_check_branch
      %32 = sbr.rel (0) target = $region37
    $region36: #{conv_stem_forward.1} parent=1 // pred_region
      _
    $region37: #{conv_stem_forward.1} parent=1 // pred_fallthru
      _
    %v34 = vld [vmem:[%s0] sm:$0xf]
    %v35 = vld [vmem:[%s0 + $0x8] sm:$0xf]
    %v36 = vld [vmem:[%s0 + $0x10] sm:$0xf]
    %v37 = vld [vmem:[%s0 + $0x18] sm:$0xf]
    %v38 = vld [vmem:[%s0 + $0x20] sm:$0xf]
    %v39 = vld [vmem:[%s0 + $0x28] sm:$0xf]
    %v40 = vld [vmem:[%s0 + $0x30] sm:$0xf]
    %v41 = vld [vmem:[%s0 + $0x38] sm:$0xf]
    %v42 = vld [vmem:[%s0 + $0x48] sm:$0xf]
    %v43 = vld [vmem:[%s0 + $0x50] sm:$0xf]
    %v44 = vld [vmem:[%s0 + $0x58] sm:$0xf]
    %v45 = vld [vmem:[%s0 + $0x60] sm:$0xf]
    %v46 = vld [vmem:[%s0 + $0x68] sm:$0xf]
    %v47 = vld [vmem:[%s0 + $0x70] sm:$0xf]
    %v48 = vld [vmem:[%s0 + $0x78] sm:$0xf]
    %v49 = vld [vmem:[%s0 + $0x80] sm:$0xf]
    %v50 = vld [vmem:[%s1] sm:$0x3]
    %s51 = scalar_lea.vmem %s1, 2
    %v52 = vld [vmem:[%s51] sm:$0x3]
    %v69 = vunpack.c.l.b16 %v34
    %v70 = vunpack.c.l.b16 %v35
    %v71 = vunpack.c.l.b16 %v36
    %v72 = vunpack.c.l.b16 %v37
    %v73 = vunpack.c.l.b16 %v38
    %v74 = vunpack.c.l.b16 %v39
    %v75 = vunpack.c.l.b16 %v40
    %v76 = vunpack.c.l.b16 %v41
    %v77 = vunpack.c.l.b16 %v42
    %v78 = vunpack.c.l.b16 %v43
    %v79 = vunpack.c.l.b16 %v44
    %v80 = vunpack.c.l.b16 %v45
    %v81 = vunpack.c.l.b16 %v46
    %v82 = vunpack.c.l.b16 %v47
    %v83 = vunpack.c.l.b16 %v48
    %v84 = vunpack.c.l.b16 %v49
    %v85 = vpack.c.b16 %v70, %v69
    %v86 = vpack.c.b16 %v72, %v71
    %v87 = vpack.c.b16 %v74, %v73
    %v88 = vpack.c.b16 %v76, %v75
    %v89 = vpack.c.b16 %v78, %v77
    %v90 = vpack.c.b16 %v80, %v79
    %v91 = vpack.c.b16 %v82, %v81
    %v92 = vpack.c.b16 %v84, %v83
    %93 = vrot.lane.b32.xlu0 %v85, 124
    %v94 = vpop.permute.xlu0 %93
    %95 = vrot.lane.b32.xlu0 %v86, 124
    %v96 = vpop.permute.xlu0 %95
    %97 = vrot.lane.b32.xlu0 %v87, 124
    %v98 = vpop.permute.xlu0 %97
    %99 = vrot.lane.b32.xlu0 %v88, 124
    %v100 = vpop.permute.xlu0 %99
    %101 = vrot.lane.b32.xlu0 %v89, 124
    %v102 = vpop.permute.xlu0 %101
    %103 = vrot.lane.b32.xlu0 %v90, 124
    %v104 = vpop.permute.xlu0 %103
    %105 = vrot.lane.b32.xlu0 %v91, 124
    %v106 = vpop.permute.xlu0 %105
    %107 = vrot.lane.b32.xlu0 %v92, 124
    %v108 = vpop.permute.xlu0 %107
    %vm109 = vcmask 31744
    %v111 = vsel %vm109, %v94, 0
    %v114 = vsel %vm109, %v96, 0
    %v117 = vsel %vm109, %v98, 0
    %v120 = vsel %vm109, %v100, 0
    %v123 = vsel %vm109, %v102, 0
    %v126 = vsel %vm109, %v104, 0
    %v129 = vsel %vm109, %v106, 0
    %v132 = vsel %vm109, %v108, 0
    %vm134 = vcmask 1041408
    %v136 = vsel %vm134, %v52, 0
    %138 = vmatpush.bf16.msra.mxu0 0
    %139 = vmatpush.bf16.msra.mxu0 0
    %140 = vmatpush.bf16.msra.mxu0 0
    %141 = vmatpush.bf16.msra.mxu0 0
    %142 = vmatpush.bf16.msra.mxu0 0
    %143 = vmatpush.bf16.msra.mxu0 0
    %144 = vmatpush.bf16.msra.mxu0 0
    %145 = vmatpush.bf16.msra.mxu0 %v136
    %146 = vmatmul.bf16.gmra.mxu0 %v111
    %v147 = vpop.f32.mrf.mxu0
    %v148 = vadd.f32 0.0, %v147
    %v149 = vpop.f32.mrf.mxu0
    %v150 = vadd.f32 0.0, %v149
    %151 = vmatmul.bf16.gmra.mxu0 %v114
    %v152 = vpop.f32.mrf.mxu0
    %v153 = vadd.f32 0.0, %v152
    %v154 = vpop.f32.mrf.mxu0
    %v155 = vadd.f32 0.0, %v154
    %156 = vmatmul.bf16.gmra.mxu0 %v117
    %v157 = vpop.f32.mrf.mxu0
    %v158 = vadd.f32 0.0, %v157
    %v159 = vpop.f32.mrf.mxu0
    %v160 = vadd.f32 0.0, %v159
    %161 = vmatmul.bf16.gmra.mxu0 %v120
    %v162 = vpop.f32.mrf.mxu0
    %v163 = vadd.f32 0.0, %v162
    %v164 = vpop.f32.mrf.mxu0
    %v165 = vadd.f32 0.0, %v164
    %166 = vmatmul.bf16.gmra.mxu0 %v123
    %v167 = vpop.f32.mrf.mxu0
    %v168 = vadd.f32 0.0, %v167
    %v169 = vpop.f32.mrf.mxu0
    %v170 = vadd.f32 0.0, %v169
    %171 = vmatmul.bf16.gmra.mxu0 %v126
    %v172 = vpop.f32.mrf.mxu0
    %v173 = vadd.f32 0.0, %v172
    %v174 = vpop.f32.mrf.mxu0
    %v175 = vadd.f32 0.0, %v174
    %176 = vmatmul.bf16.gmra.mxu0 %v129
    %v177 = vpop.f32.mrf.mxu0
    %v178 = vadd.f32 0.0, %v177
    %v179 = vpop.f32.mrf.mxu0
    %v180 = vadd.f32 0.0, %v179
    %181 = vmatmul.bf16.gmra.mxu0 %v132
    %v182 = vpop.f32.mrf.mxu0
    %v183 = vadd.f32 0.0, %v182
    %v184 = vpop.f32.mrf.mxu0
    %v185 = vadd.f32 0.0, %v184
    %186 = vdwg.mxu0
    %v188 = vsel %vm109, %v85, 0
    %v191 = vsel %vm109, %v86, 0
    %v194 = vsel %vm109, %v87, 0
    %v197 = vsel %vm109, %v88, 0
    %v200 = vsel %vm109, %v89, 0
    %v203 = vsel %vm109, %v90, 0
    %v206 = vsel %vm109, %v91, 0
    %v209 = vsel %vm109, %v92, 0
    %v212 = vsel %vm134, %v50, 0
    %214 = vmatpush.bf16.msra.mxu0 0
    %215 = vmatpush.bf16.msra.mxu0 0
    %216 = vmatpush.bf16.msra.mxu0 0
    %217 = vmatpush.bf16.msra.mxu0 0
    %218 = vmatpush.bf16.msra.mxu0 0
    %219 = vmatpush.bf16.msra.mxu0 0
    %220 = vmatpush.bf16.msra.mxu0 0
    %221 = vmatpush.bf16.msra.mxu0 %v212
    %222 = vmatmul.bf16.gmra.mxu0 %v188
    %v223 = vpop.f32.mrf.mxu0
    %v224 = vadd.f32 %v148, %v223
    %v225 = vpop.f32.mrf.mxu0
    %v226 = vadd.f32 %v150, %v225
    %227 = vmatmul.bf16.gmra.mxu0 %v191
    %v228 = vpop.f32.mrf.mxu0
    %v229 = vadd.f32 %v153, %v228
    %v230 = vpop.f32.mrf.mxu0
    %v231 = vadd.f32 %v155, %v230
    %232 = vmatmul.bf16.gmra.mxu0 %v194
    %v233 = vpop.f32.mrf.mxu0
    %v234 = vadd.f32 %v158, %v233
    %v235 = vpop.f32.mrf.mxu0
    %v236 = vadd.f32 %v160, %v235
    %237 = vmatmul.bf16.gmra.mxu0 %v197
    %v238 = vpop.f32.mrf.mxu0
    %v239 = vadd.f32 %v163, %v238
    %v240 = vpop.f32.mrf.mxu0
    %v241 = vadd.f32 %v165, %v240
    %242 = vmatmul.bf16.gmra.mxu0 %v200
    %v243 = vpop.f32.mrf.mxu0
    %v244 = vadd.f32 %v168, %v243
    %v245 = vpop.f32.mrf.mxu0
    %v246 = vadd.f32 %v170, %v245
    %247 = vmatmul.bf16.gmra.mxu0 %v203
    %v248 = vpop.f32.mrf.mxu0
    %v249 = vadd.f32 %v173, %v248
    %v250 = vpop.f32.mrf.mxu0
    %v251 = vadd.f32 %v175, %v250
    %252 = vmatmul.bf16.gmra.mxu0 %v206
    %v253 = vpop.f32.mrf.mxu0
    %v254 = vadd.f32 %v178, %v253
    %v255 = vpop.f32.mrf.mxu0
    %v256 = vadd.f32 %v180, %v255
    %257 = vmatmul.bf16.gmra.mxu0 %v209
    %v258 = vpop.f32.mrf.mxu0
    %v259 = vadd.f32 %v183, %v258
    %v260 = vpop.f32.mrf.mxu0
    %v261 = vadd.f32 %v185, %v260
    %262 = vdwg.mxu0
    %v263 = vld [vmem:[%s0] sm:$0xf]
    %v264 = vld [vmem:[%s0 + $0x4] sm:$0x1]
    %v265 = vld [vmem:[%s0 + $0x8] sm:$0xf]
    %v266 = vld [vmem:[%s0 + $0xc] sm:$0x1]
    %v267 = vld [vmem:[%s0 + $0x10] sm:$0xf]
    %v268 = vld [vmem:[%s0 + $0x14] sm:$0x1]
    %v269 = vld [vmem:[%s0 + $0x18] sm:$0xf]
    %v270 = vld [vmem:[%s0 + $0x1c] sm:$0x1]
    %v271 = vld [vmem:[%s0 + $0x20] sm:$0xf]
    %v272 = vld [vmem:[%s0 + $0x24] sm:$0x1]
    %v273 = vld [vmem:[%s0 + $0x28] sm:$0xf]
    %v274 = vld [vmem:[%s0 + $0x2c] sm:$0x1]
    %v275 = vld [vmem:[%s0 + $0x30] sm:$0xf]
    %v276 = vld [vmem:[%s0 + $0x34] sm:$0x1]
    %v277 = vld [vmem:[%s0 + $0x38] sm:$0xf]
    %v278 = vld [vmem:[%s0 + $0x3c] sm:$0x1]
    %v279 = vld [vmem:[%s0 + $0x48] sm:$0xf]
    %v280 = vld [vmem:[%s0 + $0x4c] sm:$0x1]
    %v281 = vld [vmem:[%s0 + $0x50] sm:$0xf]
    %v282 = vld [vmem:[%s0 + $0x54] sm:$0x1]
    %v283 = vld [vmem:[%s0 + $0x58] sm:$0xf]
    %v284 = vld [vmem:[%s0 + $0x5c] sm:$0x1]
    %v285 = vld [vmem:[%s0 + $0x60] sm:$0xf]
    %v286 = vld [vmem:[%s0 + $0x64] sm:$0x1]
    %v287 = vld [vmem:[%s0 + $0x68] sm:$0xf]
    %v288 = vld [vmem:[%s0 + $0x6c] sm:$0x1]
    %v289 = vld [vmem:[%s0 + $0x70] sm:$0xf]
    %v290 = vld [vmem:[%s0 + $0x74] sm:$0x1]
    %v291 = vld [vmem:[%s0 + $0x78] sm:$0xf]
    %v292 = vld [vmem:[%s0 + $0x7c] sm:$0x1]
    %v293 = vld [vmem:[%s0 + $0x80] sm:$0xf]
    %v294 = vld [vmem:[%s0 + $0x84] sm:$0x1]
    %vm295 = vsmask.f32 3328
    %vm296 = vsmask.f32 7440
    %vm297 = vmor %vm295, %vm296
    %v299 = vshrl.u32 %v263, 16
    %v301 = vrot.slane %v299, 4
    %v302 = vshll.u32 %v263, 16
    %v304 = vrot.slane %v302, 5
    %v305 = vor.u32 %v301, %v304
    %v306 = vrot.slane %v305, 4
    %v308 = vshll.u32 %v264, 16
    %v310 = vrot.slane %v308, 5
    %v311 = vsel %vm297, %v306, %v310
    %v313 = vshrl.u32 %v265, 16
    %v315 = vrot.slane %v313, 4
    %v316 = vshll.u32 %v265, 16
    %v318 = vrot.slane %v316, 5
    %v319 = vor.u32 %v315, %v318
    %v320 = vrot.slane %v319, 4
    %v322 = vshll.u32 %v266, 16
    %v324 = vrot.slane %v322, 5
    %v325 = vsel %vm297, %v320, %v324
    %v327 = vshrl.u32 %v267, 16
    %v329 = vrot.slane %v327, 4
    %v330 = vshll.u32 %v267, 16
    %v332 = vrot.slane %v330, 5
    %v333 = vor.u32 %v329, %v332
    %v334 = vrot.slane %v333, 4
    %v336 = vshll.u32 %v268, 16
    %v338 = vrot.slane %v336, 5
    %v339 = vsel %vm297, %v334, %v338
    %v341 = vshrl.u32 %v269, 16
    %v343 = vrot.slane %v341, 4
    %v344 = vshll.u32 %v269, 16
    %v346 = vrot.slane %v344, 5
    %v347 = vor.u32 %v343, %v346
    %v348 = vrot.slane %v347, 4
    %v350 = vshll.u32 %v270, 16
    %v352 = vrot.slane %v350, 5
    %v353 = vsel %vm297, %v348, %v352
    %v355 = vshrl.u32 %v271, 16
    %v357 = vrot.slane %v355, 4
    %v358 = vshll.u32 %v271, 16
    %v360 = vrot.slane %v358, 5
    %v361 = vor.u32 %v357, %v360
    %v362 = vrot.slane %v361, 4
    %v364 = vshll.u32 %v272, 16
    %v366 = vrot.slane %v364, 5
    %v367 = vsel %vm297, %v362, %v366
    %v369 = vshrl.u32 %v273, 16
    %v371 = vrot.slane %v369, 4
    %v372 = vshll.u32 %v273, 16
    %v374 = vrot.slane %v372, 5
    %v375 = vor.u32 %v371, %v374
    %v376 = vrot.slane %v375, 4
    %v378 = vshll.u32 %v274, 16
    %v380 = vrot.slane %v378, 5
    %v381 = vsel %vm297, %v376, %v380
    %v383 = vshrl.u32 %v275, 16
    %v385 = vrot.slane %v383, 4
    %v386 = vshll.u32 %v275, 16
    %v388 = vrot.slane %v386, 5
    %v389 = vor.u32 %v385, %v388
    %v390 = vrot.slane %v389, 4
    %v392 = vshll.u32 %v276, 16
    %v394 = vrot.slane %v392, 5
    %v395 = vsel %vm297, %v390, %v394
    %v397 = vshrl.u32 %v277, 16
    %v399 = vrot.slane %v397, 4
    %v400 = vshll.u32 %v277, 16
    %v402 = vrot.slane %v400, 5
    %v403 = vor.u32 %v399, %v402
    %v404 = vrot.slane %v403, 4
    %v406 = vshll.u32 %v278, 16
    %v408 = vrot.slane %v406, 5
    %v409 = vsel %vm297, %v404, %v408
    %v411 = vshrl.u32 %v279, 16
    %v413 = vrot.slane %v411, 4
    %v414 = vshll.u32 %v279, 16
    %v416 = vrot.slane %v414, 5
    %v417 = vor.u32 %v413, %v416
    %v418 = vrot.slane %v417, 4
    %v420 = vshll.u32 %v280, 16
    %v422 = vrot.slane %v420, 5
    %v423 = vsel %vm297, %v418, %v422
    %v425 = vshrl.u32 %v281, 16
    %v427 = vrot.slane %v425, 4
    %v428 = vshll.u32 %v281, 16
    %v430 = vrot.slane %v428, 5
    %v431 = vor.u32 %v427, %v430
    %v432 = vrot.slane %v431, 4
    %v434 = vshll.u32 %v282, 16
    %v436 = vrot.slane %v434, 5
    %v437 = vsel %vm297, %v432, %v436
    %v439 = vshrl.u32 %v283, 16
    %v441 = vrot.slane %v439, 4
    %v442 = vshll.u32 %v283, 16
    %v444 = vrot.slane %v442, 5
    %v445 = vor.u32 %v441, %v444
    %v446 = vrot.slane %v445, 4
    %v448 = vshll.u32 %v284, 16
    %v450 = vrot.slane %v448, 5
    %v451 = vsel %vm297, %v446, %v450
    %v453 = vshrl.u32 %v285, 16
    %v455 = vrot.slane %v453, 4
    %v456 = vshll.u32 %v285, 16
    %v458 = vrot.slane %v456, 5
    %v459 = vor.u32 %v455, %v458
    %v460 = vrot.slane %v459, 4
    %v462 = vshll.u32 %v286, 16
    %v464 = vrot.slane %v462, 5
    %v465 = vsel %vm297, %v460, %v464
    %v467 = vshrl.u32 %v287, 16
    %v469 = vrot.slane %v467, 4
    %v470 = vshll.u32 %v287, 16
    %v472 = vrot.slane %v470, 5
    %v473 = vor.u32 %v469, %v472
    %v474 = vrot.slane %v473, 4
    %v476 = vshll.u32 %v288, 16
    %v478 = vrot.slane %v476, 5
    %v479 = vsel %vm297, %v474, %v478
    %v481 = vshrl.u32 %v289, 16
    %v483 = vrot.slane %v481, 4
    %v484 = vshll.u32 %v289, 16
    %v486 = vrot.slane %v484, 5
    %v487 = vor.u32 %v483, %v486
    %v488 = vrot.slane %v487, 4
    %v490 = vshll.u32 %v290, 16
    %v492 = vrot.slane %v490, 5
    %v493 = vsel %vm297, %v488, %v492
    %v495 = vshrl.u32 %v291, 16
    %v497 = vrot.slane %v495, 4
    %v498 = vshll.u32 %v291, 16
    %v500 = vrot.slane %v498, 5
    %v501 = vor.u32 %v497, %v500
    %v502 = vrot.slane %v501, 4
    %v504 = vshll.u32 %v292, 16
    %v506 = vrot.slane %v504, 5
    %v507 = vsel %vm297, %v502, %v506
    %v509 = vshrl.u32 %v293, 16
    %v511 = vrot.slane %v509, 4
    %v512 = vshll.u32 %v293, 16
    %v514 = vrot.slane %v512, 5
    %v515 = vor.u32 %v511, %v514
    %v516 = vrot.slane %v515, 4
    %v518 = vshll.u32 %v294, 16
    %v520 = vrot.slane %v518, 5
    %v521 = vsel %vm297, %v516, %v520
    %s522 = scalar_lea.vmem %s1, 4
    %v523 = vld [vmem:[%s522] sm:$0x3]
    %v524 = vunpack.c.l.b16 %v311
    %v525 = vunpack.c.l.b16 %v325
    %v526 = vunpack.c.l.b16 %v339
    %v527 = vunpack.c.l.b16 %v353
    %v528 = vunpack.c.l.b16 %v367
    %v529 = vunpack.c.l.b16 %v381
    %v530 = vunpack.c.l.b16 %v395
    %v531 = vunpack.c.l.b16 %v409
    %v532 = vunpack.c.l.b16 %v423
    %v533 = vunpack.c.l.b16 %v437
    %v534 = vunpack.c.l.b16 %v451
    %v535 = vunpack.c.l.b16 %v465
    %v536 = vunpack.c.l.b16 %v479
    %v537 = vunpack.c.l.b16 %v493
    %v538 = vunpack.c.l.b16 %v507
    %v539 = vunpack.c.l.b16 %v521
    %v540 = vpack.c.b16 %v525, %v524
    %v541 = vpack.c.b16 %v527, %v526
    %v542 = vpack.c.b16 %v529, %v528
    %v543 = vpack.c.b16 %v531, %v530
    %v544 = vpack.c.b16 %v533, %v532
    %v545 = vpack.c.b16 %v535, %v534
    %v546 = vpack.c.b16 %v537, %v536
    %v547 = vpack.c.b16 %v539, %v538
    %v549 = vsel %vm109, %v540, 0
    %v552 = vsel %vm109, %v541, 0
    %v555 = vsel %vm109, %v542, 0
    %v558 = vsel %vm109, %v543, 0
    %v561 = vsel %vm109, %v544, 0
    %v564 = vsel %vm109, %v545, 0
    %v567 = vsel %vm109, %v546, 0
    %v570 = vsel %vm109, %v547, 0
    %v573 = vsel %vm134, %v523, 0
    %575 = vmatpush.bf16.msra.mxu0 0
    %576 = vmatpush.bf16.msra.mxu0 0
    %577 = vmatpush.bf16.msra.mxu0 0
    %578 = vmatpush.bf16.msra.mxu0 0
    %579 = vmatpush.bf16.msra.mxu0 0
    %580 = vmatpush.bf16.msra.mxu0 0
    %581 = vmatpush.bf16.msra.mxu0 0
    %582 = vmatpush.bf16.msra.mxu0 %v573
    %583 = vmatmul.bf16.gmra.mxu0 %v549
    %v584 = vpop.f32.mrf.mxu0
    %v585 = vadd.f32 0.0, %v584
    %v586 = vpop.f32.mrf.mxu0
    %v587 = vadd.f32 0.0, %v586
    %588 = vmatmul.bf16.gmra.mxu0 %v552
    %v589 = vpop.f32.mrf.mxu0
    %v590 = vadd.f32 0.0, %v589
    %v591 = vpop.f32.mrf.mxu0
    %v592 = vadd.f32 0.0, %v591
    %593 = vmatmul.bf16.gmra.mxu0 %v555
    %v594 = vpop.f32.mrf.mxu0
    %v595 = vadd.f32 0.0, %v594
    %v596 = vpop.f32.mrf.mxu0
    %v597 = vadd.f32 0.0, %v596
    %598 = vmatmul.bf16.gmra.mxu0 %v558
    %v599 = vpop.f32.mrf.mxu0
    %v600 = vadd.f32 0.0, %v599
    %v601 = vpop.f32.mrf.mxu0
    %v602 = vadd.f32 0.0, %v601
    %603 = vmatmul.bf16.gmra.mxu0 %v561
    %v604 = vpop.f32.mrf.mxu0
    %v605 = vadd.f32 0.0, %v604
    %v606 = vpop.f32.mrf.mxu0
    %v607 = vadd.f32 0.0, %v606
    %608 = vmatmul.bf16.gmra.mxu0 %v564
    %v609 = vpop.f32.mrf.mxu0
    %v610 = vadd.f32 0.0, %v609
    %v611 = vpop.f32.mrf.mxu0
    %v612 = vadd.f32 0.0, %v611
    %613 = vmatmul.bf16.gmra.mxu0 %v567
    %v614 = vpop.f32.mrf.mxu0
    %v615 = vadd.f32 0.0, %v614
    %v616 = vpop.f32.mrf.mxu0
    %v617 = vadd.f32 0.0, %v616
    %618 = vmatmul.bf16.gmra.mxu0 %v570
    %v619 = vpop.f32.mrf.mxu0
    %v620 = vadd.f32 0.0, %v619
    %v621 = vpop.f32.mrf.mxu0
    %v622 = vadd.f32 0.0, %v621
    %623 = vdwg.mxu0
    %v624 = vadd.f32 %v224, %v585
    %v625 = vadd.f32 %v226, %v587
    %v626 = vadd.f32 %v229, %v590
    %v627 = vadd.f32 %v231, %v592
    %v628 = vadd.f32 %v234, %v595
    %v629 = vadd.f32 %v236, %v597
    %v630 = vadd.f32 %v239, %v600
    %v631 = vadd.f32 %v241, %v602
    %v632 = vadd.f32 %v244, %v605
    %v633 = vadd.f32 %v246, %v607
    %v634 = vadd.f32 %v249, %v610
    %v635 = vadd.f32 %v251, %v612
    %v636 = vadd.f32 %v254, %v615
    %v637 = vadd.f32 %v256, %v617
    %v638 = vadd.f32 %v259, %v620
    %v639 = vadd.f32 %v261, %v622
    %s640 = scalar_lea.vmem %s1, 6
    %v641 = vld [vmem:[%s640] sm:$0x3]
    %642 = vrot.lane.b32.xlu0 %v85, 120
    %v643 = vpop.permute.xlu0 %642
    %644 = vrot.lane.b32.xlu0 %v86, 120
    %v645 = vpop.permute.xlu0 %644
    %646 = vrot.lane.b32.xlu0 %v87, 120
    %v647 = vpop.permute.xlu0 %646
    %648 = vrot.lane.b32.xlu0 %v88, 120
    %v649 = vpop.permute.xlu0 %648
    %650 = vrot.lane.b32.xlu0 %v89, 120
    %v651 = vpop.permute.xlu0 %650
    %652 = vrot.lane.b32.xlu0 %v90, 120
    %v653 = vpop.permute.xlu0 %652
    %654 = vrot.lane.b32.xlu0 %v91, 120
    %v655 = vpop.permute.xlu0 %654
    %656 = vrot.lane.b32.xlu0 %v92, 120
    %v657 = vpop.permute.xlu0 %656
    %v659 = vsel %vm109, %v643, 0
    %v662 = vsel %vm109, %v645, 0
    %v665 = vsel %vm109, %v647, 0
    %v668 = vsel %vm109, %v649, 0
    %v671 = vsel %vm109, %v651, 0
    %v674 = vsel %vm109, %v653, 0
    %v677 = vsel %vm109, %v655, 0
    %v680 = vsel %vm109, %v657, 0
    %v683 = vsel %vm134, %v641, 0
    %685 = vmatpush.bf16.msra.mxu0 0
    %686 = vmatpush.bf16.msra.mxu0 0
    %687 = vmatpush.bf16.msra.mxu0 0
    %688 = vmatpush.bf16.msra.mxu0 0
    %689 = vmatpush.bf16.msra.mxu0 0
    %690 = vmatpush.bf16.msra.mxu0 0
    %691 = vmatpush.bf16.msra.mxu0 0
    %692 = vmatpush.bf16.msra.mxu0 %v683
    %693 = vmatmul.bf16.gmra.mxu0 %v659
    %v694 = vpop.f32.mrf.mxu0
    %v695 = vadd.f32 0.0, %v694
    %v696 = vpop.f32.mrf.mxu0
    %v697 = vadd.f32 0.0, %v696
    %698 = vmatmul.bf16.gmra.mxu0 %v662
    %v699 = vpop.f32.mrf.mxu0
    %v700 = vadd.f32 0.0, %v699
    %v701 = vpop.f32.mrf.mxu0
    %v702 = vadd.f32 0.0, %v701
    %703 = vmatmul.bf16.gmra.mxu0 %v665
    %v704 = vpop.f32.mrf.mxu0
    %v705 = vadd.f32 0.0, %v704
    %v706 = vpop.f32.mrf.mxu0
    %v707 = vadd.f32 0.0, %v706
    %708 = vmatmul.bf16.gmra.mxu0 %v668
    %v709 = vpop.f32.mrf.mxu0
    %v710 = vadd.f32 0.0, %v709
    %v711 = vpop.f32.mrf.mxu0
    %v712 = vadd.f32 0.0, %v711
    %713 = vmatmul.bf16.gmra.mxu0 %v671
    %v714 = vpop.f32.mrf.mxu0
    %v715 = vadd.f32 0.0, %v714
    %v716 = vpop.f32.mrf.mxu0
    %v717 = vadd.f32 0.0, %v716
    %718 = vmatmul.bf16.gmra.mxu0 %v674
    %v719 = vpop.f32.mrf.mxu0
    %v720 = vadd.f32 0.0, %v719
    %v721 = vpop.f32.mrf.mxu0
    %v722 = vadd.f32 0.0, %v721
    %723 = vmatmul.bf16.gmra.mxu0 %v677
    %v724 = vpop.f32.mrf.mxu0
    %v725 = vadd.f32 0.0, %v724
    %v726 = vpop.f32.mrf.mxu0
    %v727 = vadd.f32 0.0, %v726
    %728 = vmatmul.bf16.gmra.mxu0 %v680
    %v729 = vpop.f32.mrf.mxu0
    %v730 = vadd.f32 0.0, %v729
    %v731 = vpop.f32.mrf.mxu0
    %v732 = vadd.f32 0.0, %v731
    %733 = vdwg.mxu0
    %v734 = vadd.f32 %v624, %v695
    %v735 = vadd.f32 %v625, %v697
    %v736 = vadd.f32 %v626, %v700
    %v737 = vadd.f32 %v627, %v702
    %v738 = vadd.f32 %v628, %v705
    %v739 = vadd.f32 %v629, %v707
    %v740 = vadd.f32 %v630, %v710
    %v741 = vadd.f32 %v631, %v712
    %v742 = vadd.f32 %v632, %v715
    %v743 = vadd.f32 %v633, %v717
    %v744 = vadd.f32 %v634, %v720
    %v745 = vadd.f32 %v635, %v722
    %v746 = vadd.f32 %v636, %v725
    %v747 = vadd.f32 %v637, %v727
    %v748 = vadd.f32 %v638, %v730
    %v749 = vadd.f32 %v639, %v732
    %s750 = scalar_lea.vmem %s1, 8
    %v751 = vld [vmem:[%s750] sm:$0x3]
    %752 = vrot.lane.b32.xlu0 %v85, 116
    %v753 = vpop.permute.xlu0 %752
    %754 = vrot.lane.b32.xlu0 %v86, 116
    %v755 = vpop.permute.xlu0 %754
    %756 = vrot.lane.b32.xlu0 %v87, 116
    %v757 = vpop.permute.xlu0 %756
    %758 = vrot.lane.b32.xlu0 %v88, 116
    %v759 = vpop.permute.xlu0 %758
    %760 = vrot.lane.b32.xlu0 %v89, 116
    %v761 = vpop.permute.xlu0 %760
    %762 = vrot.lane.b32.xlu0 %v90, 116
    %v763 = vpop.permute.xlu0 %762
    %764 = vrot.lane.b32.xlu0 %v91, 116
    %v765 = vpop.permute.xlu0 %764
    %766 = vrot.lane.b32.xlu0 %v92, 116
    %v767 = vpop.permute.xlu0 %766
    %v769 = vsel %vm109, %v753, 0
    %v772 = vsel %vm109, %v755, 0
    %v775 = vsel %vm109, %v757, 0
    %v778 = vsel %vm109, %v759, 0
    %v781 = vsel %vm109, %v761, 0
    %v784 = vsel %vm109, %v763, 0
    %v787 = vsel %vm109, %v765, 0
    %v790 = vsel %vm109, %v767, 0
    %v793 = vsel %vm134, %v751, 0
    %795 = vmatpush.bf16.msra.mxu0 0
    %796 = vmatpush.bf16.msra.mxu0 0
    %797 = vmatpush.bf16.msra.mxu0 0
    %798 = vmatpush.bf16.msra.mxu0 0
    %799 = vmatpush.bf16.msra.mxu0 0
    %800 = vmatpush.bf16.msra.mxu0 0
    %801 = vmatpush.bf16.msra.mxu0 0
    %802 = vmatpush.bf16.msra.mxu0 %v793
    %803 = vmatmul.bf16.gmra.mxu0 %v769
    %v804 = vpop.f32.mrf.mxu0
    %v805 = vadd.f32 0.0, %v804
    %v806 = vpop.f32.mrf.mxu0
    %v807 = vadd.f32 0.0, %v806
    %808 = vmatmul.bf16.gmra.mxu0 %v772
    %v809 = vpop.f32.mrf.mxu0
    %v810 = vadd.f32 0.0, %v809
    %v811 = vpop.f32.mrf.mxu0
    %v812 = vadd.f32 0.0, %v811
    %813 = vmatmul.bf16.gmra.mxu0 %v775
    %v814 = vpop.f32.mrf.mxu0
    %v815 = vadd.f32 0.0, %v814
    %v816 = vpop.f32.mrf.mxu0
    %v817 = vadd.f32 0.0, %v816
    %818 = vmatmul.bf16.gmra.mxu0 %v778
    %v819 = vpop.f32.mrf.mxu0
    %v820 = vadd.f32 0.0, %v819
    %v821 = vpop.f32.mrf.mxu0
    %v822 = vadd.f32 0.0, %v821
    %823 = vmatmul.bf16.gmra.mxu0 %v781
    %v824 = vpop.f32.mrf.mxu0
    %v825 = vadd.f32 0.0, %v824
    %v826 = vpop.f32.mrf.mxu0
    %v827 = vadd.f32 0.0, %v826
    %828 = vmatmul.bf16.gmra.mxu0 %v784
    %v829 = vpop.f32.mrf.mxu0
    %v830 = vadd.f32 0.0, %v829
    %v831 = vpop.f32.mrf.mxu0
    %v832 = vadd.f32 0.0, %v831
    %833 = vmatmul.bf16.gmra.mxu0 %v787
    %v834 = vpop.f32.mrf.mxu0
    %v835 = vadd.f32 0.0, %v834
    %v836 = vpop.f32.mrf.mxu0
    %v837 = vadd.f32 0.0, %v836
    %838 = vmatmul.bf16.gmra.mxu0 %v790
    %v839 = vpop.f32.mrf.mxu0
    %v840 = vadd.f32 0.0, %v839
    %v841 = vpop.f32.mrf.mxu0
    %v842 = vadd.f32 0.0, %v841
    %843 = vdwg.mxu0
    %v844 = vadd.f32 %v734, %v805
    %v845 = vadd.f32 %v735, %v807
    %v846 = vadd.f32 %v736, %v810
    %v847 = vadd.f32 %v737, %v812
    %v848 = vadd.f32 %v738, %v815
    %v849 = vadd.f32 %v739, %v817
    %v850 = vadd.f32 %v740, %v820
    %v851 = vadd.f32 %v741, %v822
    %v852 = vadd.f32 %v742, %v825
    %v853 = vadd.f32 %v743, %v827
    %v854 = vadd.f32 %v744, %v830
    %v855 = vadd.f32 %v745, %v832
    %v856 = vadd.f32 %v746, %v835
    %v857 = vadd.f32 %v747, %v837
    %v858 = vadd.f32 %v748, %v840
    %v859 = vadd.f32 %v749, %v842
    %s860 = scalar_lea.vmem %s1, 10
    %v861 = vld [vmem:[%s860] sm:$0x3]
    %862 = vrot.lane.b32.xlu0 %v540, 120
    %v863 = vpop.permute.xlu0 %862
    %864 = vrot.lane.b32.xlu0 %v541, 120
    %v865 = vpop.permute.xlu0 %864
    %866 = vrot.lane.b32.xlu0 %v542, 120
    %v867 = vpop.permute.xlu0 %866
    %868 = vrot.lane.b32.xlu0 %v543, 120
    %v869 = vpop.permute.xlu0 %868
    %870 = vrot.lane.b32.xlu0 %v544, 120
    %v871 = vpop.permute.xlu0 %870
    %872 = vrot.lane.b32.xlu0 %v545, 120
    %v873 = vpop.permute.xlu0 %872
    %874 = vrot.lane.b32.xlu0 %v546, 120
    %v875 = vpop.permute.xlu0 %874
    %876 = vrot.lane.b32.xlu0 %v547, 120
    %v877 = vpop.permute.xlu0 %876
    %v879 = vsel %vm109, %v863, 0
    %v882 = vsel %vm109, %v865, 0
    %v885 = vsel %vm109, %v867, 0
    %v888 = vsel %vm109, %v869, 0
    %v891 = vsel %vm109, %v871, 0
    %v894 = vsel %vm109, %v873, 0
    %v897 = vsel %vm109, %v875, 0
    %v900 = vsel %vm109, %v877, 0
    %v903 = vsel %vm134, %v861, 0
    %905 = vmatpush.bf16.msra.mxu0 0
    %906 = vmatpush.bf16.msra.mxu0 0
    %907 = vmatpush.bf16.msra.mxu0 0
    %908 = vmatpush.bf16.msra.mxu0 0
    %909 = vmatpush.bf16.msra.mxu0 0
    %910 = vmatpush.bf16.msra.mxu0 0
    %911 = vmatpush.bf16.msra.mxu0 0
    %912 = vmatpush.bf16.msra.mxu0 %v903
    %913 = vmatmul.bf16.gmra.mxu0 %v879
    %v914 = vpop.f32.mrf.mxu0
    %v915 = vadd.f32 0.0, %v914
    %v916 = vpop.f32.mrf.mxu0
    %v917 = vadd.f32 0.0, %v916
    %918 = vmatmul.bf16.gmra.mxu0 %v882
    %v919 = vpop.f32.mrf.mxu0
    %v920 = vadd.f32 0.0, %v919
    %v921 = vpop.f32.mrf.mxu0
    %v922 = vadd.f32 0.0, %v921
    %923 = vmatmul.bf16.gmra.mxu0 %v885
    %v924 = vpop.f32.mrf.mxu0
    %v925 = vadd.f32 0.0, %v924
    %v926 = vpop.f32.mrf.mxu0
    %v927 = vadd.f32 0.0, %v926
    %928 = vmatmul.bf16.gmra.mxu0 %v888
    %v929 = vpop.f32.mrf.mxu0
    %v930 = vadd.f32 0.0, %v929
    %v931 = vpop.f32.mrf.mxu0
    %v932 = vadd.f32 0.0, %v931
    %933 = vmatmul.bf16.gmra.mxu0 %v891
    %v934 = vpop.f32.mrf.mxu0
    %v935 = vadd.f32 0.0, %v934
    %v936 = vpop.f32.mrf.mxu0
    %v937 = vadd.f32 0.0, %v936
    %938 = vmatmul.bf16.gmra.mxu0 %v894
    %v939 = vpop.f32.mrf.mxu0
    %v940 = vadd.f32 0.0, %v939
    %v941 = vpop.f32.mrf.mxu0
    %v942 = vadd.f32 0.0, %v941
    %943 = vmatmul.bf16.gmra.mxu0 %v897
    %v944 = vpop.f32.mrf.mxu0
    %v945 = vadd.f32 0.0, %v944
    %v946 = vpop.f32.mrf.mxu0
    %v947 = vadd.f32 0.0, %v946
    %948 = vmatmul.bf16.gmra.mxu0 %v900
    %v949 = vpop.f32.mrf.mxu0
    %v950 = vadd.f32 0.0, %v949
    %v951 = vpop.f32.mrf.mxu0
    %v952 = vadd.f32 0.0, %v951
    %953 = vdwg.mxu0
    %v954 = vadd.f32 %v844, %v915
    %v955 = vadd.f32 %v845, %v917
    %v956 = vadd.f32 %v846, %v920
    %v957 = vadd.f32 %v847, %v922
    %v958 = vadd.f32 %v848, %v925
    %v959 = vadd.f32 %v849, %v927
    %v960 = vadd.f32 %v850, %v930
    %v961 = vadd.f32 %v851, %v932
    %v962 = vadd.f32 %v852, %v935
    %v963 = vadd.f32 %v853, %v937
    %v964 = vadd.f32 %v854, %v940
    %v965 = vadd.f32 %v855, %v942
    %v966 = vadd.f32 %v856, %v945
    %v967 = vadd.f32 %v857, %v947
    %v968 = vadd.f32 %v858, %v950
    %v969 = vadd.f32 %v859, %v952
    %s970 = scalar_lea.vmem %s0, 8
    %v971 = vld [vmem:[%s970] sm:$0xf]
    %v972 = vld [vmem:[%s970 + $0x8] sm:$0xf]
    %v973 = vld [vmem:[%s970 + $0x10] sm:$0xf]
    %v974 = vld [vmem:[%s970 + $0x18] sm:$0xf]
    %v975 = vld [vmem:[%s970 + $0x20] sm:$0xf]
    %v976 = vld [vmem:[%s970 + $0x28] sm:$0xf]
    %v977 = vld [vmem:[%s970 + $0x30] sm:$0xf]
    %v978 = vld [vmem:[%s970 + $0x38] sm:$0xf]
    %v979 = vld [vmem:[%s970 + $0x48] sm:$0xf]
    %v980 = vld [vmem:[%s970 + $0x50] sm:$0xf]
    %v981 = vld [vmem:[%s970 + $0x58] sm:$0xf]
    %v982 = vld [vmem:[%s970 + $0x60] sm:$0xf]
    %v983 = vld [vmem:[%s970 + $0x68] sm:$0xf]
    %v984 = vld [vmem:[%s970 + $0x70] sm:$0xf]
    %v985 = vld [vmem:[%s970 + $0x78] sm:$0xf]
    %v986 = vld [vmem:[%s970 + $0x80] sm:$0xf]
    %s987 = scalar_lea.vmem %s1, 12
    %v988 = vld [vmem:[%s987] sm:$0x3]
    %v1005 = vunpack.c.l.b16 %v971
    %v1006 = vunpack.c.l.b16 %v972
    %v1007 = vunpack.c.l.b16 %v973
    %v1008 = vunpack.c.l.b16 %v974
    %v1009 = vunpack.c.l.b16 %v975
    %v1010 = vunpack.c.l.b16 %v976
    %v1011 = vunpack.c.l.b16 %v977
    %v1012 = vunpack.c.l.b16 %v978
    %v1013 = vunpack.c.l.b16 %v979
    %v1014 = vunpack.c.l.b16 %v980
    %v1015 = vunpack.c.l.b16 %v981
    %v1016 = vunpack.c.l.b16 %v982
    %v1017 = vunpack.c.l.b16 %v983
    %v1018 = vunpack.c.l.b16 %v984
    %v1019 = vunpack.c.l.b16 %v985
    %v1020 = vunpack.c.l.b16 %v986
    %v1021 = vpack.c.b16 %v1006, %v1005
    %v1022 = vpack.c.b16 %v1008, %v1007
    %v1023 = vpack.c.b16 %v1010, %v1009
    %v1024 = vpack.c.b16 %v1012, %v1011
    %v1025 = vpack.c.b16 %v1014, %v1013
    %v1026 = vpack.c.b16 %v1016, %v1015
    %v1027 = vpack.c.b16 %v1018, %v1017
    %v1028 = vpack.c.b16 %v1020, %v1019
    %v1030 = vsel %vm109, %v1021, 0
    %v1033 = vsel %vm109, %v1022, 0
    %v1036 = vsel %vm109, %v1023, 0
    %v1039 = vsel %vm109, %v1024, 0
    %v1042 = vsel %vm109, %v1025, 0
    %v1045 = vsel %vm109, %v1026, 0
    %v1048 = vsel %vm109, %v1027, 0
    %v1051 = vsel %vm109, %v1028, 0
    %v1054 = vsel %vm134, %v988, 0
    %1056 = vmatpush.bf16.msra.mxu0 0
    %1057 = vmatpush.bf16.msra.mxu0 0
    %1058 = vmatpush.bf16.msra.mxu0 0
    %1059 = vmatpush.bf16.msra.mxu0 0
    %1060 = vmatpush.bf16.msra.mxu0 0
    %1061 = vmatpush.bf16.msra.mxu0 0
    %1062 = vmatpush.bf16.msra.mxu0 0
    %1063 = vmatpush.bf16.msra.mxu0 %v1054
    %1064 = vmatmul.bf16.gmra.mxu0 %v1030
    %v1065 = vpop.f32.mrf.mxu0
    %v1066 = vadd.f32 0.0, %v1065
    %v1067 = vpop.f32.mrf.mxu0
    %v1068 = vadd.f32 0.0, %v1067
    %1069 = vmatmul.bf16.gmra.mxu0 %v1033
    %v1070 = vpop.f32.mrf.mxu0
    %v1071 = vadd.f32 0.0, %v1070
    %v1072 = vpop.f32.mrf.mxu0
    %v1073 = vadd.f32 0.0, %v1072
    %1074 = vmatmul.bf16.gmra.mxu0 %v1036
    %v1075 = vpop.f32.mrf.mxu0
    %v1076 = vadd.f32 0.0, %v1075
    %v1077 = vpop.f32.mrf.mxu0
    %v1078 = vadd.f32 0.0, %v1077
    %1079 = vmatmul.bf16.gmra.mxu0 %v1039
    %v1080 = vpop.f32.mrf.mxu0
    %v1081 = vadd.f32 0.0, %v1080
    %v1082 = vpop.f32.mrf.mxu0
    %v1083 = vadd.f32 0.0, %v1082
    %1084 = vmatmul.bf16.gmra.mxu0 %v1042
    %v1085 = vpop.f32.mrf.mxu0
    %v1086 = vadd.f32 0.0, %v1085
    %v1087 = vpop.f32.mrf.mxu0
    %v1088 = vadd.f32 0.0, %v1087
    %1089 = vmatmul.bf16.gmra.mxu0 %v1045
    %v1090 = vpop.f32.mrf.mxu0
    %v1091 = vadd.f32 0.0, %v1090
    %v1092 = vpop.f32.mrf.mxu0
    %v1093 = vadd.f32 0.0, %v1092
    %1094 = vmatmul.bf16.gmra.mxu0 %v1048
    %v1095 = vpop.f32.mrf.mxu0
    %v1096 = vadd.f32 0.0, %v1095
    %v1097 = vpop.f32.mrf.mxu0
    %v1098 = vadd.f32 0.0, %v1097
    %1099 = vmatmul.bf16.gmra.mxu0 %v1051
    %v1100 = vpop.f32.mrf.mxu0
    %v1101 = vadd.f32 0.0, %v1100
    %v1102 = vpop.f32.mrf.mxu0
    %v1103 = vadd.f32 0.0, %v1102
    %1104 = vdwg.mxu0
    %v1105 = vadd.f32 %v954, %v1066
    %v1106 = vadd.f32 %v955, %v1068
    %v1107 = vadd.f32 %v956, %v1071
    %v1108 = vadd.f32 %v957, %v1073
    %v1109 = vadd.f32 %v958, %v1076
    %v1110 = vadd.f32 %v959, %v1078
    %v1111 = vadd.f32 %v960, %v1081
    %v1112 = vadd.f32 %v961, %v1083
    %v1113 = vadd.f32 %v962, %v1086
    %v1114 = vadd.f32 %v963, %v1088
    %v1115 = vadd.f32 %v964, %v1091
    %v1116 = vadd.f32 %v965, %v1093
    %v1117 = vadd.f32 %v966, %v1096
    %v1118 = vadd.f32 %v967, %v1098
    %v1119 = vadd.f32 %v968, %v1101
    %v1120 = vadd.f32 %v969, %v1103
    %s1121 = scalar_lea.vmem %s1, 14
    %v1122 = vld [vmem:[%s1121] sm:$0x3]
    %1123 = vrot.lane.b32.xlu0 %v1021, 124
    %v1124 = vpop.permute.xlu0 %1123
    %1125 = vrot.lane.b32.xlu0 %v1022, 124
    %v1126 = vpop.permute.xlu0 %1125
    %1127 = vrot.lane.b32.xlu0 %v1023, 124
    %v1128 = vpop.permute.xlu0 %1127
    %1129 = vrot.lane.b32.xlu0 %v1024, 124
    %v1130 = vpop.permute.xlu0 %1129
    %1131 = vrot.lane.b32.xlu0 %v1025, 124
    %v1132 = vpop.permute.xlu0 %1131
    %1133 = vrot.lane.b32.xlu0 %v1026, 124
    %v1134 = vpop.permute.xlu0 %1133
    %1135 = vrot.lane.b32.xlu0 %v1027, 124
    %v1136 = vpop.permute.xlu0 %1135
    %1137 = vrot.lane.b32.xlu0 %v1028, 124
    %v1138 = vpop.permute.xlu0 %1137
    %v1140 = vsel %vm109, %v1124, 0
    %v1143 = vsel %vm109, %v1126, 0
    %v1146 = vsel %vm109, %v1128, 0
    %v1149 = vsel %vm109, %v1130, 0
    %v1152 = vsel %vm109, %v1132, 0
    %v1155 = vsel %vm109, %v1134, 0
    %v1158 = vsel %vm109, %v1136, 0
    %v1161 = vsel %vm109, %v1138, 0
    %v1164 = vsel %vm134, %v1122, 0
    %1166 = vmatpush.bf16.msra.mxu0 0
    %1167 = vmatpush.bf16.msra.mxu0 0
    %1168 = vmatpush.bf16.msra.mxu0 0
    %1169 = vmatpush.bf16.msra.mxu0 0
    %1170 = vmatpush.bf16.msra.mxu0 0
    %1171 = vmatpush.bf16.msra.mxu0 0
    %1172 = vmatpush.bf16.msra.mxu0 0
    %1173 = vmatpush.bf16.msra.mxu0 %v1164
    %1174 = vmatmul.bf16.gmra.mxu0 %v1140
    %v1175 = vpop.f32.mrf.mxu0
    %v1176 = vadd.f32 0.0, %v1175
    %v1177 = vpop.f32.mrf.mxu0
    %v1178 = vadd.f32 0.0, %v1177
    %1179 = vmatmul.bf16.gmra.mxu0 %v1143
    %v1180 = vpop.f32.mrf.mxu0
    %v1181 = vadd.f32 0.0, %v1180
    %v1182 = vpop.f32.mrf.mxu0
    %v1183 = vadd.f32 0.0, %v1182
    %1184 = vmatmul.bf16.gmra.mxu0 %v1146
    %v1185 = vpop.f32.mrf.mxu0
    %v1186 = vadd.f32 0.0, %v1185
    %v1187 = vpop.f32.mrf.mxu0
    %v1188 = vadd.f32 0.0, %v1187
    %1189 = vmatmul.bf16.gmra.mxu0 %v1149
    %v1190 = vpop.f32.mrf.mxu0
    %v1191 = vadd.f32 0.0, %v1190
    %v1192 = vpop.f32.mrf.mxu0
    %v1193 = vadd.f32 0.0, %v1192
    %1194 = vmatmul.bf16.gmra.mxu0 %v1152
    %v1195 = vpop.f32.mrf.mxu0
    %v1196 = vadd.f32 0.0, %v1195
    %v1197 = vpop.f32.mrf.mxu0
    %v1198 = vadd.f32 0.0, %v1197
    %1199 = vmatmul.bf16.gmra.mxu0 %v1155
    %v1200 = vpop.f32.mrf.mxu0
    %v1201 = vadd.f32 0.0, %v1200
    %v1202 = vpop.f32.mrf.mxu0
    %v1203 = vadd.f32 0.0, %v1202
    %1204 = vmatmul.bf16.gmra.mxu0 %v1158
    %v1205 = vpop.f32.mrf.mxu0
    %v1206 = vadd.f32 0.0, %v1205
    %v1207 = vpop.f32.mrf.mxu0
    %v1208 = vadd.f32 0.0, %v1207
    %1209 = vmatmul.bf16.gmra.mxu0 %v1161
    %v1210 = vpop.f32.mrf.mxu0
    %v1211 = vadd.f32 0.0, %v1210
    %v1212 = vpop.f32.mrf.mxu0
    %v1213 = vadd.f32 0.0, %v1212
    %1214 = vdwg.mxu0
    %v1215 = vadd.f32 %v1105, %v1176
    %v1216 = vadd.f32 %v1106, %v1178
    %v1217 = vadd.f32 %v1107, %v1181
    %v1218 = vadd.f32 %v1108, %v1183
    %v1219 = vadd.f32 %v1109, %v1186
    %v1220 = vadd.f32 %v1110, %v1188
    %v1221 = vadd.f32 %v1111, %v1191
    %v1222 = vadd.f32 %v1112, %v1193
    %v1223 = vadd.f32 %v1113, %v1196
    %v1224 = vadd.f32 %v1114, %v1198
    %v1225 = vadd.f32 %v1115, %v1201
    %v1226 = vadd.f32 %v1116, %v1203
    %v1227 = vadd.f32 %v1117, %v1206
    %v1228 = vadd.f32 %v1118, %v1208
    %v1229 = vadd.f32 %v1119, %v1211
    %v1230 = vadd.f32 %v1120, %v1213
    %v1231 = vld [vmem:[%s970] sm:$0xf]
    %v1232 = vld [vmem:[%s970 + $0x4] sm:$0x1]
    %v1233 = vld [vmem:[%s970 + $0x8] sm:$0xf]
    %v1234 = vld [vmem:[%s970 + $0xc] sm:$0x1]
    %v1235 = vld [vmem:[%s970 + $0x10] sm:$0xf]
    %v1236 = vld [vmem:[%s970 + $0x14] sm:$0x1]
    %v1237 = vld [vmem:[%s970 + $0x18] sm:$0xf]
    %v1238 = vld [vmem:[%s970 + $0x1c] sm:$0x1]
    %v1239 = vld [vmem:[%s970 + $0x20] sm:$0xf]
    %v1240 = vld [vmem:[%s970 + $0x24] sm:$0x1]
    %v1241 = vld [vmem:[%s970 + $0x28] sm:$0xf]
    %v1242 = vld [vmem:[%s970 + $0x2c] sm:$0x1]
    %v1243 = vld [vmem:[%s970 + $0x30] sm:$0xf]
    %v1244 = vld [vmem:[%s970 + $0x34] sm:$0x1]
    %v1245 = vld [vmem:[%s970 + $0x38] sm:$0xf]
    %v1246 = vld [vmem:[%s970 + $0x3c] sm:$0x1]
    %v1247 = vld [vmem:[%s970 + $0x48] sm:$0xf]
    %v1248 = vld [vmem:[%s970 + $0x4c] sm:$0x1]
    %v1249 = vld [vmem:[%s970 + $0x50] sm:$0xf]
    %v1250 = vld [vmem:[%s970 + $0x54] sm:$0x1]
    %v1251 = vld [vmem:[%s970 + $0x58] sm:$0xf]
    %v1252 = vld [vmem:[%s970 + $0x5c] sm:$0x1]
    %v1253 = vld [vmem:[%s970 + $0x60] sm:$0xf]
    %v1254 = vld [vmem:[%s970 + $0x64] sm:$0x1]
    %v1255 = vld [vmem:[%s970 + $0x68] sm:$0xf]
    %v1256 = vld [vmem:[%s970 + $0x6c] sm:$0x1]
    %v1257 = vld [vmem:[%s970 + $0x70] sm:$0xf]
    %v1258 = vld [vmem:[%s970 + $0x74] sm:$0x1]
    %v1259 = vld [vmem:[%s970 + $0x78] sm:$0xf]
    %v1260 = vld [vmem:[%s970 + $0x7c] sm:$0x1]
    %v1261 = vld [vmem:[%s970 + $0x80] sm:$0xf]
    %v1262 = vld [vmem:[%s970 + $0x84] sm:$0x1]
    %v1264 = vshrl.u32 %v1231, 16
    %v1266 = vrot.slane %v1264, 4
    %v1267 = vshll.u32 %v1231, 16
    %v1269 = vrot.slane %v1267, 5
    %v1270 = vor.u32 %v1266, %v1269
    %v1271 = vrot.slane %v1270, 4
    %v1273 = vshll.u32 %v1232, 16
    %v1275 = vrot.slane %v1273, 5
    %v1276 = vsel %vm297, %v1271, %v1275
    %v1278 = vshrl.u32 %v1233, 16
    %v1280 = vrot.slane %v1278, 4
    %v1281 = vshll.u32 %v1233, 16
    %v1283 = vrot.slane %v1281, 5
    %v1284 = vor.u32 %v1280, %v1283
    %v1285 = vrot.slane %v1284, 4
    %v1287 = vshll.u32 %v1234, 16
    %v1289 = vrot.slane %v1287, 5
    %v1290 = vsel %vm297, %v1285, %v1289
    %v1292 = vshrl.u32 %v1235, 16
    %v1294 = vrot.slane %v1292, 4
    %v1295 = vshll.u32 %v1235, 16
    %v1297 = vrot.slane %v1295, 5
    %v1298 = vor.u32 %v1294, %v1297
    %v1299 = vrot.slane %v1298, 4
    %v1301 = vshll.u32 %v1236, 16
    %v1303 = vrot.slane %v1301, 5
    %v1304 = vsel %vm297, %v1299, %v1303
    %v1306 = vshrl.u32 %v1237, 16
    %v1308 = vrot.slane %v1306, 4
    %v1309 = vshll.u32 %v1237, 16
    %v1311 = vrot.slane %v1309, 5
    %v1312 = vor.u32 %v1308, %v1311
    %v1313 = vrot.slane %v1312, 4
    %v1315 = vshll.u32 %v1238, 16
    %v1317 = vrot.slane %v1315, 5
    %v1318 = vsel %vm297, %v1313, %v1317
    %v1320 = vshrl.u32 %v1239, 16
    %v1322 = vrot.slane %v1320, 4
    %v1323 = vshll.u32 %v1239, 16
    %v1325 = vrot.slane %v1323, 5
    %v1326 = vor.u32 %v1322, %v1325
    %v1327 = vrot.slane %v1326, 4
    %v1329 = vshll.u32 %v1240, 16
    %v1331 = vrot.slane %v1329, 5
    %v1332 = vsel %vm297, %v1327, %v1331
    %v1334 = vshrl.u32 %v1241, 16
    %v1336 = vrot.slane %v1334, 4
    %v1337 = vshll.u32 %v1241, 16
    %v1339 = vrot.slane %v1337, 5
    %v1340 = vor.u32 %v1336, %v1339
    %v1341 = vrot.slane %v1340, 4
    %v1343 = vshll.u32 %v1242, 16
    %v1345 = vrot.slane %v1343, 5
    %v1346 = vsel %vm297, %v1341, %v1345
    %v1348 = vshrl.u32 %v1243, 16
    %v1350 = vrot.slane %v1348, 4
    %v1351 = vshll.u32 %v1243, 16
    %v1353 = vrot.slane %v1351, 5
    %v1354 = vor.u32 %v1350, %v1353
    %v1355 = vrot.slane %v1354, 4
    %v1357 = vshll.u32 %v1244, 16
    %v1359 = vrot.slane %v1357, 5
    %v1360 = vsel %vm297, %v1355, %v1359
    %v1362 = vshrl.u32 %v1245, 16
    %v1364 = vrot.slane %v1362, 4
    %v1365 = vshll.u32 %v1245, 16
    %v1367 = vrot.slane %v1365, 5
    %v1368 = vor.u32 %v1364, %v1367
    %v1369 = vrot.slane %v1368, 4
    %v1371 = vshll.u32 %v1246, 16
    %v1373 = vrot.slane %v1371, 5
    %v1374 = vsel %vm297, %v1369, %v1373
    %v1376 = vshrl.u32 %v1247, 16
    %v1378 = vrot.slane %v1376, 4
    %v1379 = vshll.u32 %v1247, 16
    %v1381 = vrot.slane %v1379, 5
    %v1382 = vor.u32 %v1378, %v1381
    %v1383 = vrot.slane %v1382, 4
    %v1385 = vshll.u32 %v1248, 16
    %v1387 = vrot.slane %v1385, 5
    %v1388 = vsel %vm297, %v1383, %v1387
    %v1390 = vshrl.u32 %v1249, 16
    %v1392 = vrot.slane %v1390, 4
    %v1393 = vshll.u32 %v1249, 16
    %v1395 = vrot.slane %v1393, 5
    %v1396 = vor.u32 %v1392, %v1395
    %v1397 = vrot.slane %v1396, 4
    %v1399 = vshll.u32 %v1250, 16
    %v1401 = vrot.slane %v1399, 5
    %v1402 = vsel %vm297, %v1397, %v1401
    %v1404 = vshrl.u32 %v1251, 16
    %v1406 = vrot.slane %v1404, 4
    %v1407 = vshll.u32 %v1251, 16
    %v1409 = vrot.slane %v1407, 5
    %v1410 = vor.u32 %v1406, %v1409
    %v1411 = vrot.slane %v1410, 4
    %v1413 = vshll.u32 %v1252, 16
    %v1415 = vrot.slane %v1413, 5
    %v1416 = vsel %vm297, %v1411, %v1415
    %v1418 = vshrl.u32 %v1253, 16
    %v1420 = vrot.slane %v1418, 4
    %v1421 = vshll.u32 %v1253, 16
    %v1423 = vrot.slane %v1421, 5
    %v1424 = vor.u32 %v1420, %v1423
    %v1425 = vrot.slane %v1424, 4
    %v1427 = vshll.u32 %v1254, 16
    %v1429 = vrot.slane %v1427, 5
    %v1430 = vsel %vm297, %v1425, %v1429
    %v1432 = vshrl.u32 %v1255, 16
    %v1434 = vrot.slane %v1432, 4
    %v1435 = vshll.u32 %v1255, 16
    %v1437 = vrot.slane %v1435, 5
    %v1438 = vor.u32 %v1434, %v1437
    %v1439 = vrot.slane %v1438, 4
    %v1441 = vshll.u32 %v1256, 16
    %v1443 = vrot.slane %v1441, 5
    %v1444 = vsel %vm297, %v1439, %v1443
    %v1446 = vshrl.u32 %v1257, 16
    %v1448 = vrot.slane %v1446, 4
    %v1449 = vshll.u32 %v1257, 16
    %v1451 = vrot.slane %v1449, 5
    %v1452 = vor.u32 %v1448, %v1451
    %v1453 = vrot.slane %v1452, 4
    %v1455 = vshll.u32 %v1258, 16
    %v1457 = vrot.slane %v1455, 5
    %v1458 = vsel %vm297, %v1453, %v1457
    %v1460 = vshrl.u32 %v1259, 16
    %v1462 = vrot.slane %v1460, 4
    %v1463 = vshll.u32 %v1259, 16
    %v1465 = vrot.slane %v1463, 5
    %v1466 = vor.u32 %v1462, %v1465
    %v1467 = vrot.slane %v1466, 4
    %v1469 = vshll.u32 %v1260, 16
    %v1471 = vrot.slane %v1469, 5
    %v1472 = vsel %vm297, %v1467, %v1471
    %v1474 = vshrl.u32 %v1261, 16
    %v1476 = vrot.slane %v1474, 4
    %v1477 = vshll.u32 %v1261, 16
    %v1479 = vrot.slane %v1477, 5
    %v1480 = vor.u32 %v1476, %v1479
    %v1481 = vrot.slane %v1480, 4
    %v1483 = vshll.u32 %v1262, 16
    %v1485 = vrot.slane %v1483, 5
    %v1486 = vsel %vm297, %v1481, %v1485
    %s1487 = scalar_lea.vmem %s1, 16
    %v1488 = vld [vmem:[%s1487] sm:$0x3]
    %v1489 = vunpack.c.l.b16 %v1276
    %v1490 = vunpack.c.l.b16 %v1290
    %v1491 = vunpack.c.l.b16 %v1304
    %v1492 = vunpack.c.l.b16 %v1318
    %v1493 = vunpack.c.l.b16 %v1332
    %v1494 = vunpack.c.l.b16 %v1346
    %v1495 = vunpack.c.l.b16 %v1360
    %v1496 = vunpack.c.l.b16 %v1374
    %v1497 = vunpack.c.l.b16 %v1388
    %v1498 = vunpack.c.l.b16 %v1402
    %v1499 = vunpack.c.l.b16 %v1416
    %v1500 = vunpack.c.l.b16 %v1430
    %v1501 = vunpack.c.l.b16 %v1444
    %v1502 = vunpack.c.l.b16 %v1458
    %v1503 = vunpack.c.l.b16 %v1472
    %v1504 = vunpack.c.l.b16 %v1486
    %v1505 = vpack.c.b16 %v1490, %v1489
    %v1506 = vpack.c.b16 %v1492, %v1491
    %v1507 = vpack.c.b16 %v1494, %v1493
    %v1508 = vpack.c.b16 %v1496, %v1495
    %v1509 = vpack.c.b16 %v1498, %v1497
    %v1510 = vpack.c.b16 %v1500, %v1499
    %v1511 = vpack.c.b16 %v1502, %v1501
    %v1512 = vpack.c.b16 %v1504, %v1503
    %v1514 = vsel %vm109, %v1505, 0
    %v1517 = vsel %vm109, %v1506, 0
    %v1520 = vsel %vm109, %v1507, 0
    %v1523 = vsel %vm109, %v1508, 0
    %v1526 = vsel %vm109, %v1509, 0
    %v1529 = vsel %vm109, %v1510, 0
    %v1532 = vsel %vm109, %v1511, 0
    %v1535 = vsel %vm109, %v1512, 0
    %v1538 = vsel %vm134, %v1488, 0
    %1540 = vmatpush.bf16.msra.mxu0 0
    %1541 = vmatpush.bf16.msra.mxu0 0
    %1542 = vmatpush.bf16.msra.mxu0 0
    %1543 = vmatpush.bf16.msra.mxu0 0
    %1544 = vmatpush.bf16.msra.mxu0 0
    %1545 = vmatpush.bf16.msra.mxu0 0
    %1546 = vmatpush.bf16.msra.mxu0 0
    %1547 = vmatpush.bf16.msra.mxu0 %v1538
    %1548 = vmatmul.bf16.gmra.mxu0 %v1514
    %v1549 = vpop.f32.mrf.mxu0
    %v1550 = vadd.f32 0.0, %v1549
    %v1551 = vpop.f32.mrf.mxu0
    %v1552 = vadd.f32 0.0, %v1551
    %1553 = vmatmul.bf16.gmra.mxu0 %v1517
    %v1554 = vpop.f32.mrf.mxu0
    %v1555 = vadd.f32 0.0, %v1554
    %v1556 = vpop.f32.mrf.mxu0
    %v1557 = vadd.f32 0.0, %v1556
    %1558 = vmatmul.bf16.gmra.mxu0 %v1520
    %v1559 = vpop.f32.mrf.mxu0
    %v1560 = vadd.f32 0.0, %v1559
    %v1561 = vpop.f32.mrf.mxu0
    %v1562 = vadd.f32 0.0, %v1561
    %1563 = vmatmul.bf16.gmra.mxu0 %v1523
    %v1564 = vpop.f32.mrf.mxu0
    %v1565 = vadd.f32 0.0, %v1564
    %v1566 = vpop.f32.mrf.mxu0
    %v1567 = vadd.f32 0.0, %v1566
    %1568 = vmatmul.bf16.gmra.mxu0 %v1526
    %v1569 = vpop.f32.mrf.mxu0
    %v1570 = vadd.f32 0.0, %v1569
    %v1571 = vpop.f32.mrf.mxu0
    %v1572 = vadd.f32 0.0, %v1571
    %1573 = vmatmul.bf16.gmra.mxu0 %v1529
    %v1574 = vpop.f32.mrf.mxu0
    %v1575 = vadd.f32 0.0, %v1574
    %v1576 = vpop.f32.mrf.mxu0
    %v1577 = vadd.f32 0.0, %v1576
    %1578 = vmatmul.bf16.gmra.mxu0 %v1532
    %v1579 = vpop.f32.mrf.mxu0
    %v1580 = vadd.f32 0.0, %v1579
    %v1581 = vpop.f32.mrf.mxu0
    %v1582 = vadd.f32 0.0, %v1581
    %1583 = vmatmul.bf16.gmra.mxu0 %v1535
    %v1584 = vpop.f32.mrf.mxu0
    %v1585 = vadd.f32 0.0, %v1584
    %v1586 = vpop.f32.mrf.mxu0
    %v1587 = vadd.f32 0.0, %v1586
    %1588 = vdwg.mxu0
    %v1589 = vadd.f32 %v1215, %v1550
    %v1590 = vadd.f32 %v1216, %v1552
    %v1591 = vadd.f32 %v1217, %v1555
    %v1592 = vadd.f32 %v1218, %v1557
    %v1593 = vadd.f32 %v1219, %v1560
    %v1594 = vadd.f32 %v1220, %v1562
    %v1595 = vadd.f32 %v1221, %v1565
    %v1596 = vadd.f32 %v1222, %v1567
    %v1597 = vadd.f32 %v1223, %v1570
    %v1598 = vadd.f32 %v1224, %v1572
    %v1599 = vadd.f32 %v1225, %v1575
    %v1600 = vadd.f32 %v1226, %v1577
    %v1601 = vadd.f32 %v1227, %v1580
    %v1602 = vadd.f32 %v1228, %v1582
    %v1603 = vadd.f32 %v1229, %v1585
    %v1604 = vadd.f32 %v1230, %v1587
    %1605 = vmatpush.msra.mxu0 %v1604
    %1606 = vmatpush.msra.mxu0 %v1603
    %1607 = vmatpush.msra.mxu0 %v1602
    %1608 = vmatpush.msra.mxu0 %v1601
    %1609 = vmatpush.msra.mxu0 %v1600
    %1610 = vmatpush.msra.mxu0 %v1599
    %1611 = vmatpush.msra.mxu0 %v1598
    %1612 = vmatpush.msra.mxu0 %v1597
    %1613 = vmatpush.msra.mxu0 %v1596
    %1614 = vmatpush.msra.mxu0 %v1595
    %1615 = vmatpush.msra.mxu0 %v1594
    %1616 = vmatpush.msra.mxu0 %v1593
    %1617 = vmatpush.msra.mxu0 %v1592
    %1618 = vmatpush.msra.mxu0 %v1591
    %1619 = vmatpush.msra.mxu0 %v1590
    %1620 = vmatpush.msra.mxu0 %v1589
    %1621 = vmatmul.f32.gmra.mxu0 1.0
    %v1622 = vpop.f32.mrf.mxu0
    %v1623 = vadd.f32 0.0, %v1622
    %1624 = vdwg.mxu0
    %v1625 = vmul.f32 %v1623, 0.0078125
    %v1626 = vperm.slane %v1625, 0
    %v1627 = vsub.f32 %v1589, %v1626
    %v1628 = vsub.f32 %v1590, %v1626
    %v1629 = vsub.f32 %v1591, %v1626
    %v1630 = vsub.f32 %v1592, %v1626
    %v1631 = vsub.f32 %v1593, %v1626
    %v1632 = vsub.f32 %v1594, %v1626
    %v1633 = vsub.f32 %v1595, %v1626
    %v1634 = vsub.f32 %v1596, %v1626
    %v1635 = vsub.f32 %v1597, %v1626
    %v1636 = vsub.f32 %v1598, %v1626
    %v1637 = vsub.f32 %v1599, %v1626
    %v1638 = vsub.f32 %v1600, %v1626
    %v1639 = vsub.f32 %v1601, %v1626
    %v1640 = vsub.f32 %v1602, %v1626
    %v1641 = vsub.f32 %v1603, %v1626
    %v1642 = vsub.f32 %v1604, %v1626
    %v1643 = vmul.f32 %v1627, %v1627
    %v1644 = vmul.f32 %v1628, %v1628
    %v1645 = vmul.f32 %v1629, %v1629
    %v1646 = vmul.f32 %v1630, %v1630
    %v1647 = vmul.f32 %v1631, %v1631
    %v1648 = vmul.f32 %v1632, %v1632
    %v1649 = vmul.f32 %v1633, %v1633
    %v1650 = vmul.f32 %v1634, %v1634
    %v1651 = vmul.f32 %v1635, %v1635
    %v1652 = vmul.f32 %v1636, %v1636
    %v1653 = vmul.f32 %v1637, %v1637
    %v1654 = vmul.f32 %v1638, %v1638
    %v1655 = vmul.f32 %v1639, %v1639
    %v1656 = vmul.f32 %v1640, %v1640
    %v1657 = vmul.f32 %v1641, %v1641
    %v1658 = vmul.f32 %v1642, %v1642
    %1659 = vmatpush.msra.mxu0 %v1658
    %1660 = vmatpush.msra.mxu0 %v1657
    %1661 = vmatpush.msra.mxu0 %v1656
    %1662 = vmatpush.msra.mxu0 %v1655
    %1663 = vmatpush.msra.mxu0 %v1654
    %1664 = vmatpush.msra.mxu0 %v1653
    %1665 = vmatpush.msra.mxu0 %v1652
    %1666 = vmatpush.msra.mxu0 %v1651
    %1667 = vmatpush.msra.mxu0 %v1650
    %1668 = vmatpush.msra.mxu0 %v1649
    %1669 = vmatpush.msra.mxu0 %v1648
    %1670 = vmatpush.msra.mxu0 %v1647
    %1671 = vmatpush.msra.mxu0 %v1646
    %1672 = vmatpush.msra.mxu0 %v1645
    %1673 = vmatpush.msra.mxu0 %v1644
    %1674 = vmatpush.msra.mxu0 %v1643
    %1675 = vmatmul.f32.gmra.mxu0 1.0
    %v1676 = vpop.f32.mrf.mxu0
    %v1677 = vadd.f32 0.0, %v1676
    %1678 = vdwg.mxu0
    %v1679 = vmul.f32 %v1677, 0.0078125
    %v1680 = vld [vmem:[%s2] sm:$0x1]
    %v1681 = vadd.f32 %v1679, 1e-05
    %v1682 = vrsqrt.pop %v1681
    %v1683 = vmul.f32 %v1682, %v1681
    %v1684 = vmul.f32 %v1683, %v1682
    %v1685 = vmul.f32 0.5, %v1684
    %v1686 = vsub.f32 1.5, %v1685
    %v1687 = vmul.f32 %v1682, %v1686
    %vm1688 = vweird.f32 %v1681
    %vm1689 = vweird.f32 %v1682
    %vm1690 = vmor %vm1688, %vm1689
    %v1691 = vsel %vm1690, %v1682, %v1687
    %v1692 = vmul.f32 %v1680, %v1691
    %v1694 = vperm.slane %v1692, 0
    %v1696 = vmul.f32 %v1627, %v1694
    %v1697 = vmul.f32 %v1628, %v1694
    %v1698 = vmul.f32 %v1629, %v1694
    %v1699 = vmul.f32 %v1630, %v1694
    %v1700 = vmul.f32 %v1631, %v1694
    %v1701 = vmul.f32 %v1632, %v1694
    %v1702 = vmul.f32 %v1633, %v1694
    %v1703 = vmul.f32 %v1634, %v1694
    %v1704 = vmul.f32 %v1635, %v1694
    %v1705 = vmul.f32 %v1636, %v1694
    %v1706 = vmul.f32 %v1637, %v1694
    %v1707 = vmul.f32 %v1638, %v1694
    %v1708 = vmul.f32 %v1639, %v1694
    %v1709 = vmul.f32 %v1640, %v1694
    %v1710 = vmul.f32 %v1641, %v1694
    %v1711 = vmul.f32 %v1642, %v1694
    %v1712 = vld [vmem:[%s3] sm:$0x1]
    %v1714 = vperm.slane %v1712, 0
    %v1716 = vadd.f32 %v1696, %v1714
    %v1717 = vadd.f32 %v1697, %v1714
    %v1718 = vadd.f32 %v1698, %v1714
    %v1719 = vadd.f32 %v1699, %v1714
    %v1720 = vadd.f32 %v1700, %v1714
    %v1721 = vadd.f32 %v1701, %v1714
    %v1722 = vadd.f32 %v1702, %v1714
    %v1723 = vadd.f32 %v1703, %v1714
    %v1724 = vadd.f32 %v1704, %v1714
    %v1725 = vadd.f32 %v1705, %v1714
    %v1726 = vadd.f32 %v1706, %v1714
    %v1727 = vadd.f32 %v1707, %v1714
    %v1728 = vadd.f32 %v1708, %v1714
    %v1729 = vadd.f32 %v1709, %v1714
    %v1730 = vadd.f32 %v1710, %v1714
    %v1731 = vadd.f32 %v1711, %v1714
    %v1732 = vmax.f32 %v1716, 0.0
    %v1733 = vmax.f32 %v1717, 0.0
    %v1734 = vmax.f32 %v1718, 0.0
    %v1735 = vmax.f32 %v1719, 0.0
    %v1736 = vmax.f32 %v1720, 0.0
    %v1737 = vmax.f32 %v1721, 0.0
    %v1738 = vmax.f32 %v1722, 0.0
    %v1739 = vmax.f32 %v1723, 0.0
    %v1740 = vmax.f32 %v1724, 0.0
    %v1741 = vmax.f32 %v1725, 0.0
    %v1742 = vmax.f32 %v1726, 0.0
    %v1743 = vmax.f32 %v1727, 0.0
    %v1744 = vmax.f32 %v1728, 0.0
    %v1745 = vmax.f32 %v1729, 0.0
    %v1746 = vmax.f32 %v1730, 0.0
    %v1747 = vmax.f32 %v1731, 0.0
    %vm1748 = vcmask 59392
    %vm1749 = vsmask.f32 2304
    %vm1750 = vmand %vm1748, %vm1749
    %v1751 = vld [vmem:[#allocation2] sm:$0x7]
    %v1752 = vsel %vm1750, 0, %v1751
    %1753 = vst [vmem:[#allocation2] sm:$0x7] %v1752
    %v1754 = vld [vmem:[#allocation2 + $0x14] sm:$0x7]
    %v1755 = vsel %vm1750, 0, %v1754
    %1756 = vst [vmem:[#allocation2 + $0x14] sm:$0x7] %v1755
    %vm1757 = vcmask 57344
    %vm1758 = vsmask.f32 256
    %vm1759 = vmand %vm1757, %vm1758
    %v1760 = vld [vmem:[#allocation2] sm:$0x1]
    %v1761 = vsel %vm1759, 0, %v1760
    %1762 = vst [vmem:[#allocation2] sm:$0x1] %v1761
    %v1763 = vld [vmem:[#allocation2 + $0x4] sm:$0x1]
    %v1764 = vsel %vm1759, 0, %v1763
    %1765 = vst [vmem:[#allocation2 + $0x4] sm:$0x1] %v1764
    %v1766 = vld [vmem:[#allocation2 + $0x8] sm:$0x1]
    %v1767 = vsel %vm1759, 0, %v1766
    %1768 = vst [vmem:[#allocation2 + $0x8] sm:$0x1] %v1767
    %v1769 = vld [vmem:[#allocation2 + $0xc] sm:$0x1]
    %v1770 = vsel %vm1759, 0, %v1769
    %1771 = vst [vmem:[#allocation2 + $0xc] sm:$0x1] %v1770
    %v1772 = vld [vmem:[#allocation2 + $0x10] sm:$0x1]
    %v1773 = vsel %vm1759, 0, %v1772
    %1774 = vst [vmem:[#allocation2 + $0x10] sm:$0x1] %v1773
    %v1775 = vld [vmem:[#allocation2 + $0x14] sm:$0x1]
    %v1776 = vsel %vm1759, 0, %v1775
    %1777 = vst [vmem:[#allocation2 + $0x14] sm:$0x1] %v1776
    %v1778 = vld [vmem:[#allocation2 + $0x18] sm:$0x1]
    %v1779 = vsel %vm1759, 0, %v1778
    %1780 = vst [vmem:[#allocation2 + $0x18] sm:$0x1] %v1779
    %v1781 = vld [vmem:[#allocation2 + $0x1c] sm:$0x1]
    %v1782 = vsel %vm1759, 0, %v1781
    %1783 = vst [vmem:[#allocation2 + $0x1c] sm:$0x1] %v1782
    %v1784 = vld [vmem:[#allocation2 + $0x20] sm:$0x1]
    %v1785 = vsel %vm1759, 0, %v1784
    %1786 = vst [vmem:[#allocation2 + $0x20] sm:$0x1] %v1785
    %v1787 = vld [vmem:[#allocation2 + $0x24] sm:$0x1]
    %v1788 = vsel %vm1759, 0, %v1787
    %1789 = vst [vmem:[#allocation2 + $0x24] sm:$0x1] %v1788
    %vm1790 = vcmask 124992
    %vm1791 = vmand %vm1790, %vm1749
    %v1792 = vld [vmem:[#allocation2] sm:$0x7]
    %v1793 = vsel %vm1791, 0, %v1792
    %1794 = vst [vmem:[#allocation2] sm:$0x7] %v1793
    %v1795 = vld [vmem:[#allocation2 + $0x14] sm:$0x7]
    %v1796 = vsel %vm1791, 0, %v1795
    %1797 = vst [vmem:[#allocation2 + $0x14] sm:$0x7] %v1796
    %vm1798 = vcmask 124994
    %vm1799 = vmand %vm1798, %vm1749
    %v1800 = vld [vmem:[#allocation2] sm:$0x4]
    %v1801 = vsel %vm1799, 0, %v1800
    %1802 = vst [vmem:[#allocation2] sm:$0x4] %v1801
    %v1803 = vld [vmem:[#allocation2 + $0x4] sm:$0x4]
    %v1804 = vsel %vm1799, 0, %v1803
    %1805 = vst [vmem:[#allocation2 + $0x4] sm:$0x4] %v1804
    %v1806 = vld [vmem:[#allocation2 + $0x8] sm:$0x4]
    %v1807 = vsel %vm1799, 0, %v1806
    %1808 = vst [vmem:[#allocation2 + $0x8] sm:$0x4] %v1807
    %v1809 = vld [vmem:[#allocation2 + $0xc] sm:$0x4]
    %v1810 = vsel %vm1799, 0, %v1809
    %1811 = vst [vmem:[#allocation2 + $0xc] sm:$0x4] %v1810
    %v1812 = vld [vmem:[#allocation2 + $0x10] sm:$0x4]
    %v1813 = vsel %vm1799, 0, %v1812
    %1814 = vst [vmem:[#allocation2 + $0x10] sm:$0x4] %v1813
    %v1815 = vld [vmem:[#allocation2 + $0x14] sm:$0x4]
    %v1816 = vsel %vm1799, 0, %v1815
    %1817 = vst [vmem:[#allocation2 + $0x14] sm:$0x4] %v1816
    %v1818 = vld [vmem:[#allocation2 + $0x18] sm:$0x4]
    %v1819 = vsel %vm1799, 0, %v1818
    %1820 = vst [vmem:[#allocation2 + $0x18] sm:$0x4] %v1819
    %v1821 = vld [vmem:[#allocation2 + $0x1c] sm:$0x4]
    %v1822 = vsel %vm1799, 0, %v1821
    %1823 = vst [vmem:[#allocation2 + $0x1c] sm:$0x4] %v1822
    %v1824 = vld [vmem:[#allocation2 + $0x20] sm:$0x4]
    %v1825 = vsel %vm1799, 0, %v1824
    %1826 = vst [vmem:[#allocation2 + $0x20] sm:$0x4] %v1825
    %v1827 = vld [vmem:[#allocation2 + $0x24] sm:$0x4]
    %v1828 = vsel %vm1799, 0, %v1827
    %1829 = vst [vmem:[#allocation2 + $0x24] sm:$0x4] %v1828
    %s1830 = scalar_lea.vmem [#allocation2], 16
    %vm1831 = vcmask 190592
    %vm1832 = vmand %vm1831, %vm1749
    %v1833 = vld [vmem:[%s1830] sm:$0x7]
    %v1834 = vsel %vm1832, 0, %v1833
    %1835 = vst [vmem:[%s1830] sm:$0x7] %v1834
    %v1836 = vld [vmem:[%s1830 + $0x14] sm:$0x7]
    %v1837 = vsel %vm1832, 0, %v1836
    %1838 = vst [vmem:[%s1830 + $0x14] sm:$0x7] %v1837
    %vm1839 = vcmask 188544
    %vm1840 = vmand %vm1839, %vm1758
    %v1841 = vld [vmem:[#allocation2] sm:$0x1]
    %v1842 = vsel %vm1840, 0, %v1841
    %1843 = vst [vmem:[#allocation2] sm:$0x1] %v1842
    %v1844 = vld [vmem:[#allocation2 + $0x4] sm:$0x1]
    %v1845 = vsel %vm1840, 0, %v1844
    %1846 = vst [vmem:[#allocation2 + $0x4] sm:$0x1] %v1845
    %v1847 = vld [vmem:[#allocation2 + $0x8] sm:$0x1]
    %v1848 = vsel %vm1840, 0, %v1847
    %1849 = vst [vmem:[#allocation2 + $0x8] sm:$0x1] %v1848
    %v1850 = vld [vmem:[#allocation2 + $0xc] sm:$0x1]
    %v1851 = vsel %vm1840, 0, %v1850
    %1852 = vst [vmem:[#allocation2 + $0xc] sm:$0x1] %v1851
    %v1853 = vld [vmem:[#allocation2 + $0x10] sm:$0x1]
    %v1854 = vsel %vm1840, 0, %v1853
    %1855 = vst [vmem:[#allocation2 + $0x10] sm:$0x1] %v1854
    %v1856 = vld [vmem:[#allocation2 + $0x14] sm:$0x1]
    %v1857 = vsel %vm1840, 0, %v1856
    %1858 = vst [vmem:[#allocation2 + $0x14] sm:$0x1] %v1857
    %v1859 = vld [vmem:[#allocation2 + $0x18] sm:$0x1]
    %v1860 = vsel %vm1840, 0, %v1859
    %1861 = vst [vmem:[#allocation2 + $0x18] sm:$0x1] %v1860
    %v1862 = vld [vmem:[#allocation2 + $0x1c] sm:$0x1]
    %v1863 = vsel %vm1840, 0, %v1862
    %1864 = vst [vmem:[#allocation2 + $0x1c] sm:$0x1] %v1863
    %v1865 = vld [vmem:[#allocation2 + $0x20] sm:$0x1]
    %v1866 = vsel %vm1840, 0, %v1865
    %1867 = vst [vmem:[#allocation2 + $0x20] sm:$0x1] %v1866
    %v1868 = vld [vmem:[#allocation2 + $0x24] sm:$0x1]
    %v1869 = vsel %vm1840, 0, %v1868
    %1870 = vst [vmem:[#allocation2 + $0x24] sm:$0x1] %v1869
    %vm1871 = vcmask 256192
    %vm1872 = vmand %vm1871, %vm1749
    %v1873 = vld [vmem:[%s1830] sm:$0x7]
    %v1874 = vsel %vm1872, 0, %v1873
    %1875 = vst [vmem:[%s1830] sm:$0x7] %v1874
    %v1876 = vld [vmem:[%s1830 + $0x14] sm:$0x7]
    %v1877 = vsel %vm1872, 0, %v1876
    %1878 = vst [vmem:[%s1830 + $0x14] sm:$0x7] %v1877
    %vm1879 = vcmask 256194
    %vm1880 = vmand %vm1879, %vm1749
    %v1881 = vld [vmem:[#allocation2] sm:$0x4]
    %v1882 = vsel %vm1880, 0, %v1881
    %1883 = vst [vmem:[#allocation2] sm:$0x4] %v1882
    %v1884 = vld [vmem:[#allocation2 + $0x4] sm:$0x4]
    %v1885 = vsel %vm1880, 0, %v1884
    %1886 = vst [vmem:[#allocation2 + $0x4] sm:$0x4] %v1885
    %v1887 = vld [vmem:[#allocation2 + $0x8] sm:$0x4]
    %v1888 = vsel %vm1880, 0, %v1887
    %1889 = vst [vmem:[#allocation2 + $0x8] sm:$0x4] %v1888
    %v1890 = vld [vmem:[#allocation2 + $0xc] sm:$0x4]
    %v1891 = vsel %vm1880, 0, %v1890
    %1892 = vst [vmem:[#allocation2 + $0xc] sm:$0x4] %v1891
    %v1893 = vld [vmem:[#allocation2 + $0x10] sm:$0x4]
    %v1894 = vsel %vm1880, 0, %v1893
    %1895 = vst [vmem:[#allocation2 + $0x10] sm:$0x4] %v1894
    %v1896 = vld [vmem:[#allocation2 + $0x14] sm:$0x4]
    %v1897 = vsel %vm1880, 0, %v1896
    %1898 = vst [vmem:[#allocation2 + $0x14] sm:$0x4] %v1897
    %v1899 = vld [vmem:[#allocation2 + $0x18] sm:$0x4]
    %v1900 = vsel %vm1880, 0, %v1899
    %1901 = vst [vmem:[#allocation2 + $0x18] sm:$0x4] %v1900
    %v1902 = vld [vmem:[#allocation2 + $0x1c] sm:$0x4]
    %v1903 = vsel %vm1880, 0, %v1902
    %1904 = vst [vmem:[#allocation2 + $0x1c] sm:$0x4] %v1903
    %v1905 = vld [vmem:[#allocation2 + $0x20] sm:$0x4]
    %v1906 = vsel %vm1880, 0, %v1905
    %1907 = vst [vmem:[#allocation2 + $0x20] sm:$0x4] %v1906
    %v1908 = vld [vmem:[#allocation2 + $0x24] sm:$0x4]
    %v1909 = vsel %vm1880, 0, %v1908
    %1910 = vst [vmem:[#allocation2 + $0x24] sm:$0x4] %v1909
    %v1911 = vpack.c.bf16 %v1732, %v1732
    %v1912 = vpack.c.bf16 %v1733, %v1733
    %v1913 = vpack.c.bf16 %v1734, %v1734
    %v1914 = vpack.c.bf16 %v1735, %v1735
    %v1915 = vpack.c.bf16 %v1736, %v1736
    %v1916 = vpack.c.bf16 %v1737, %v1737
    %v1917 = vpack.c.bf16 %v1738, %v1738
    %v1918 = vpack.c.bf16 %v1739, %v1739
    %v1919 = vpack.c.bf16 %v1740, %v1740
    %v1920 = vpack.c.bf16 %v1741, %v1741
    %v1921 = vpack.c.bf16 %v1742, %v1742
    %v1922 = vpack.c.bf16 %v1743, %v1743
    %v1923 = vpack.c.bf16 %v1744, %v1744
    %v1924 = vpack.c.bf16 %v1745, %v1745
    %v1925 = vpack.c.bf16 %v1746, %v1746
    %v1926 = vpack.c.bf16 %v1747, %v1747
    %v1943 = vrot.slane %v1911, 3
    %v1944 = vrot.slane %v1912, 3
    %v1945 = vrot.slane %v1913, 3
    %v1946 = vrot.slane %v1914, 3
    %v1947 = vrot.slane %v1915, 3
    %v1948 = vrot.slane %v1916, 3
    %v1949 = vrot.slane %v1917, 3
    %v1950 = vrot.slane %v1918, 3
    %v1951 = vrot.slane %v1919, 3
    %v1952 = vrot.slane %v1920, 3
    %v1953 = vrot.slane %v1921, 3
    %v1954 = vrot.slane %v1922, 3
    %v1955 = vrot.slane %v1923, 3
    %v1956 = vrot.slane %v1924, 3
    %v1957 = vrot.slane %v1925, 3
    %v1958 = vrot.slane %v1926, 3
    %vm1959 = vcmask 1040384
    %v1962 = vsel %vm1959, %v1911, %v1943
    %vm1963 = vcmask 1041409
    %v1964 = vsel %vm1963, %v1911, %v1943
    %v1966 = vrot.slane %v1964, 1
    %vm1967 = vcmask 1042434
    %v1968 = vsel %vm1967, %v1911, %v1943
    %v1970 = vrot.slane %v1968, 2
    %vm1971 = vcmask 1043459
    %v1972 = vsel %vm1971, %v1911, %v1943
    %v1974 = vrot.slane %v1972, 3
    %v1977 = vsel %vm1959, %v1912, %v1944
    %v1978 = vsel %vm1963, %v1912, %v1944
    %v1980 = vrot.slane %v1978, 1
    %v1981 = vsel %vm1967, %v1912, %v1944
    %v1983 = vrot.slane %v1981, 2
    %v1984 = vsel %vm1971, %v1912, %v1944
    %v1986 = vrot.slane %v1984, 3
    %v1989 = vsel %vm1959, %v1913, %v1945
    %v1990 = vsel %vm1963, %v1913, %v1945
    %v1992 = vrot.slane %v1990, 1
    %v1993 = vsel %vm1967, %v1913, %v1945
    %v1995 = vrot.slane %v1993, 2
    %v1996 = vsel %vm1971, %v1913, %v1945
    %v1998 = vrot.slane %v1996, 3
    %v2001 = vsel %vm1959, %v1914, %v1946
    %v2002 = vsel %vm1963, %v1914, %v1946
    %v2004 = vrot.slane %v2002, 1
    %v2005 = vsel %vm1967, %v1914, %v1946
    %v2007 = vrot.slane %v2005, 2
    %v2008 = vsel %vm1971, %v1914, %v1946
    %v2010 = vrot.slane %v2008, 3
    %v2013 = vsel %vm1959, %v1915, %v1947
    %v2014 = vsel %vm1963, %v1915, %v1947
    %v2016 = vrot.slane %v2014, 1
    %v2017 = vsel %vm1967, %v1915, %v1947
    %v2019 = vrot.slane %v2017, 2
    %v2020 = vsel %vm1971, %v1915, %v1947
    %v2022 = vrot.slane %v2020, 3
    %v2025 = vsel %vm1959, %v1916, %v1948
    %v2026 = vsel %vm1963, %v1916, %v1948
    %v2028 = vrot.slane %v2026, 1
    %v2029 = vsel %vm1967, %v1916, %v1948
    %v2031 = vrot.slane %v2029, 2
    %v2032 = vsel %vm1971, %v1916, %v1948
    %v2034 = vrot.slane %v2032, 3
    %v2037 = vsel %vm1959, %v1917, %v1949
    %v2038 = vsel %vm1963, %v1917, %v1949
    %v2040 = vrot.slane %v2038, 1
    %v2041 = vsel %vm1967, %v1917, %v1949
    %v2043 = vrot.slane %v2041, 2
    %v2044 = vsel %vm1971, %v1917, %v1949
    %v2046 = vrot.slane %v2044, 3
    %v2049 = vsel %vm1959, %v1918, %v1950
    %v2050 = vsel %vm1963, %v1918, %v1950
    %v2052 = vrot.slane %v2050, 1
    %v2053 = vsel %vm1967, %v1918, %v1950
    %v2055 = vrot.slane %v2053, 2
    %v2056 = vsel %vm1971, %v1918, %v1950
    %v2058 = vrot.slane %v2056, 3
    %v2061 = vsel %vm1959, %v1919, %v1951
    %v2062 = vsel %vm1963, %v1919, %v1951
    %v2064 = vrot.slane %v2062, 1
    %v2065 = vsel %vm1967, %v1919, %v1951
    %v2067 = vrot.slane %v2065, 2
    %v2068 = vsel %vm1971, %v1919, %v1951
    %v2070 = vrot.slane %v2068, 3
    %v2073 = vsel %vm1959, %v1920, %v1952
    %v2074 = vsel %vm1963, %v1920, %v1952
    %v2076 = vrot.slane %v2074, 1
    %v2077 = vsel %vm1967, %v1920, %v1952
    %v2079 = vrot.slane %v2077, 2
    %v2080 = vsel %vm1971, %v1920, %v1952
    %v2082 = vrot.slane %v2080, 3
    %v2085 = vsel %vm1959, %v1921, %v1953
    %v2086 = vsel %vm1963, %v1921, %v1953
    %v2088 = vrot.slane %v2086, 1
    %v2089 = vsel %vm1967, %v1921, %v1953
    %v2091 = vrot.slane %v2089, 2
    %v2092 = vsel %vm1971, %v1921, %v1953
    %v2094 = vrot.slane %v2092, 3
    %v2097 = vsel %vm1959, %v1922, %v1954
    %v2098 = vsel %vm1963, %v1922, %v1954
    %v2100 = vrot.slane %v2098, 1
    %v2101 = vsel %vm1967, %v1922, %v1954
    %v2103 = vrot.slane %v2101, 2
    %v2104 = vsel %vm1971, %v1922, %v1954
    %v2106 = vrot.slane %v2104, 3
    %v2109 = vsel %vm1959, %v1923, %v1955
    %v2110 = vsel %vm1963, %v1923, %v1955
    %v2112 = vrot.slane %v2110, 1
    %v2113 = vsel %vm1967, %v1923, %v1955
    %v2115 = vrot.slane %v2113, 2
    %v2116 = vsel %vm1971, %v1923, %v1955
    %v2118 = vrot.slane %v2116, 3
    %v2121 = vsel %vm1959, %v1924, %v1956
    %v2122 = vsel %vm1963, %v1924, %v1956
    %v2124 = vrot.slane %v2122, 1
    %v2125 = vsel %vm1967, %v1924, %v1956
    %v2127 = vrot.slane %v2125, 2
    %v2128 = vsel %vm1971, %v1924, %v1956
    %v2130 = vrot.slane %v2128, 3
    %v2133 = vsel %vm1959, %v1925, %v1957
    %v2134 = vsel %vm1963, %v1925, %v1957
    %v2136 = vrot.slane %v2134, 1
    %v2137 = vsel %vm1967, %v1925, %v1957
    %v2139 = vrot.slane %v2137, 2
    %v2140 = vsel %vm1971, %v1925, %v1957
    %v2142 = vrot.slane %v2140, 3
    %v2145 = vsel %vm1959, %v1926, %v1958
    %v2146 = vsel %vm1963, %v1926, %v1958
    %v2148 = vrot.slane %v2146, 1
    %v2149 = vsel %vm1967, %v1926, %v1958
    %v2151 = vrot.slane %v2149, 2
    %v2152 = vsel %vm1971, %v1926, %v1958
    %v2154 = vrot.slane %v2152, 3
    %2155 = vst [vmem:[#allocation1] ss:$4 sm:$0xff] %v1977
    %v2156 = vld [vmem:[#allocation1] sm:$0xff]
    %s2159 = scalar_lea.vmem [#allocation1], 32
    %2160 = vst [vmem:[%s2159] ss:$4 sm:$0xff] %v1980
    %v2161 = vld [vmem:[#allocation1 + $0x20] sm:$0xff]
    %2164 = vst [vmem:[#allocation1] ss:$4 sm:$0xff] %v1983
    %v2165 = vld [vmem:[#allocation1] sm:$0xff]
    %2168 = vst [vmem:[%s2159] ss:$4 sm:$0xff] %v1986
    %v2169 = vld [vmem:[#allocation1 + $0x20] sm:$0xff]
    %2171 = vst [vmem:[#allocation1] ss:$4 sm:$0xff] %v2001
    %v2172 = vld [vmem:[#allocation1] sm:$0xff]
    %2175 = vst [vmem:[%s2159] ss:$4 sm:$0xff] %v2004
    %v2176 = vld [vmem:[#allocation1 + $0x20] sm:$0xff]
    %2179 = vst [vmem:[#allocation1] ss:$4 sm:$0xff] %v2007
    %v2180 = vld [vmem:[#allocation1] sm:$0xff]
    %2183 = vst [vmem:[%s2159] ss:$4 sm:$0xff] %v2010
    %v2184 = vld [vmem:[#allocation1 + $0x20] sm:$0xff]
    %2186 = vst [vmem:[#allocation1] ss:$4 sm:$0xff] %v2025
    %v2187 = vld [vmem:[#allocation1] sm:$0xff]
    %2190 = vst [vmem:[%s2159] ss:$4 sm:$0xff] %v2028
    %v2191 = vld [vmem:[#allocation1 + $0x20] sm:$0xff]
    %2194 = vst [vmem:[#allocation1] ss:$4 sm:$0xff] %v2031
    %v2195 = vld [vmem:[#allocation1] sm:$0xff]
    %2198 = vst [vmem:[%s2159] ss:$4 sm:$0xff] %v2034
    %v2199 = vld [vmem:[#allocation1 + $0x20] sm:$0xff]
    %2201 = vst [vmem:[#allocation1] ss:$4 sm:$0xff] %v2049
    %v2202 = vld [vmem:[#allocation1] sm:$0xff]
    %2205 = vst [vmem:[%s2159] ss:$4 sm:$0xff] %v2052
    %v2206 = vld [vmem:[#allocation1 + $0x20] sm:$0xff]
    %2209 = vst [vmem:[#allocation1] ss:$4 sm:$0xff] %v2055
    %v2210 = vld [vmem:[#allocation1] sm:$0xff]
    %2213 = vst [vmem:[%s2159] ss:$4 sm:$0xff] %v2058
    %v2214 = vld [vmem:[#allocation1 + $0x20] sm:$0xff]
    %2216 = vst [vmem:[#allocation1] ss:$4 sm:$0xff] %v2073
    %v2217 = vld [vmem:[#allocation1] sm:$0xff]
    %2220 = vst [vmem:[%s2159] ss:$4 sm:$0xff] %v2076
    %v2221 = vld [vmem:[#allocation1 + $0x20] sm:$0xff]
    %2224 = vst [vmem:[#allocation1] ss:$4 sm:$0xff] %v2079
    %v2225 = vld [vmem:[#allocation1] sm:$0xff]
    %2228 = vst [vmem:[%s2159] ss:$4 sm:$0xff] %v2082
    %v2229 = vld [vmem:[#allocation1 + $0x20] sm:$0xff]
    %2231 = vst [vmem:[#allocation1] ss:$4 sm:$0xff] %v2097
    %v2232 = vld [vmem:[#allocation1] sm:$0xff]
    %2235 = vst [vmem:[%s2159] ss:$4 sm:$0xff] %v2100
    %v2236 = vld [vmem:[#allocation1 + $0x20] sm:$0xff]
    %2239 = vst [vmem:[#allocation1] ss:$4 sm:$0xff] %v2103
    %v2240 = vld [vmem:[#allocation1] sm:$0xff]
    %2243 = vst [vmem:[%s2159] ss:$4 sm:$0xff] %v2106
    %v2244 = vld [vmem:[#allocation1 + $0x20] sm:$0xff]
    %2246 = vst [vmem:[#allocation1] ss:$4 sm:$0xff] %v2121
    %v2247 = vld [vmem:[#allocation1] sm:$0xff]
    %2250 = vst [vmem:[%s2159] ss:$4 sm:$0xff] %v2124
    %v2251 = vld [vmem:[#allocation1 + $0x20] sm:$0xff]
    %2254 = vst [vmem:[#allocation1] ss:$4 sm:$0xff] %v2127
    %v2255 = vld [vmem:[#allocation1] sm:$0xff]
    %2258 = vst [vmem:[%s2159] ss:$4 sm:$0xff] %v2130
    %v2259 = vld [vmem:[#allocation1 + $0x20] sm:$0xff]
    %2261 = vst [vmem:[#allocation1] ss:$4 sm:$0xff] %v2145
    %v2262 = vld [vmem:[#allocation1] sm:$0xff]
    %2265 = vst [vmem:[%s2159] ss:$4 sm:$0xff] %v2148
    %v2266 = vld [vmem:[#allocation1 + $0x20] sm:$0xff]
    %2269 = vst [vmem:[#allocation1] ss:$4 sm:$0xff] %v2151
    %v2270 = vld [vmem:[#allocation1] sm:$0xff]
    %2273 = vst [vmem:[%s2159] ss:$4 sm:$0xff] %v2154
    %v2274 = vld [vmem:[#allocation1 + $0x20] sm:$0xff]
    %v2276 = vunpack.c.l.b16 %v2156
    %v2277 = vunpack.c.l.b16 %v2161
    %v2278 = vunpack.c.l.b16 %v2165
    %v2279 = vunpack.c.l.b16 %v2169
    %v2280 = vunpack.c.l.b16 %v2172
    %v2281 = vunpack.c.l.b16 %v2176
    %v2282 = vunpack.c.l.b16 %v2180
    %v2283 = vunpack.c.l.b16 %v2184
    %v2284 = vunpack.c.l.b16 %v2187
    %v2285 = vunpack.c.l.b16 %v2191
    %v2286 = vunpack.c.l.b16 %v2195
    %v2287 = vunpack.c.l.b16 %v2199
    %v2288 = vunpack.c.l.b16 %v2202
    %v2289 = vunpack.c.l.b16 %v2206
    %v2290 = vunpack.c.l.b16 %v2210
    %v2291 = vunpack.c.l.b16 %v2214
    %v2292 = vunpack.c.l.b16 %v2217
    %v2293 = vunpack.c.l.b16 %v2221
    %v2294 = vunpack.c.l.b16 %v2225
    %v2295 = vunpack.c.l.b16 %v2229
    %v2296 = vunpack.c.l.b16 %v2232
    %v2297 = vunpack.c.l.b16 %v2236
    %v2298 = vunpack.c.l.b16 %v2240
    %v2299 = vunpack.c.l.b16 %v2244
    %v2300 = vunpack.c.l.b16 %v2247
    %v2301 = vunpack.c.l.b16 %v2251
    %v2302 = vunpack.c.l.b16 %v2255
    %v2303 = vunpack.c.l.b16 %v2259
    %v2304 = vunpack.c.l.b16 %v2262
    %v2305 = vunpack.c.l.b16 %v2266
    %v2306 = vunpack.c.l.b16 %v2270
    %v2307 = vunpack.c.l.b16 %v2274
    %v2308 = vrot.slane %v2277, 7
    %v2309 = vsel %vm1967, %v2308, %v2276
    %v2310 = vrot.slane %v2278, 6
    %v2311 = vsel %vm1971, %v2310, %v2309
    %v2312 = vrot.slane %v2279, 5
    %vm2313 = vcmask 1044484
    %v2314 = vsel %vm2313, %v2312, %v2311
    %v2315 = vrot.slane %v2281, 7
    %v2316 = vsel %vm1967, %v2315, %v2280
    %v2317 = vrot.slane %v2282, 6
    %v2318 = vsel %vm1971, %v2317, %v2316
    %v2319 = vrot.slane %v2283, 5
    %v2320 = vsel %vm2313, %v2319, %v2318
    %v2321 = vrot.slane %v2285, 7
    %v2322 = vsel %vm1967, %v2321, %v2284
    %v2323 = vrot.slane %v2286, 6
    %v2324 = vsel %vm1971, %v2323, %v2322
    %v2325 = vrot.slane %v2287, 5
    %v2326 = vsel %vm2313, %v2325, %v2324
    %v2327 = vrot.slane %v2289, 7
    %v2328 = vsel %vm1967, %v2327, %v2288
    %v2329 = vrot.slane %v2290, 6
    %v2330 = vsel %vm1971, %v2329, %v2328
    %v2331 = vrot.slane %v2291, 5
    %v2332 = vsel %vm2313, %v2331, %v2330
    %v2333 = vrot.slane %v2293, 7
    %v2334 = vsel %vm1967, %v2333, %v2292
    %v2335 = vrot.slane %v2294, 6
    %v2336 = vsel %vm1971, %v2335, %v2334
    %v2337 = vrot.slane %v2295, 5
    %v2338 = vsel %vm2313, %v2337, %v2336
    %v2339 = vrot.slane %v2297, 7
    %v2340 = vsel %vm1967, %v2339, %v2296
    %v2341 = vrot.slane %v2298, 6
    %v2342 = vsel %vm1971, %v2341, %v2340
    %v2343 = vrot.slane %v2299, 5
    %v2344 = vsel %vm2313, %v2343, %v2342
    %v2345 = vrot.slane %v2301, 7
    %v2346 = vsel %vm1967, %v2345, %v2300
    %v2347 = vrot.slane %v2302, 6
    %v2348 = vsel %vm1971, %v2347, %v2346
    %v2349 = vrot.slane %v2303, 5
    %v2350 = vsel %vm2313, %v2349, %v2348
    %v2351 = vrot.slane %v2305, 7
    %v2352 = vsel %vm1967, %v2351, %v2304
    %v2353 = vrot.slane %v2306, 6
    %v2354 = vsel %vm1971, %v2353, %v2352
    %v2355 = vrot.slane %v2307, 5
    %v2356 = vsel %vm2313, %v2355, %v2354
    %v2357 = vpack.c.b16 %v2314, %v2314
    %v2358 = vpack.c.b16 %v2320, %v2320
    %v2359 = vpack.c.b16 %v2326, %v2326
    %v2360 = vpack.c.b16 %v2332, %v2332
    %v2361 = vpack.c.b16 %v2338, %v2338
    %v2362 = vpack.c.b16 %v2344, %v2344
    %v2363 = vpack.c.b16 %v2350, %v2350
    %v2364 = vpack.c.b16 %v2356, %v2356
    %s2373 = scalar_lea.vmem [#allocation2], 4
    %vm2374 = vsmask.f32 2306
    %vm2375 = vmand %vm1748, %vm2374
    %v2376 = vld [vmem:[%s2373] sm:$0x7]
    %v2377 = vsel %vm2375, %v2357, %v2376
    %2378 = vst [vmem:[%s2373] sm:$0x7] %v2377
    %v2379 = vld [vmem:[%s2373 + $0x4] sm:$0x7]
    %v2380 = vsel %vm2375, %v2358, %v2379
    %2381 = vst [vmem:[%s2373 + $0x4] sm:$0x7] %v2380
    %v2382 = vld [vmem:[%s2373 + $0x8] sm:$0x7]
    %v2383 = vsel %vm2375, %v2359, %v2382
    %2384 = vst [vmem:[%s2373 + $0x8] sm:$0x7] %v2383
    %v2385 = vld [vmem:[%s2373 + $0xc] sm:$0x7]
    %v2386 = vsel %vm2375, %v2360, %v2385
    %2387 = vst [vmem:[%s2373 + $0xc] sm:$0x7] %v2386
    %v2388 = vld [vmem:[%s2373 + $0x14] sm:$0x7]
    %v2389 = vsel %vm2375, %v2361, %v2388
    %2390 = vst [vmem:[%s2373 + $0x14] sm:$0x7] %v2389
    %v2391 = vld [vmem:[%s2373 + $0x18] sm:$0x7]
    %v2392 = vsel %vm2375, %v2362, %v2391
    %2393 = vst [vmem:[%s2373 + $0x18] sm:$0x7] %v2392
    %v2394 = vld [vmem:[%s2373 + $0x1c] sm:$0x7]
    %v2395 = vsel %vm2375, %v2363, %v2394
    %2396 = vst [vmem:[%s2373 + $0x1c] sm:$0x7] %v2395
    %v2397 = vld [vmem:[%s2373 + $0x20] sm:$0x7]
    %v2398 = vsel %vm2375, %v2364, %v2397
    %2399 = vst [vmem:[%s2373 + $0x20] sm:$0x7] %v2398
    %2400 = vst [vmem:[#allocation1] ss:$4 sm:$0xff] %v1977
    %v2401 = vld [vmem:[#allocation1] sm:$0xff]
    %s2403 = scalar_lea.vmem [#allocation1], 32
    %2404 = vst [vmem:[%s2403] ss:$4 sm:$0xff] %v1980
    %v2405 = vld [vmem:[#allocation1 + $0x20] sm:$0xff]
    %2407 = vst [vmem:[#allocation1] ss:$4 sm:$0xff] %v1983
    %v2408 = vld [vmem:[#allocation1] sm:$0xff]
    %2410 = vst [vmem:[%s2403] ss:$4 sm:$0xff] %v1986
    %v2411 = vld [vmem:[#allocation1 + $0x20] sm:$0xff]
    %2413 = vst [vmem:[#allocation1] ss:$4 sm:$0xff] %v2001
    %v2414 = vld [vmem:[#allocation1] sm:$0xff]
    %2416 = vst [vmem:[%s2403] ss:$4 sm:$0xff] %v2004
    %v2417 = vld [vmem:[#allocation1 + $0x20] sm:$0xff]
    %2419 = vst [vmem:[#allocation1] ss:$4 sm:$0xff] %v2007
    %v2420 = vld [vmem:[#allocation1] sm:$0xff]
    %2422 = vst [vmem:[%s2403] ss:$4 sm:$0xff] %v2010
    %v2423 = vld [vmem:[#allocation1 + $0x20] sm:$0xff]
    %2425 = vst [vmem:[#allocation1] ss:$4 sm:$0xff] %v2025
    %v2426 = vld [vmem:[#allocation1] sm:$0xff]
    %2428 = vst [vmem:[%s2403] ss:$4 sm:$0xff] %v2028
    %v2429 = vld [vmem:[#allocation1 + $0x20] sm:$0xff]
    %2431 = vst [vmem:[#allocation1] ss:$4 sm:$0xff] %v2031
    %v2432 = vld [vmem:[#allocation1] sm:$0xff]
    %2434 = vst [vmem:[%s2403] ss:$4 sm:$0xff] %v2034
    %v2435 = vld [vmem:[#allocation1 + $0x20] sm:$0xff]
    %2437 = vst [vmem:[#allocation1] ss:$4 sm:$0xff] %v2049
    %v2438 = vld [vmem:[#allocation1] sm:$0xff]
    %2440 = vst [vmem:[%s2403] ss:$4 sm:$0xff] %v2052
    %v2441 = vld [vmem:[#allocation1 + $0x20] sm:$0xff]
    %2443 = vst [vmem:[#allocation1] ss:$4 sm:$0xff] %v2055
    %v2444 = vld [vmem:[#allocation1] sm:$0xff]
    %2446 = vst [vmem:[%s2403] ss:$4 sm:$0xff] %v2058
    %v2447 = vld [vmem:[#allocation1 + $0x20] sm:$0xff]
    %2449 = vst [vmem:[#allocation1] ss:$4 sm:$0xff] %v2073
    %v2450 = vld [vmem:[#allocation1] sm:$0xff]
    %2452 = vst [vmem:[%s2403] ss:$4 sm:$0xff] %v2076
    %v2453 = vld [vmem:[#allocation1 + $0x20] sm:$0xff]
    %2455 = vst [vmem:[#allocation1] ss:$4 sm:$0xff] %v2079
    %v2456 = vld [vmem:[#allocation1] sm:$0xff]
    %2458 = vst [vmem:[%s2403] ss:$4 sm:$0xff] %v2082
    %v2459 = vld [vmem:[#allocation1 + $0x20] sm:$0xff]
    %2461 = vst [vmem:[#allocation1] ss:$4 sm:$0xff] %v2097
    %v2462 = vld [vmem:[#allocation1] sm:$0xff]
    %2464 = vst [vmem:[%s2403] ss:$4 sm:$0xff] %v2100
    %v2465 = vld [vmem:[#allocation1 + $0x20] sm:$0xff]
    %2467 = vst [vmem:[#allocation1] ss:$4 sm:$0xff] %v2103
    %v2468 = vld [vmem:[#allocation1] sm:$0xff]
    %2470 = vst [vmem:[%s2403] ss:$4 sm:$0xff] %v2106
    %v2471 = vld [vmem:[#allocation1 + $0x20] sm:$0xff]
    %2473 = vst [vmem:[#allocation1] ss:$4 sm:$0xff] %v2121
    %v2474 = vld [vmem:[#allocation1] sm:$0xff]
    %2476 = vst [vmem:[%s2403] ss:$4 sm:$0xff] %v2124
    %v2477 = vld [vmem:[#allocation1 + $0x20] sm:$0xff]
    %2479 = vst [vmem:[#allocation1] ss:$4 sm:$0xff] %v2127
    %v2480 = vld [vmem:[#allocation1] sm:$0xff]
    %2482 = vst [vmem:[%s2403] ss:$4 sm:$0xff] %v2130
    %v2483 = vld [vmem:[#allocation1 + $0x20] sm:$0xff]
    %2485 = vst [vmem:[#allocation1] ss:$4 sm:$0xff] %v2145
    %v2486 = vld [vmem:[#allocation1] sm:$0xff]
    %2488 = vst [vmem:[%s2403] ss:$4 sm:$0xff] %v2148
    %v2489 = vld [vmem:[#allocation1 + $0x20] sm:$0xff]
    %2491 = vst [vmem:[#allocation1] ss:$4 sm:$0xff] %v2151
    %v2492 = vld [vmem:[#allocation1] sm:$0xff]
    %2494 = vst [vmem:[%s2403] ss:$4 sm:$0xff] %v2154
    %v2495 = vld [vmem:[#allocation1 + $0x20] sm:$0xff]
    %v2497 = vunpack.c.l.b16 %v2401
    %v2498 = vunpack.c.l.b16 %v2405
    %v2499 = vunpack.c.l.b16 %v2408
    %v2500 = vunpack.c.l.b16 %v2411
    %v2501 = vunpack.c.l.b16 %v2414
    %v2502 = vunpack.c.l.b16 %v2417
    %v2503 = vunpack.c.l.b16 %v2420
    %v2504 = vunpack.c.l.b16 %v2423
    %v2505 = vunpack.c.l.b16 %v2426
    %v2506 = vunpack.c.l.b16 %v2429
    %v2507 = vunpack.c.l.b16 %v2432
    %v2508 = vunpack.c.l.b16 %v2435
    %v2509 = vunpack.c.l.b16 %v2438
    %v2510 = vunpack.c.l.b16 %v2441
    %v2511 = vunpack.c.l.b16 %v2444
    %v2512 = vunpack.c.l.b16 %v2447
    %v2513 = vunpack.c.l.b16 %v2450
    %v2514 = vunpack.c.l.b16 %v2453
    %v2515 = vunpack.c.l.b16 %v2456
    %v2516 = vunpack.c.l.b16 %v2459
    %v2517 = vunpack.c.l.b16 %v2462
    %v2518 = vunpack.c.l.b16 %v2465
    %v2519 = vunpack.c.l.b16 %v2468
    %v2520 = vunpack.c.l.b16 %v2471
    %v2521 = vunpack.c.l.b16 %v2474
    %v2522 = vunpack.c.l.b16 %v2477
    %v2523 = vunpack.c.l.b16 %v2480
    %v2524 = vunpack.c.l.b16 %v2483
    %v2525 = vunpack.c.l.b16 %v2486
    %v2526 = vunpack.c.l.b16 %v2489
    %v2527 = vunpack.c.l.b16 %v2492
    %v2528 = vunpack.c.l.b16 %v2495
    %v2529 = vrot.slane %v2498, 7
    %v2530 = vsel %vm1963, %v2529, %v2497
    %v2531 = vrot.slane %v2499, 6
    %v2532 = vsel %vm1967, %v2531, %v2530
    %v2533 = vrot.slane %v2500, 5
    %v2534 = vsel %vm1971, %v2533, %v2532
    %v2535 = vrot.slane %v2502, 7
    %v2536 = vsel %vm1963, %v2535, %v2501
    %v2537 = vrot.slane %v2503, 6
    %v2538 = vsel %vm1967, %v2537, %v2536
    %v2539 = vrot.slane %v2504, 5
    %v2540 = vsel %vm1971, %v2539, %v2538
    %v2541 = vrot.slane %v2506, 7
    %v2542 = vsel %vm1963, %v2541, %v2505
    %v2543 = vrot.slane %v2507, 6
    %v2544 = vsel %vm1967, %v2543, %v2542
    %v2545 = vrot.slane %v2508, 5
    %v2546 = vsel %vm1971, %v2545, %v2544
    %v2547 = vrot.slane %v2510, 7
    %v2548 = vsel %vm1963, %v2547, %v2509
    %v2549 = vrot.slane %v2511, 6
    %v2550 = vsel %vm1967, %v2549, %v2548
    %v2551 = vrot.slane %v2512, 5
    %v2552 = vsel %vm1971, %v2551, %v2550
    %v2553 = vrot.slane %v2514, 7
    %v2554 = vsel %vm1963, %v2553, %v2513
    %v2555 = vrot.slane %v2515, 6
    %v2556 = vsel %vm1967, %v2555, %v2554
    %v2557 = vrot.slane %v2516, 5
    %v2558 = vsel %vm1971, %v2557, %v2556
    %v2559 = vrot.slane %v2518, 7
    %v2560 = vsel %vm1963, %v2559, %v2517
    %v2561 = vrot.slane %v2519, 6
    %v2562 = vsel %vm1967, %v2561, %v2560
    %v2563 = vrot.slane %v2520, 5
    %v2564 = vsel %vm1971, %v2563, %v2562
    %v2565 = vrot.slane %v2522, 7
    %v2566 = vsel %vm1963, %v2565, %v2521
    %v2567 = vrot.slane %v2523, 6
    %v2568 = vsel %vm1967, %v2567, %v2566
    %v2569 = vrot.slane %v2524, 5
    %v2570 = vsel %vm1971, %v2569, %v2568
    %v2571 = vrot.slane %v2526, 7
    %v2572 = vsel %vm1963, %v2571, %v2525
    %v2573 = vrot.slane %v2527, 6
    %v2574 = vsel %vm1967, %v2573, %v2572
    %v2575 = vrot.slane %v2528, 5
    %v2576 = vsel %vm1971, %v2575, %v2574
    %v2577 = vpack.c.b16 %v2534, %v2534
    %v2578 = vpack.c.b16 %v2540, %v2540
    %v2579 = vpack.c.b16 %v2546, %v2546
    %v2580 = vpack.c.b16 %v2552, %v2552
    %v2581 = vpack.c.b16 %v2558, %v2558
    %v2582 = vpack.c.b16 %v2564, %v2564
    %v2583 = vpack.c.b16 %v2570, %v2570
    %v2584 = vpack.c.b16 %v2576, %v2576
    %2585 = vrot.lane.b32.xlu0 %v2577, 8
    %v2586 = vpop.permute.xlu0 %2585
    %2587 = vrot.lane.b32.xlu0 %v2578, 8
    %v2588 = vpop.permute.xlu0 %2587
    %2589 = vrot.lane.b32.xlu0 %v2579, 8
    %v2590 = vpop.permute.xlu0 %2589
    %2591 = vrot.lane.b32.xlu0 %v2580, 8
    %v2592 = vpop.permute.xlu0 %2591
    %2593 = vrot.lane.b32.xlu0 %v2581, 8
    %v2594 = vpop.permute.xlu0 %2593
    %2595 = vrot.lane.b32.xlu0 %v2582, 8
    %v2596 = vpop.permute.xlu0 %2595
    %2597 = vrot.lane.b32.xlu0 %v2583, 8
    %v2598 = vpop.permute.xlu0 %2597
    %2599 = vrot.lane.b32.xlu0 %v2584, 8
    %v2600 = vpop.permute.xlu0 %2599
    %vm2609 = vcmask 123968
    %2610 = vst.msk [vmem:[%s2373] sm:$0x3] %vm2609, %v2586
    %2611 = vst.msk [vmem:[%s2373 + $0x4] sm:$0x3] %vm2609, %v2588
    %2612 = vst.msk [vmem:[%s2373 + $0x8] sm:$0x3] %vm2609, %v2590
    %2613 = vst.msk [vmem:[%s2373 + $0xc] sm:$0x3] %vm2609, %v2592
    %2614 = vst.msk [vmem:[%s2373 + $0x14] sm:$0x3] %vm2609, %v2594
    %2615 = vst.msk [vmem:[%s2373 + $0x18] sm:$0x3] %vm2609, %v2596
    %2616 = vst.msk [vmem:[%s2373 + $0x1c] sm:$0x3] %vm2609, %v2598
    %2617 = vst.msk [vmem:[%s2373 + $0x20] sm:$0x3] %vm2609, %v2600
    %2618 = vst [vmem:[#allocation1] ss:$4 sm:$0xff] %v1962
    %v2619 = vld [vmem:[#allocation1] sm:$0xff]
    %s2622 = scalar_lea.vmem [#allocation1], 32
    %2623 = vst [vmem:[%s2622] ss:$4 sm:$0xff] %v1966
    %v2624 = vld [vmem:[#allocation1 + $0x20] sm:$0xff]
    %2627 = vst [vmem:[#allocation1] ss:$4 sm:$0xff] %v1970
    %v2628 = vld [vmem:[#allocation1] sm:$0xff]
    %2631 = vst [vmem:[%s2622] ss:$4 sm:$0xff] %v1974
    %v2632 = vld [vmem:[#allocation1 + $0x20] sm:$0xff]
    %2634 = vst [vmem:[#allocation1] ss:$4 sm:$0xff] %v1989
    %v2635 = vld [vmem:[#allocation1] sm:$0xff]
    %2638 = vst [vmem:[%s2622] ss:$4 sm:$0xff] %v1992
    %v2639 = vld [vmem:[#allocation1 + $0x20] sm:$0xff]
    %2642 = vst [vmem:[#allocation1] ss:$4 sm:$0xff] %v1995
    %v2643 = vld [vmem:[#allocation1] sm:$0xff]
    %2646 = vst [vmem:[%s2622] ss:$4 sm:$0xff] %v1998
    %v2647 = vld [vmem:[#allocation1 + $0x20] sm:$0xff]
    %2649 = vst [vmem:[#allocation1] ss:$4 sm:$0xff] %v2013
    %v2650 = vld [vmem:[#allocation1] sm:$0xff]
    %2653 = vst [vmem:[%s2622] ss:$4 sm:$0xff] %v2016
    %v2654 = vld [vmem:[#allocation1 + $0x20] sm:$0xff]
    %2657 = vst [vmem:[#allocation1] ss:$4 sm:$0xff] %v2019
    %v2658 = vld [vmem:[#allocation1] sm:$0xff]
    %2661 = vst [vmem:[%s2622] ss:$4 sm:$0xff] %v2022
    %v2662 = vld [vmem:[#allocation1 + $0x20] sm:$0xff]
    %2664 = vst [vmem:[#allocation1] ss:$4 sm:$0xff] %v2037
    %v2665 = vld [vmem:[#allocation1] sm:$0xff]
    %2668 = vst [vmem:[%s2622] ss:$4 sm:$0xff] %v2040
    %v2669 = vld [vmem:[#allocation1 + $0x20] sm:$0xff]
    %2672 = vst [vmem:[#allocation1] ss:$4 sm:$0xff] %v2043
    %v2673 = vld [vmem:[#allocation1] sm:$0xff]
    %2676 = vst [vmem:[%s2622] ss:$4 sm:$0xff] %v2046
    %v2677 = vld [vmem:[#allocation1 + $0x20] sm:$0xff]
    %2679 = vst [vmem:[#allocation1] ss:$4 sm:$0xff] %v2061
    %v2680 = vld [vmem:[#allocation1] sm:$0xff]
    %2683 = vst [vmem:[%s2622] ss:$4 sm:$0xff] %v2064
    %v2684 = vld [vmem:[#allocation1 + $0x20] sm:$0xff]
    %2687 = vst [vmem:[#allocation1] ss:$4 sm:$0xff] %v2067
    %v2688 = vld [vmem:[#allocation1] sm:$0xff]
    %2691 = vst [vmem:[%s2622] ss:$4 sm:$0xff] %v2070
    %v2692 = vld [vmem:[#allocation1 + $0x20] sm:$0xff]
    %2694 = vst [vmem:[#allocation1] ss:$4 sm:$0xff] %v2085
    %v2695 = vld [vmem:[#allocation1] sm:$0xff]
    %2698 = vst [vmem:[%s2622] ss:$4 sm:$0xff] %v2088
    %v2699 = vld [vmem:[#allocation1 + $0x20] sm:$0xff]
    %2702 = vst [vmem:[#allocation1] ss:$4 sm:$0xff] %v2091
    %v2703 = vld [vmem:[#allocation1] sm:$0xff]
    %2706 = vst [vmem:[%s2622] ss:$4 sm:$0xff] %v2094
    %v2707 = vld [vmem:[#allocation1 + $0x20] sm:$0xff]
    %2709 = vst [vmem:[#allocation1] ss:$4 sm:$0xff] %v2109
    %v2710 = vld [vmem:[#allocation1] sm:$0xff]
    %2713 = vst [vmem:[%s2622] ss:$4 sm:$0xff] %v2112
    %v2714 = vld [vmem:[#allocation1 + $0x20] sm:$0xff]
    %2717 = vst [vmem:[#allocation1] ss:$4 sm:$0xff] %v2115
    %v2718 = vld [vmem:[#allocation1] sm:$0xff]
    %2721 = vst [vmem:[%s2622] ss:$4 sm:$0xff] %v2118
    %v2722 = vld [vmem:[#allocation1 + $0x20] sm:$0xff]
    %2724 = vst [vmem:[#allocation1] ss:$4 sm:$0xff] %v2133
    %v2725 = vld [vmem:[#allocation1] sm:$0xff]
    %2728 = vst [vmem:[%s2622] ss:$4 sm:$0xff] %v2136
    %v2729 = vld [vmem:[#allocation1 + $0x20] sm:$0xff]
    %2732 = vst [vmem:[#allocation1] ss:$4 sm:$0xff] %v2139
    %v2733 = vld [vmem:[#allocation1] sm:$0xff]
    %2736 = vst [vmem:[%s2622] ss:$4 sm:$0xff] %v2142
    %v2737 = vld [vmem:[#allocation1 + $0x20] sm:$0xff]
    %v2739 = vunpack.c.l.b16 %v2619
    %v2740 = vunpack.c.l.b16 %v2624
    %v2741 = vunpack.c.l.b16 %v2628
    %v2742 = vunpack.c.l.b16 %v2632
    %v2743 = vunpack.c.l.b16 %v2635
    %v2744 = vunpack.c.l.b16 %v2639
    %v2745 = vunpack.c.l.b16 %v2643
    %v2746 = vunpack.c.l.b16 %v2647
    %v2747 = vunpack.c.l.b16 %v2650
    %v2748 = vunpack.c.l.b16 %v2654
    %v2749 = vunpack.c.l.b16 %v2658
    %v2750 = vunpack.c.l.b16 %v2662
    %v2751 = vunpack.c.l.b16 %v2665
    %v2752 = vunpack.c.l.b16 %v2669
    %v2753 = vunpack.c.l.b16 %v2673
    %v2754 = vunpack.c.l.b16 %v2677
    %v2755 = vunpack.c.l.b16 %v2680
    %v2756 = vunpack.c.l.b16 %v2684
    %v2757 = vunpack.c.l.b16 %v2688
    %v2758 = vunpack.c.l.b16 %v2692
    %v2759 = vunpack.c.l.b16 %v2695
    %v2760 = vunpack.c.l.b16 %v2699
    %v2761 = vunpack.c.l.b16 %v2703
    %v2762 = vunpack.c.l.b16 %v2707
    %v2763 = vunpack.c.l.b16 %v2710
    %v2764 = vunpack.c.l.b16 %v2714
    %v2765 = vunpack.c.l.b16 %v2718
    %v2766 = vunpack.c.l.b16 %v2722
    %v2767 = vunpack.c.l.b16 %v2725
    %v2768 = vunpack.c.l.b16 %v2729
    %v2769 = vunpack.c.l.b16 %v2733
    %v2770 = vunpack.c.l.b16 %v2737
    %v2771 = vrot.slane %v2740, 7
    %v2772 = vsel %vm1967, %v2771, %v2739
    %v2773 = vrot.slane %v2741, 6
    %v2774 = vsel %vm1971, %v2773, %v2772
    %v2775 = vrot.slane %v2742, 5
    %v2776 = vsel %vm2313, %v2775, %v2774
    %v2777 = vrot.slane %v2744, 7
    %v2778 = vsel %vm1967, %v2777, %v2743
    %v2779 = vrot.slane %v2745, 6
    %v2780 = vsel %vm1971, %v2779, %v2778
    %v2781 = vrot.slane %v2746, 5
    %v2782 = vsel %vm2313, %v2781, %v2780
    %v2783 = vrot.slane %v2748, 7
    %v2784 = vsel %vm1967, %v2783, %v2747
    %v2785 = vrot.slane %v2749, 6
    %v2786 = vsel %vm1971, %v2785, %v2784
    %v2787 = vrot.slane %v2750, 5
    %v2788 = vsel %vm2313, %v2787, %v2786
    %v2789 = vrot.slane %v2752, 7
    %v2790 = vsel %vm1967, %v2789, %v2751
    %v2791 = vrot.slane %v2753, 6
    %v2792 = vsel %vm1971, %v2791, %v2790
    %v2793 = vrot.slane %v2754, 5
    %v2794 = vsel %vm2313, %v2793, %v2792
    %v2795 = vrot.slane %v2756, 7
    %v2796 = vsel %vm1967, %v2795, %v2755
    %v2797 = vrot.slane %v2757, 6
    %v2798 = vsel %vm1971, %v2797, %v2796
    %v2799 = vrot.slane %v2758, 5
    %v2800 = vsel %vm2313, %v2799, %v2798
    %v2801 = vrot.slane %v2760, 7
    %v2802 = vsel %vm1967, %v2801, %v2759
    %v2803 = vrot.slane %v2761, 6
    %v2804 = vsel %vm1971, %v2803, %v2802
    %v2805 = vrot.slane %v2762, 5
    %v2806 = vsel %vm2313, %v2805, %v2804
    %v2807 = vrot.slane %v2764, 7
    %v2808 = vsel %vm1967, %v2807, %v2763
    %v2809 = vrot.slane %v2765, 6
    %v2810 = vsel %vm1971, %v2809, %v2808
    %v2811 = vrot.slane %v2766, 5
    %v2812 = vsel %vm2313, %v2811, %v2810
    %v2813 = vrot.slane %v2768, 7
    %v2814 = vsel %vm1967, %v2813, %v2767
    %v2815 = vrot.slane %v2769, 6
    %v2816 = vsel %vm1971, %v2815, %v2814
    %v2817 = vrot.slane %v2770, 5
    %v2818 = vsel %vm2313, %v2817, %v2816
    %v2819 = vpack.c.b16 %v2776, %v2776
    %v2820 = vpack.c.b16 %v2782, %v2782
    %v2821 = vpack.c.b16 %v2788, %v2788
    %v2822 = vpack.c.b16 %v2794, %v2794
    %v2823 = vpack.c.b16 %v2800, %v2800
    %v2824 = vpack.c.b16 %v2806, %v2806
    %v2825 = vpack.c.b16 %v2812, %v2812
    %v2826 = vpack.c.b16 %v2818, %v2818
    %2827 = vrot.lane.b32.xlu0 %v2819, 16
    %v2828 = vpop.permute.xlu0 %2827
    %2829 = vrot.lane.b32.xlu0 %v2820, 16
    %v2830 = vpop.permute.xlu0 %2829
    %2831 = vrot.lane.b32.xlu0 %v2821, 16
    %v2832 = vpop.permute.xlu0 %2831
    %2833 = vrot.lane.b32.xlu0 %v2822, 16
    %v2834 = vpop.permute.xlu0 %2833
    %2835 = vrot.lane.b32.xlu0 %v2823, 16
    %v2836 = vpop.permute.xlu0 %2835
    %2837 = vrot.lane.b32.xlu0 %v2824, 16
    %v2838 = vpop.permute.xlu0 %2837
    %2839 = vrot.lane.b32.xlu0 %v2825, 16
    %v2840 = vpop.permute.xlu0 %2839
    %2841 = vrot.lane.b32.xlu0 %v2826, 16
    %v2842 = vpop.permute.xlu0 %2841
    %vm2851 = vmand %vm1831, %vm2374
    %v2852 = vld [vmem:[#allocation2] sm:$0x7]
    %v2853 = vsel %vm2851, %v2828, %v2852
    %2854 = vst [vmem:[#allocation2] sm:$0x7] %v2853
    %v2855 = vld [vmem:[#allocation2 + $0x4] sm:$0x7]
    %v2856 = vsel %vm2851, %v2830, %v2855
    %2857 = vst [vmem:[#allocation2 + $0x4] sm:$0x7] %v2856
    %v2858 = vld [vmem:[#allocation2 + $0x8] sm:$0x7]
    %v2859 = vsel %vm2851, %v2832, %v2858
    %2860 = vst [vmem:[#allocation2 + $0x8] sm:$0x7] %v2859
    %v2861 = vld [vmem:[#allocation2 + $0xc] sm:$0x7]
    %v2862 = vsel %vm2851, %v2834, %v2861
    %2863 = vst [vmem:[#allocation2 + $0xc] sm:$0x7] %v2862
    %v2864 = vld [vmem:[#allocation2 + $0x14] sm:$0x7]
    %v2865 = vsel %vm2851, %v2836, %v2864
    %2866 = vst [vmem:[#allocation2 + $0x14] sm:$0x7] %v2865
    %v2867 = vld [vmem:[#allocation2 + $0x18] sm:$0x7]
    %v2868 = vsel %vm2851, %v2838, %v2867
    %2869 = vst [vmem:[#allocation2 + $0x18] sm:$0x7] %v2868
    %v2870 = vld [vmem:[#allocation2 + $0x1c] sm:$0x7]
    %v2871 = vsel %vm2851, %v2840, %v2870
    %2872 = vst [vmem:[#allocation2 + $0x1c] sm:$0x7] %v2871
    %v2873 = vld [vmem:[#allocation2 + $0x20] sm:$0x7]
    %v2874 = vsel %vm2851, %v2842, %v2873
    %2875 = vst [vmem:[#allocation2 + $0x20] sm:$0x7] %v2874
    %2876 = vst [vmem:[#allocation1] ss:$4 sm:$0xff] %v1962
    %v2877 = vld [vmem:[#allocation1] sm:$0xff]
    %s2879 = scalar_lea.vmem [#allocation1], 32
    %2880 = vst [vmem:[%s2879] ss:$4 sm:$0xff] %v1966
    %v2881 = vld [vmem:[#allocation1 + $0x20] sm:$0xff]
    %2883 = vst [vmem:[#allocation1] ss:$4 sm:$0xff] %v1970
    %v2884 = vld [vmem:[#allocation1] sm:$0xff]
    %2886 = vst [vmem:[%s2879] ss:$4 sm:$0xff] %v1974
    %v2887 = vld [vmem:[#allocation1 + $0x20] sm:$0xff]
    %2889 = vst [vmem:[#allocation1] ss:$4 sm:$0xff] %v1989
    %v2890 = vld [vmem:[#allocation1] sm:$0xff]
    %2892 = vst [vmem:[%s2879] ss:$4 sm:$0xff] %v1992
    %v2893 = vld [vmem:[#allocation1 + $0x20] sm:$0xff]
    %2895 = vst [vmem:[#allocation1] ss:$4 sm:$0xff] %v1995
    %v2896 = vld [vmem:[#allocation1] sm:$0xff]
    %2898 = vst [vmem:[%s2879] ss:$4 sm:$0xff] %v1998
    %v2899 = vld [vmem:[#allocation1 + $0x20] sm:$0xff]
    %2901 = vst [vmem:[#allocation1] ss:$4 sm:$0xff] %v2013
    %v2902 = vld [vmem:[#allocation1] sm:$0xff]
    %2904 = vst [vmem:[%s2879] ss:$4 sm:$0xff] %v2016
    %v2905 = vld [vmem:[#allocation1 + $0x20] sm:$0xff]
    %2907 = vst [vmem:[#allocation1] ss:$4 sm:$0xff] %v2019
    %v2908 = vld [vmem:[#allocation1] sm:$0xff]
    %2910 = vst [vmem:[%s2879] ss:$4 sm:$0xff] %v2022
    %v2911 = vld [vmem:[#allocation1 + $0x20] sm:$0xff]
    %2913 = vst [vmem:[#allocation1] ss:$4 sm:$0xff] %v2037
    %v2914 = vld [vmem:[#allocation1] sm:$0xff]
    %2916 = vst [vmem:[%s2879] ss:$4 sm:$0xff] %v2040
    %v2917 = vld [vmem:[#allocation1 + $0x20] sm:$0xff]
    %2919 = vst [vmem:[#allocation1] ss:$4 sm:$0xff] %v2043
    %v2920 = vld [vmem:[#allocation1] sm:$0xff]
    %2922 = vst [vmem:[%s2879] ss:$4 sm:$0xff] %v2046
    %v2923 = vld [vmem:[#allocation1 + $0x20] sm:$0xff]
    %2925 = vst [vmem:[#allocation1] ss:$4 sm:$0xff] %v2061
    %v2926 = vld [vmem:[#allocation1] sm:$0xff]
    %2928 = vst [vmem:[%s2879] ss:$4 sm:$0xff] %v2064
    %v2929 = vld [vmem:[#allocation1 + $0x20] sm:$0xff]
    %2931 = vst [vmem:[#allocation1] ss:$4 sm:$0xff] %v2067
    %v2932 = vld [vmem:[#allocation1] sm:$0xff]
    %2934 = vst [vmem:[%s2879] ss:$4 sm:$0xff] %v2070
    %v2935 = vld [vmem:[#allocation1 + $0x20] sm:$0xff]
    %2937 = vst [vmem:[#allocation1] ss:$4 sm:$0xff] %v2085
    %v2938 = vld [vmem:[#allocation1] sm:$0xff]
    %2940 = vst [vmem:[%s2879] ss:$4 sm:$0xff] %v2088
    %v2941 = vld [vmem:[#allocation1 + $0x20] sm:$0xff]
    %2943 = vst [vmem:[#allocation1] ss:$4 sm:$0xff] %v2091
    %v2944 = vld [vmem:[#allocation1] sm:$0xff]
    %2946 = vst [vmem:[%s2879] ss:$4 sm:$0xff] %v2094
    %v2947 = vld [vmem:[#allocation1 + $0x20] sm:$0xff]
    %2949 = vst [vmem:[#allocation1] ss:$4 sm:$0xff] %v2109
    %v2950 = vld [vmem:[#allocation1] sm:$0xff]
    %2952 = vst [vmem:[%s2879] ss:$4 sm:$0xff] %v2112
    %v2953 = vld [vmem:[#allocation1 + $0x20] sm:$0xff]
    %2955 = vst [vmem:[#allocation1] ss:$4 sm:$0xff] %v2115
    %v2956 = vld [vmem:[#allocation1] sm:$0xff]
    %2958 = vst [vmem:[%s2879] ss:$4 sm:$0xff] %v2118
    %v2959 = vld [vmem:[#allocation1 + $0x20] sm:$0xff]
    %2961 = vst [vmem:[#allocation1] ss:$4 sm:$0xff] %v2133
    %v2962 = vld [vmem:[#allocation1] sm:$0xff]
    %2964 = vst [vmem:[%s2879] ss:$4 sm:$0xff] %v2136
    %v2965 = vld [vmem:[#allocation1 + $0x20] sm:$0xff]
    %2967 = vst [vmem:[#allocation1] ss:$4 sm:$0xff] %v2139
    %v2968 = vld [vmem:[#allocation1] sm:$0xff]
    %2970 = vst [vmem:[%s2879] ss:$4 sm:$0xff] %v2142
    %v2971 = vld [vmem:[#allocation1 + $0x20] sm:$0xff]
    %v2973 = vunpack.c.l.b16 %v2877
    %v2974 = vunpack.c.l.b16 %v2881
    %v2975 = vunpack.c.l.b16 %v2884
    %v2976 = vunpack.c.l.b16 %v2887
    %v2977 = vunpack.c.l.b16 %v2890
    %v2978 = vunpack.c.l.b16 %v2893
    %v2979 = vunpack.c.l.b16 %v2896
    %v2980 = vunpack.c.l.b16 %v2899
    %v2981 = vunpack.c.l.b16 %v2902
    %v2982 = vunpack.c.l.b16 %v2905
    %v2983 = vunpack.c.l.b16 %v2908
    %v2984 = vunpack.c.l.b16 %v2911
    %v2985 = vunpack.c.l.b16 %v2914
    %v2986 = vunpack.c.l.b16 %v2917
    %v2987 = vunpack.c.l.b16 %v2920
    %v2988 = vunpack.c.l.b16 %v2923
    %v2989 = vunpack.c.l.b16 %v2926
    %v2990 = vunpack.c.l.b16 %v2929
    %v2991 = vunpack.c.l.b16 %v2932
    %v2992 = vunpack.c.l.b16 %v2935
    %v2993 = vunpack.c.l.b16 %v2938
    %v2994 = vunpack.c.l.b16 %v2941
    %v2995 = vunpack.c.l.b16 %v2944
    %v2996 = vunpack.c.l.b16 %v2947
    %v2997 = vunpack.c.l.b16 %v2950
    %v2998 = vunpack.c.l.b16 %v2953
    %v2999 = vunpack.c.l.b16 %v2956
    %v3000 = vunpack.c.l.b16 %v2959
    %v3001 = vunpack.c.l.b16 %v2962
    %v3002 = vunpack.c.l.b16 %v2965
    %v3003 = vunpack.c.l.b16 %v2968
    %v3004 = vunpack.c.l.b16 %v2971
    %v3005 = vrot.slane %v2974, 7
    %v3006 = vsel %vm1963, %v3005, %v2973
    %v3007 = vrot.slane %v2975, 6
    %v3008 = vsel %vm1967, %v3007, %v3006
    %v3009 = vrot.slane %v2976, 5
    %v3010 = vsel %vm1971, %v3009, %v3008
    %v3011 = vrot.slane %v2978, 7
    %v3012 = vsel %vm1963, %v3011, %v2977
    %v3013 = vrot.slane %v2979, 6
    %v3014 = vsel %vm1967, %v3013, %v3012
    %v3015 = vrot.slane %v2980, 5
    %v3016 = vsel %vm1971, %v3015, %v3014
    %v3017 = vrot.slane %v2982, 7
    %v3018 = vsel %vm1963, %v3017, %v2981
    %v3019 = vrot.slane %v2983, 6
    %v3020 = vsel %vm1967, %v3019, %v3018
    %v3021 = vrot.slane %v2984, 5
    %v3022 = vsel %vm1971, %v3021, %v3020
    %v3023 = vrot.slane %v2986, 7
    %v3024 = vsel %vm1963, %v3023, %v2985
    %v3025 = vrot.slane %v2987, 6
    %v3026 = vsel %vm1967, %v3025, %v3024
    %v3027 = vrot.slane %v2988, 5
    %v3028 = vsel %vm1971, %v3027, %v3026
    %v3029 = vrot.slane %v2990, 7
    %v3030 = vsel %vm1963, %v3029, %v2989
    %v3031 = vrot.slane %v2991, 6
    %v3032 = vsel %vm1967, %v3031, %v3030
    %v3033 = vrot.slane %v2992, 5
    %v3034 = vsel %vm1971, %v3033, %v3032
    %v3035 = vrot.slane %v2994, 7
    %v3036 = vsel %vm1963, %v3035, %v2993
    %v3037 = vrot.slane %v2995, 6
    %v3038 = vsel %vm1967, %v3037, %v3036
    %v3039 = vrot.slane %v2996, 5
    %v3040 = vsel %vm1971, %v3039, %v3038
    %v3041 = vrot.slane %v2998, 7
    %v3042 = vsel %vm1963, %v3041, %v2997
    %v3043 = vrot.slane %v2999, 6
    %v3044 = vsel %vm1967, %v3043, %v3042
    %v3045 = vrot.slane %v3000, 5
    %v3046 = vsel %vm1971, %v3045, %v3044
    %v3047 = vrot.slane %v3002, 7
    %v3048 = vsel %vm1963, %v3047, %v3001
    %v3049 = vrot.slane %v3003, 6
    %v3050 = vsel %vm1967, %v3049, %v3048
    %v3051 = vrot.slane %v3004, 5
    %v3052 = vsel %vm1971, %v3051, %v3050
    %v3053 = vpack.c.b16 %v3010, %v3010
    %v3054 = vpack.c.b16 %v3016, %v3016
    %v3055 = vpack.c.b16 %v3022, %v3022
    %v3056 = vpack.c.b16 %v3028, %v3028
    %v3057 = vpack.c.b16 %v3034, %v3034
    %v3058 = vpack.c.b16 %v3040, %v3040
    %v3059 = vpack.c.b16 %v3046, %v3046
    %v3060 = vpack.c.b16 %v3052, %v3052
    %3061 = vrot.lane.b32.xlu0 %v3053, 24
    %v3062 = vpop.permute.xlu0 %3061
    %3063 = vrot.lane.b32.xlu0 %v3054, 24
    %v3064 = vpop.permute.xlu0 %3063
    %3065 = vrot.lane.b32.xlu0 %v3055, 24
    %v3066 = vpop.permute.xlu0 %3065
    %3067 = vrot.lane.b32.xlu0 %v3056, 24
    %v3068 = vpop.permute.xlu0 %3067
    %3069 = vrot.lane.b32.xlu0 %v3057, 24
    %v3070 = vpop.permute.xlu0 %3069
    %3071 = vrot.lane.b32.xlu0 %v3058, 24
    %v3072 = vpop.permute.xlu0 %3071
    %3073 = vrot.lane.b32.xlu0 %v3059, 24
    %v3074 = vpop.permute.xlu0 %3073
    %3075 = vrot.lane.b32.xlu0 %v3060, 24
    %v3076 = vpop.permute.xlu0 %3075
    %vm3085 = vcmask 255168
    %3086 = vst.msk [vmem:[#allocation2] sm:$0x3] %vm3085, %v3062
    %3087 = vst.msk [vmem:[#allocation2 + $0x4] sm:$0x3] %vm3085, %v3064
    %3088 = vst.msk [vmem:[#allocation2 + $0x8] sm:$0x3] %vm3085, %v3066
    %3089 = vst.msk [vmem:[#allocation2 + $0xc] sm:$0x3] %vm3085, %v3068
    %3090 = vst.msk [vmem:[#allocation2 + $0x14] sm:$0x3] %vm3085, %v3070
    %3091 = vst.msk [vmem:[#allocation2 + $0x18] sm:$0x3] %vm3085, %v3072
    %3092 = vst.msk [vmem:[#allocation2 + $0x1c] sm:$0x3] %vm3085, %v3074
    %3093 = vst.msk [vmem:[#allocation2 + $0x20] sm:$0x3] %vm3085, %v3076
    %v3094 = vld [vmem:[#allocation2] sm:$0x3]
    %v3095 = vld [vmem:[#allocation2 + $0x4] sm:$0x3]
    %v3096 = vld [vmem:[#allocation2 + $0x8] sm:$0x3]
    %v3097 = vld [vmem:[#allocation2 + $0xc] sm:$0x3]
    %v3098 = vld [vmem:[#allocation2 + $0x14] sm:$0x3]
    %v3099 = vld [vmem:[#allocation2 + $0x18] sm:$0x3]
    %v3100 = vld [vmem:[#allocation2 + $0x1c] sm:$0x3]
    %v3101 = vld [vmem:[#allocation2 + $0x20] sm:$0x3]
    %v3102 = vld [vmem:[%s4] sm:$0xf]
    %s3103 = scalar_lea.vmem %s4, 4
    %v3104 = vld [vmem:[%s3103] sm:$0xf]
    %3106 = vst [vmem:[#allocation1] ss:$4 sm:$0xff] %v3094
    %s3108 = scalar_lea.vmem [#allocation1], 1
    %3109 = vst [vmem:[%s3108] ss:$4 sm:$0xff] %v3095
    %s3111 = scalar_lea.vmem [#allocation1], 2
    %3112 = vst [vmem:[%s3111] ss:$4 sm:$0xff] %v3096
    %s3114 = scalar_lea.vmem [#allocation1], 3
    %3115 = vst [vmem:[%s3114] ss:$4 sm:$0xff] %v3097
    %s3117 = scalar_lea.vmem [#allocation1], 32
    %3118 = vst [vmem:[%s3117] ss:$4 sm:$0xff] %v3098
    %s3120 = scalar_lea.vmem [#allocation1], 33
    %3121 = vst [vmem:[%s3120] ss:$4 sm:$0xff] %v3099
    %s3123 = scalar_lea.vmem [#allocation1], 34
    %3124 = vst [vmem:[%s3123] ss:$4 sm:$0xff] %v3100
    %s3126 = scalar_lea.vmem [#allocation1], 35
    %3127 = vst [vmem:[%s3126] ss:$4 sm:$0xff] %v3101
    %v3128 = vld.sshfl [vmem:[#allocation1] sm:$0xff pattern:$0x73625140]
    %v3130 = vld.sshfl [vmem:[#allocation1 + $0x20] sm:$0xff pattern:$0x73625140]
    %3132 = vrot.lane.b32.xlu0 %v3128, 120
    %v3133 = vpop.permute.xlu0 %3132
    %3134 = vrot.lane.b32.xlu0 %v3130, 120
    %v3135 = vpop.permute.xlu0 %3134
    %vm3136 = vcmask 64512
    %v3138 = vsel %vm3136, %v3133, 0
    %v3141 = vsel %vm3136, %v3135, 0
    %vm3143 = vcmask 1043456
    %v3145 = vsel %vm3143, %v3104, 0
    %3147 = vmatpush.bf16.msra.mxu0 0
    %3148 = vmatpush.bf16.msra.mxu0 0
    %3149 = vmatpush.bf16.msra.mxu0 0
    %3150 = vmatpush.bf16.msra.mxu0 0
    %3151 = vmatpush.bf16.msra.mxu0 0
    %3152 = vmatpush.bf16.msra.mxu0 0
    %3153 = vmatpush.bf16.msra.mxu0 0
    %3154 = vmatpush.bf16.msra.mxu0 %v3145
    %3155 = vmatmul.bf16.gmra.mxu0 %v3138
    %v3156 = vpop.f32.mrf.mxu0
    %v3157 = vadd.f32 0.0, %v3156
    %v3158 = vpop.f32.mrf.mxu0
    %v3159 = vadd.f32 0.0, %v3158
    %3160 = vmatmul.bf16.gmra.mxu0 %v3141
    %v3161 = vpop.f32.mrf.mxu0
    %v3162 = vadd.f32 0.0, %v3161
    %v3163 = vpop.f32.mrf.mxu0
    %v3164 = vadd.f32 0.0, %v3163
    %3165 = vdwg.mxu0
    %3166 = vst [vmem:[#allocation1] ss:$4 sm:$0xff] %v3094
    %s3167 = scalar_lea.vmem [#allocation1], 1
    %3168 = vst [vmem:[%s3167] ss:$4 sm:$0xff] %v3095
    %s3169 = scalar_lea.vmem [#allocation1], 2
    %3170 = vst [vmem:[%s3169] ss:$4 sm:$0xff] %v3096
    %s3171 = scalar_lea.vmem [#allocation1], 3
    %3172 = vst [vmem:[%s3171] ss:$4 sm:$0xff] %v3097
    %s3173 = scalar_lea.vmem [#allocation1], 32
    %3174 = vst [vmem:[%s3173] ss:$4 sm:$0xff] %v3098
    %s3175 = scalar_lea.vmem [#allocation1], 33
    %3176 = vst [vmem:[%s3175] ss:$4 sm:$0xff] %v3099
    %s3177 = scalar_lea.vmem [#allocation1], 34
    %3178 = vst [vmem:[%s3177] ss:$4 sm:$0xff] %v3100
    %s3179 = scalar_lea.vmem [#allocation1], 35
    %3180 = vst [vmem:[%s3179] ss:$4 sm:$0xff] %v3101
    %v3181 = vld.sshfl [vmem:[#allocation1] sm:$0xff pattern:$0x73625140]
    %v3182 = vld.sshfl [vmem:[#allocation1 + $0x20] sm:$0xff pattern:$0x73625140]
    %v3183 = vsel %vm3136, %v3181, 0
    %v3185 = vsel %vm3136, %v3182, 0
    %v3188 = vsel %vm3143, %v3102, 0
    %3190 = vmatpush.bf16.msra.mxu0 0
    %3191 = vmatpush.bf16.msra.mxu0 0
    %3192 = vmatpush.bf16.msra.mxu0 0
    %3193 = vmatpush.bf16.msra.mxu0 0
    %3194 = vmatpush.bf16.msra.mxu0 0
    %3195 = vmatpush.bf16.msra.mxu0 0
    %3196 = vmatpush.bf16.msra.mxu0 0
    %3197 = vmatpush.bf16.msra.mxu0 %v3188
    %3198 = vmatmul.bf16.gmra.mxu0 %v3183
    %v3199 = vpop.f32.mrf.mxu0
    %v3200 = vadd.f32 %v3157, %v3199
    %v3201 = vpop.f32.mrf.mxu0
    %v3202 = vadd.f32 %v3159, %v3201
    %3203 = vmatmul.bf16.gmra.mxu0 %v3185
    %v3204 = vpop.f32.mrf.mxu0
    %v3205 = vadd.f32 %v3162, %v3204
    %v3206 = vpop.f32.mrf.mxu0
    %v3207 = vadd.f32 %v3164, %v3206
    %3208 = vdwg.mxu0
    %v3209 = vld [vmem:[#allocation2] sm:$0x7]
    %v3210 = vld [vmem:[#allocation2 + $0x4] sm:$0x7]
    %v3211 = vld [vmem:[#allocation2 + $0x8] sm:$0x7]
    %v3212 = vld [vmem:[#allocation2 + $0xc] sm:$0x7]
    %v3213 = vld [vmem:[#allocation2 + $0x14] sm:$0x7]
    %v3214 = vld [vmem:[#allocation2 + $0x18] sm:$0x7]
    %v3215 = vld [vmem:[#allocation2 + $0x1c] sm:$0x7]
    %v3216 = vld [vmem:[#allocation2 + $0x20] sm:$0x7]
    %v3225 = vrot.slane %v3209, 2
    %v3226 = vrot.slane %v3210, 2
    %v3227 = vrot.slane %v3211, 2
    %v3228 = vrot.slane %v3212, 2
    %v3229 = vrot.slane %v3213, 2
    %v3230 = vrot.slane %v3214, 2
    %v3231 = vrot.slane %v3215, 2
    %v3232 = vrot.slane %v3216, 2
    %v3235 = vsel %vm134, %v3209, %v3225
    %vm3236 = vcmask 1043458
    %v3237 = vsel %vm3236, %v3209, %v3225
    %v3239 = vrot.slane %v3237, 2
    %v3242 = vsel %vm134, %v3210, %v3226
    %v3243 = vsel %vm3236, %v3210, %v3226
    %v3245 = vrot.slane %v3243, 2
    %v3248 = vsel %vm134, %v3211, %v3227
    %v3249 = vsel %vm3236, %v3211, %v3227
    %v3251 = vrot.slane %v3249, 2
    %v3254 = vsel %vm134, %v3212, %v3228
    %v3255 = vsel %vm3236, %v3212, %v3228
    %v3257 = vrot.slane %v3255, 2
    %v3260 = vsel %vm134, %v3213, %v3229
    %v3261 = vsel %vm3236, %v3213, %v3229
    %v3263 = vrot.slane %v3261, 2
    %v3266 = vsel %vm134, %v3214, %v3230
    %v3267 = vsel %vm3236, %v3214, %v3230
    %v3269 = vrot.slane %v3267, 2
    %v3272 = vsel %vm134, %v3215, %v3231
    %v3273 = vsel %vm3236, %v3215, %v3231
    %v3275 = vrot.slane %v3273, 2
    %v3278 = vsel %vm134, %v3216, %v3232
    %v3279 = vsel %vm3236, %v3216, %v3232
    %v3281 = vrot.slane %v3279, 2
    %vm3282 = vsmask.f32 1280
    %vm3283 = vsmask.f32 3336
    %vm3284 = vmor %vm3282, %vm3283
    %vm3285 = vsmask.f32 5392
    %vm3286 = vmor %vm3284, %vm3285
    %vm3287 = vsmask.f32 7448
    %vm3288 = vmor %vm3286, %vm3287
    %v3289 = vshrl.u32 %v3235, 16
    %v3291 = vrot.slane %v3289, 6
    %v3292 = vshll.u32 %v3235, 16
    %v3294 = vrot.slane %v3292, 7
    %v3295 = vor.u32 %v3291, %v3294
    %v3296 = vrot.slane %v3295, 2
    %v3298 = vshll.u32 %v3239, 16
    %v3300 = vrot.slane %v3298, 7
    %v3301 = vsel %vm3288, %v3296, %v3300
    %v3302 = vshrl.u32 %v3242, 16
    %v3304 = vrot.slane %v3302, 6
    %v3305 = vshll.u32 %v3242, 16
    %v3307 = vrot.slane %v3305, 7
    %v3308 = vor.u32 %v3304, %v3307
    %v3309 = vrot.slane %v3308, 2
    %v3311 = vshll.u32 %v3245, 16
    %v3313 = vrot.slane %v3311, 7
    %v3314 = vsel %vm3288, %v3309, %v3313
    %v3315 = vshrl.u32 %v3248, 16
    %v3317 = vrot.slane %v3315, 6
    %v3318 = vshll.u32 %v3248, 16
    %v3320 = vrot.slane %v3318, 7
    %v3321 = vor.u32 %v3317, %v3320
    %v3322 = vrot.slane %v3321, 2
    %v3324 = vshll.u32 %v3251, 16
    %v3326 = vrot.slane %v3324, 7
    %v3327 = vsel %vm3288, %v3322, %v3326
    %v3328 = vshrl.u32 %v3254, 16
    %v3330 = vrot.slane %v3328, 6
    %v3331 = vshll.u32 %v3254, 16
    %v3333 = vrot.slane %v3331, 7
    %v3334 = vor.u32 %v3330, %v3333
    %v3335 = vrot.slane %v3334, 2
    %v3337 = vshll.u32 %v3257, 16
    %v3339 = vrot.slane %v3337, 7
    %v3340 = vsel %vm3288, %v3335, %v3339
    %v3341 = vshrl.u32 %v3260, 16
    %v3343 = vrot.slane %v3341, 6
    %v3344 = vshll.u32 %v3260, 16
    %v3346 = vrot.slane %v3344, 7
    %v3347 = vor.u32 %v3343, %v3346
    %v3348 = vrot.slane %v3347, 2
    %v3350 = vshll.u32 %v3263, 16
    %v3352 = vrot.slane %v3350, 7
    %v3353 = vsel %vm3288, %v3348, %v3352
    %v3354 = vshrl.u32 %v3266, 16
    %v3356 = vrot.slane %v3354, 6
    %v3357 = vshll.u32 %v3266, 16
    %v3359 = vrot.slane %v3357, 7
    %v3360 = vor.u32 %v3356, %v3359
    %v3361 = vrot.slane %v3360, 2
    %v3363 = vshll.u32 %v3269, 16
    %v3365 = vrot.slane %v3363, 7
    %v3366 = vsel %vm3288, %v3361, %v3365
    %v3367 = vshrl.u32 %v3272, 16
    %v3369 = vrot.slane %v3367, 6
    %v3370 = vshll.u32 %v3272, 16
    %v3372 = vrot.slane %v3370, 7
    %v3373 = vor.u32 %v3369, %v3372
    %v3374 = vrot.slane %v3373, 2
    %v3376 = vshll.u32 %v3275, 16
    %v3378 = vrot.slane %v3376, 7
    %v3379 = vsel %vm3288, %v3374, %v3378
    %v3380 = vshrl.u32 %v3278, 16
    %v3382 = vrot.slane %v3380, 6
    %v3383 = vshll.u32 %v3278, 16
    %v3385 = vrot.slane %v3383, 7
    %v3386 = vor.u32 %v3382, %v3385
    %v3387 = vrot.slane %v3386, 2
    %v3389 = vshll.u32 %v3281, 16
    %v3391 = vrot.slane %v3389, 7
    %v3392 = vsel %vm3288, %v3387, %v3391
    %s3393 = scalar_lea.vmem %s4, 8
    %v3394 = vld [vmem:[%s3393] sm:$0xf]
    %3396 = vst [vmem:[#allocation1] ss:$4 sm:$0xff] %v3301
    %s3398 = scalar_lea.vmem [#allocation1], 1
    %3399 = vst [vmem:[%s3398] ss:$4 sm:$0xff] %v3314
    %s3401 = scalar_lea.vmem [#allocation1], 2
    %3402 = vst [vmem:[%s3401] ss:$4 sm:$0xff] %v3327
    %s3404 = scalar_lea.vmem [#allocation1], 3
    %3405 = vst [vmem:[%s3404] ss:$4 sm:$0xff] %v3340
    %s3407 = scalar_lea.vmem [#allocation1], 32
    %3408 = vst [vmem:[%s3407] ss:$4 sm:$0xff] %v3353
    %s3410 = scalar_lea.vmem [#allocation1], 33
    %3411 = vst [vmem:[%s3410] ss:$4 sm:$0xff] %v3366
    %s3413 = scalar_lea.vmem [#allocation1], 34
    %3414 = vst [vmem:[%s3413] ss:$4 sm:$0xff] %v3379
    %s3416 = scalar_lea.vmem [#allocation1], 35
    %3417 = vst [vmem:[%s3416] ss:$4 sm:$0xff] %v3392
    %v3418 = vld.sshfl [vmem:[#allocation1] sm:$0xff pattern:$0x73625140]
    %v3419 = vld.sshfl [vmem:[#allocation1 + $0x20] sm:$0xff pattern:$0x73625140]
    %v3420 = vsel %vm3136, %v3418, 0
    %v3422 = vsel %vm3136, %v3419, 0
    %v3425 = vsel %vm3143, %v3394, 0
    %3427 = vmatpush.bf16.msra.mxu0 0
    %3428 = vmatpush.bf16.msra.mxu0 0
    %3429 = vmatpush.bf16.msra.mxu0 0
    %3430 = vmatpush.bf16.msra.mxu0 0
    %3431 = vmatpush.bf16.msra.mxu0 0
    %3432 = vmatpush.bf16.msra.mxu0 0
    %3433 = vmatpush.bf16.msra.mxu0 0
    %3434 = vmatpush.bf16.msra.mxu0 %v3425
    %3435 = vmatmul.bf16.gmra.mxu0 %v3420
    %v3436 = vpop.f32.mrf.mxu0
    %v3437 = vadd.f32 0.0, %v3436
    %v3438 = vpop.f32.mrf.mxu0
    %v3439 = vadd.f32 0.0, %v3438
    %3440 = vmatmul.bf16.gmra.mxu0 %v3422
    %v3441 = vpop.f32.mrf.mxu0
    %v3442 = vadd.f32 0.0, %v3441
    %v3443 = vpop.f32.mrf.mxu0
    %v3444 = vadd.f32 0.0, %v3443
    %3445 = vdwg.mxu0
    %v3446 = vadd.f32 %v3200, %v3437
    %v3447 = vadd.f32 %v3202, %v3439
    %v3448 = vadd.f32 %v3205, %v3442
    %v3449 = vadd.f32 %v3207, %v3444
    %v3450 = vld [vmem:[#allocation2] sm:$0x3]
    %v3451 = vld [vmem:[#allocation2 + $0x4] sm:$0x3]
    %v3452 = vld [vmem:[#allocation2 + $0x8] sm:$0x3]
    %v3453 = vld [vmem:[#allocation2 + $0xc] sm:$0x3]
    %v3454 = vld [vmem:[#allocation2 + $0x14] sm:$0x3]
    %v3455 = vld [vmem:[#allocation2 + $0x18] sm:$0x3]
    %v3456 = vld [vmem:[#allocation2 + $0x1c] sm:$0x3]
    %v3457 = vld [vmem:[#allocation2 + $0x20] sm:$0x3]
    %s3458 = scalar_lea.vmem %s4, 12
    %v3459 = vld [vmem:[%s3458] sm:$0xf]
    %3461 = vst [vmem:[#allocation1] ss:$4 sm:$0xff] %v3450
    %s3463 = scalar_lea.vmem [#allocation1], 1
    %3464 = vst [vmem:[%s3463] ss:$4 sm:$0xff] %v3451
    %s3466 = scalar_lea.vmem [#allocation1], 2
    %3467 = vst [vmem:[%s3466] ss:$4 sm:$0xff] %v3452
    %s3469 = scalar_lea.vmem [#allocation1], 3
    %3470 = vst [vmem:[%s3469] ss:$4 sm:$0xff] %v3453
    %s3472 = scalar_lea.vmem [#allocation1], 32
    %3473 = vst [vmem:[%s3472] ss:$4 sm:$0xff] %v3454
    %s3475 = scalar_lea.vmem [#allocation1], 33
    %3476 = vst [vmem:[%s3475] ss:$4 sm:$0xff] %v3455
    %s3478 = scalar_lea.vmem [#allocation1], 34
    %3479 = vst [vmem:[%s3478] ss:$4 sm:$0xff] %v3456
    %s3481 = scalar_lea.vmem [#allocation1], 35
    %3482 = vst [vmem:[%s3481] ss:$4 sm:$0xff] %v3457
    %v3483 = vld.sshfl [vmem:[#allocation1] sm:$0xff pattern:$0x73625140]
    %v3485 = vld.sshfl [vmem:[#allocation1 + $0x20] sm:$0xff pattern:$0x73625140]
    %3487 = vrot.lane.b32.xlu0 %v3483, 112
    %v3488 = vpop.permute.xlu0 %3487
    %3489 = vrot.lane.b32.xlu0 %v3485, 112
    %v3490 = vpop.permute.xlu0 %3489
    %v3492 = vsel %vm3136, %v3488, 0
    %v3495 = vsel %vm3136, %v3490, 0
    %v3498 = vsel %vm3143, %v3459, 0
    %3500 = vmatpush.bf16.msra.mxu0 0
    %3501 = vmatpush.bf16.msra.mxu0 0
    %3502 = vmatpush.bf16.msra.mxu0 0
    %3503 = vmatpush.bf16.msra.mxu0 0
    %3504 = vmatpush.bf16.msra.mxu0 0
    %3505 = vmatpush.bf16.msra.mxu0 0
    %3506 = vmatpush.bf16.msra.mxu0 0
    %3507 = vmatpush.bf16.msra.mxu0 %v3498
    %3508 = vmatmul.bf16.gmra.mxu0 %v3492
    %v3509 = vpop.f32.mrf.mxu0
    %v3510 = vadd.f32 0.0, %v3509
    %v3511 = vpop.f32.mrf.mxu0
    %v3512 = vadd.f32 0.0, %v3511
    %3513 = vmatmul.bf16.gmra.mxu0 %v3495
    %v3514 = vpop.f32.mrf.mxu0
    %v3515 = vadd.f32 0.0, %v3514
    %v3516 = vpop.f32.mrf.mxu0
    %v3517 = vadd.f32 0.0, %v3516
    %3518 = vdwg.mxu0
    %v3519 = vadd.f32 %v3446, %v3510
    %v3520 = vadd.f32 %v3447, %v3512
    %v3521 = vadd.f32 %v3448, %v3515
    %v3522 = vadd.f32 %v3449, %v3517
    %v3523 = vld [vmem:[#allocation2] sm:$0x3]
    %v3524 = vld [vmem:[#allocation2 + $0x4] sm:$0x3]
    %v3525 = vld [vmem:[#allocation2 + $0x8] sm:$0x3]
    %v3526 = vld [vmem:[#allocation2 + $0xc] sm:$0x3]
    %v3527 = vld [vmem:[#allocation2 + $0x14] sm:$0x3]
    %v3528 = vld [vmem:[#allocation2 + $0x18] sm:$0x3]
    %v3529 = vld [vmem:[#allocation2 + $0x1c] sm:$0x3]
    %v3530 = vld [vmem:[#allocation2 + $0x20] sm:$0x3]
    %s3531 = scalar_lea.vmem %s4, 16
    %v3532 = vld [vmem:[%s3531] sm:$0xf]
    %3534 = vst [vmem:[#allocation1] ss:$4 sm:$0xff] %v3523
    %s3536 = scalar_lea.vmem [#allocation1], 1
    %3537 = vst [vmem:[%s3536] ss:$4 sm:$0xff] %v3524
    %s3539 = scalar_lea.vmem [#allocation1], 2
    %3540 = vst [vmem:[%s3539] ss:$4 sm:$0xff] %v3525
    %s3542 = scalar_lea.vmem [#allocation1], 3
    %3543 = vst [vmem:[%s3542] ss:$4 sm:$0xff] %v3526
    %s3545 = scalar_lea.vmem [#allocation1], 32
    %3546 = vst [vmem:[%s3545] ss:$4 sm:$0xff] %v3527
    %s3548 = scalar_lea.vmem [#allocation1], 33
    %3549 = vst [vmem:[%s3548] ss:$4 sm:$0xff] %v3528
    %s3551 = scalar_lea.vmem [#allocation1], 34
    %3552 = vst [vmem:[%s3551] ss:$4 sm:$0xff] %v3529
    %s3554 = scalar_lea.vmem [#allocation1], 35
    %3555 = vst [vmem:[%s3554] ss:$4 sm:$0xff] %v3530
    %v3556 = vld.sshfl [vmem:[#allocation1] sm:$0xff pattern:$0x73625140]
    %v3558 = vld.sshfl [vmem:[#allocation1 + $0x20] sm:$0xff pattern:$0x73625140]
    %3560 = vrot.lane.b32.xlu0 %v3556, 104
    %v3561 = vpop.permute.xlu0 %3560
    %3562 = vrot.lane.b32.xlu0 %v3558, 104
    %v3563 = vpop.permute.xlu0 %3562
    %v3565 = vsel %vm3136, %v3561, 0
    %v3568 = vsel %vm3136, %v3563, 0
    %v3571 = vsel %vm3143, %v3532, 0
    %3573 = vmatpush.bf16.msra.mxu0 0
    %3574 = vmatpush.bf16.msra.mxu0 0
    %3575 = vmatpush.bf16.msra.mxu0 0
    %3576 = vmatpush.bf16.msra.mxu0 0
    %3577 = vmatpush.bf16.msra.mxu0 0
    %3578 = vmatpush.bf16.msra.mxu0 0
    %3579 = vmatpush.bf16.msra.mxu0 0
    %3580 = vmatpush.bf16.msra.mxu0 %v3571
    %3581 = vmatmul.bf16.gmra.mxu0 %v3565
    %v3582 = vpop.f32.mrf.mxu0
    %v3583 = vadd.f32 0.0, %v3582
    %v3584 = vpop.f32.mrf.mxu0
    %v3585 = vadd.f32 0.0, %v3584
    %3586 = vmatmul.bf16.gmra.mxu0 %v3568
    %v3587 = vpop.f32.mrf.mxu0
    %v3588 = vadd.f32 0.0, %v3587
    %v3589 = vpop.f32.mrf.mxu0
    %v3590 = vadd.f32 0.0, %v3589
    %3591 = vdwg.mxu0
    %v3592 = vadd.f32 %v3519, %v3583
    %v3593 = vadd.f32 %v3520, %v3585
    %v3594 = vadd.f32 %v3521, %v3588
    %v3595 = vadd.f32 %v3522, %v3590
    %v3596 = vld [vmem:[#allocation2] sm:$0x7]
    %v3597 = vld [vmem:[#allocation2 + $0x4] sm:$0x7]
    %v3598 = vld [vmem:[#allocation2 + $0x8] sm:$0x7]
    %v3599 = vld [vmem:[#allocation2 + $0xc] sm:$0x7]
    %v3600 = vld [vmem:[#allocation2 + $0x14] sm:$0x7]
    %v3601 = vld [vmem:[#allocation2 + $0x18] sm:$0x7]
    %v3602 = vld [vmem:[#allocation2 + $0x1c] sm:$0x7]
    %v3603 = vld [vmem:[#allocation2 + $0x20] sm:$0x7]
    %v3612 = vrot.slane %v3596, 2
    %v3613 = vrot.slane %v3597, 2
    %v3614 = vrot.slane %v3598, 2
    %v3615 = vrot.slane %v3599, 2
    %v3616 = vrot.slane %v3600, 2
    %v3617 = vrot.slane %v3601, 2
    %v3618 = vrot.slane %v3602, 2
    %v3619 = vrot.slane %v3603, 2
    %v3622 = vsel %vm134, %v3596, %v3612
    %v3623 = vsel %vm3236, %v3596, %v3612
    %v3625 = vrot.slane %v3623, 2
    %v3628 = vsel %vm134, %v3597, %v3613
    %v3629 = vsel %vm3236, %v3597, %v3613
    %v3631 = vrot.slane %v3629, 2
    %v3634 = vsel %vm134, %v3598, %v3614
    %v3635 = vsel %vm3236, %v3598, %v3614
    %v3637 = vrot.slane %v3635, 2
    %v3640 = vsel %vm134, %v3599, %v3615
    %v3641 = vsel %vm3236, %v3599, %v3615
    %v3643 = vrot.slane %v3641, 2
    %v3646 = vsel %vm134, %v3600, %v3616
    %v3647 = vsel %vm3236, %v3600, %v3616
    %v3649 = vrot.slane %v3647, 2
    %v3652 = vsel %vm134, %v3601, %v3617
    %v3653 = vsel %vm3236, %v3601, %v3617
    %v3655 = vrot.slane %v3653, 2
    %v3658 = vsel %vm134, %v3602, %v3618
    %v3659 = vsel %vm3236, %v3602, %v3618
    %v3661 = vrot.slane %v3659, 2
    %v3664 = vsel %vm134, %v3603, %v3619
    %v3665 = vsel %vm3236, %v3603, %v3619
    %v3667 = vrot.slane %v3665, 2
    %v3668 = vshrl.u32 %v3622, 16
    %v3670 = vrot.slane %v3668, 6
    %v3671 = vshll.u32 %v3622, 16
    %v3673 = vrot.slane %v3671, 7
    %v3674 = vor.u32 %v3670, %v3673
    %v3675 = vrot.slane %v3674, 2
    %v3677 = vshll.u32 %v3625, 16
    %v3679 = vrot.slane %v3677, 7
    %v3680 = vsel %vm3288, %v3675, %v3679
    %v3681 = vshrl.u32 %v3628, 16
    %v3683 = vrot.slane %v3681, 6
    %v3684 = vshll.u32 %v3628, 16
    %v3686 = vrot.slane %v3684, 7
    %v3687 = vor.u32 %v3683, %v3686
    %v3688 = vrot.slane %v3687, 2
    %v3690 = vshll.u32 %v3631, 16
    %v3692 = vrot.slane %v3690, 7
    %v3693 = vsel %vm3288, %v3688, %v3692
    %v3694 = vshrl.u32 %v3634, 16
    %v3696 = vrot.slane %v3694, 6
    %v3697 = vshll.u32 %v3634, 16
    %v3699 = vrot.slane %v3697, 7
    %v3700 = vor.u32 %v3696, %v3699
    %v3701 = vrot.slane %v3700, 2
    %v3703 = vshll.u32 %v3637, 16
    %v3705 = vrot.slane %v3703, 7
    %v3706 = vsel %vm3288, %v3701, %v3705
    %v3707 = vshrl.u32 %v3640, 16
    %v3709 = vrot.slane %v3707, 6
    %v3710 = vshll.u32 %v3640, 16
    %v3712 = vrot.slane %v3710, 7
    %v3713 = vor.u32 %v3709, %v3712
    %v3714 = vrot.slane %v3713, 2
    %v3716 = vshll.u32 %v3643, 16
    %v3718 = vrot.slane %v3716, 7
    %v3719 = vsel %vm3288, %v3714, %v3718
    %v3720 = vshrl.u32 %v3646, 16
    %v3722 = vrot.slane %v3720, 6
    %v3723 = vshll.u32 %v3646, 16
    %v3725 = vrot.slane %v3723, 7
    %v3726 = vor.u32 %v3722, %v3725
    %v3727 = vrot.slane %v3726, 2
    %v3729 = vshll.u32 %v3649, 16
    %v3731 = vrot.slane %v3729, 7
    %v3732 = vsel %vm3288, %v3727, %v3731
    %v3733 = vshrl.u32 %v3652, 16
    %v3735 = vrot.slane %v3733, 6
    %v3736 = vshll.u32 %v3652, 16
    %v3738 = vrot.slane %v3736, 7
    %v3739 = vor.u32 %v3735, %v3738
    %v3740 = vrot.slane %v3739, 2
    %v3742 = vshll.u32 %v3655, 16
    %v3744 = vrot.slane %v3742, 7
    %v3745 = vsel %vm3288, %v3740, %v3744
    %v3746 = vshrl.u32 %v3658, 16
    %v3748 = vrot.slane %v3746, 6
    %v3749 = vshll.u32 %v3658, 16
    %v3751 = vrot.slane %v3749, 7
    %v3752 = vor.u32 %v3748, %v3751
    %v3753 = vrot.slane %v3752, 2
    %v3755 = vshll.u32 %v3661, 16
    %v3757 = vrot.slane %v3755, 7
    %v3758 = vsel %vm3288, %v3753, %v3757
    %v3759 = vshrl.u32 %v3664, 16
    %v3761 = vrot.slane %v3759, 6
    %v3762 = vshll.u32 %v3664, 16
    %v3764 = vrot.slane %v3762, 7
    %v3765 = vor.u32 %v3761, %v3764
    %v3766 = vrot.slane %v3765, 2
    %v3768 = vshll.u32 %v3667, 16
    %v3770 = vrot.slane %v3768, 7
    %v3771 = vsel %vm3288, %v3766, %v3770
    %s3772 = scalar_lea.vmem %s4, 20
    %v3773 = vld [vmem:[%s3772] sm:$0xf]
    %3775 = vst [vmem:[#allocation1] ss:$4 sm:$0xff] %v3680
    %s3777 = scalar_lea.vmem [#allocation1], 1
    %3778 = vst [vmem:[%s3777] ss:$4 sm:$0xff] %v3693
    %s3780 = scalar_lea.vmem [#allocation1], 2
    %3781 = vst [vmem:[%s3780] ss:$4 sm:$0xff] %v3706
    %s3783 = scalar_lea.vmem [#allocation1], 3
    %3784 = vst [vmem:[%s3783] ss:$4 sm:$0xff] %v3719
    %s3786 = scalar_lea.vmem [#allocation1], 32
    %3787 = vst [vmem:[%s3786] ss:$4 sm:$0xff] %v3732
    %s3789 = scalar_lea.vmem [#allocation1], 33
    %3790 = vst [vmem:[%s3789] ss:$4 sm:$0xff] %v3745
    %s3792 = scalar_lea.vmem [#allocation1], 34
    %3793 = vst [vmem:[%s3792] ss:$4 sm:$0xff] %v3758
    %s3795 = scalar_lea.vmem [#allocation1], 35
    %3796 = vst [vmem:[%s3795] ss:$4 sm:$0xff] %v3771
    %v3797 = vld.sshfl [vmem:[#allocation1] sm:$0xff pattern:$0x73625140]
    %v3799 = vld.sshfl [vmem:[#allocation1 + $0x20] sm:$0xff pattern:$0x73625140]
    %3801 = vrot.lane.b32.xlu0 %v3797, 112
    %v3802 = vpop.permute.xlu0 %3801
    %3803 = vrot.lane.b32.xlu0 %v3799, 112
    %v3804 = vpop.permute.xlu0 %3803
    %v3806 = vsel %vm3136, %v3802, 0
    %v3809 = vsel %vm3136, %v3804, 0
    %v3812 = vsel %vm3143, %v3773, 0
    %3814 = vmatpush.bf16.msra.mxu0 0
    %3815 = vmatpush.bf16.msra.mxu0 0
    %3816 = vmatpush.bf16.msra.mxu0 0
    %3817 = vmatpush.bf16.msra.mxu0 0
    %3818 = vmatpush.bf16.msra.mxu0 0
    %3819 = vmatpush.bf16.msra.mxu0 0
    %3820 = vmatpush.bf16.msra.mxu0 0
    %3821 = vmatpush.bf16.msra.mxu0 %v3812
    %3822 = vmatmul.bf16.gmra.mxu0 %v3806
    %v3823 = vpop.f32.mrf.mxu0
    %v3824 = vadd.f32 0.0, %v3823
    %v3825 = vpop.f32.mrf.mxu0
    %v3826 = vadd.f32 0.0, %v3825
    %3827 = vmatmul.bf16.gmra.mxu0 %v3809
    %v3828 = vpop.f32.mrf.mxu0
    %v3829 = vadd.f32 0.0, %v3828
    %v3830 = vpop.f32.mrf.mxu0
    %v3831 = vadd.f32 0.0, %v3830
    %3832 = vdwg.mxu0
    %v3833 = vadd.f32 %v3592, %v3824
    %v3834 = vadd.f32 %v3593, %v3826
    %v3835 = vadd.f32 %v3594, %v3829
    %v3836 = vadd.f32 %v3595, %v3831
    %v3837 = vld [vmem:[%s2373] sm:$0x3]
    %v3838 = vld [vmem:[%s2373 + $0x4] sm:$0x3]
    %v3839 = vld [vmem:[%s2373 + $0x8] sm:$0x3]
    %v3840 = vld [vmem:[%s2373 + $0xc] sm:$0x3]
    %v3841 = vld [vmem:[%s2373 + $0x14] sm:$0x3]
    %v3842 = vld [vmem:[%s2373 + $0x18] sm:$0x3]
    %v3843 = vld [vmem:[%s2373 + $0x1c] sm:$0x3]
    %v3844 = vld [vmem:[%s2373 + $0x20] sm:$0x3]
    %s3845 = scalar_lea.vmem %s4, 24
    %v3846 = vld [vmem:[%s3845] sm:$0xf]
    %3848 = vst [vmem:[#allocation1] ss:$4 sm:$0xff] %v3837
    %s3850 = scalar_lea.vmem [#allocation1], 1
    %3851 = vst [vmem:[%s3850] ss:$4 sm:$0xff] %v3838
    %s3853 = scalar_lea.vmem [#allocation1], 2
    %3854 = vst [vmem:[%s3853] ss:$4 sm:$0xff] %v3839
    %s3856 = scalar_lea.vmem [#allocation1], 3
    %3857 = vst [vmem:[%s3856] ss:$4 sm:$0xff] %v3840
    %s3859 = scalar_lea.vmem [#allocation1], 32
    %3860 = vst [vmem:[%s3859] ss:$4 sm:$0xff] %v3841
    %s3862 = scalar_lea.vmem [#allocation1], 33
    %3863 = vst [vmem:[%s3862] ss:$4 sm:$0xff] %v3842
    %s3865 = scalar_lea.vmem [#allocation1], 34
    %3866 = vst [vmem:[%s3865] ss:$4 sm:$0xff] %v3843
    %s3868 = scalar_lea.vmem [#allocation1], 35
    %3869 = vst [vmem:[%s3868] ss:$4 sm:$0xff] %v3844
    %v3870 = vld.sshfl [vmem:[#allocation1] sm:$0xff pattern:$0x73625140]
    %v3871 = vld.sshfl [vmem:[#allocation1 + $0x20] sm:$0xff pattern:$0x73625140]
    %v3872 = vsel %vm3136, %v3870, 0
    %v3874 = vsel %vm3136, %v3871, 0
    %v3877 = vsel %vm3143, %v3846, 0
    %3879 = vmatpush.bf16.msra.mxu0 0
    %3880 = vmatpush.bf16.msra.mxu0 0
    %3881 = vmatpush.bf16.msra.mxu0 0
    %3882 = vmatpush.bf16.msra.mxu0 0
    %3883 = vmatpush.bf16.msra.mxu0 0
    %3884 = vmatpush.bf16.msra.mxu0 0
    %3885 = vmatpush.bf16.msra.mxu0 0
    %3886 = vmatpush.bf16.msra.mxu0 %v3877
    %3887 = vmatmul.bf16.gmra.mxu0 %v3872
    %v3888 = vpop.f32.mrf.mxu0
    %v3889 = vadd.f32 0.0, %v3888
    %v3890 = vpop.f32.mrf.mxu0
    %v3891 = vadd.f32 0.0, %v3890
    %3892 = vmatmul.bf16.gmra.mxu0 %v3874
    %v3893 = vpop.f32.mrf.mxu0
    %v3894 = vadd.f32 0.0, %v3893
    %v3895 = vpop.f32.mrf.mxu0
    %v3896 = vadd.f32 0.0, %v3895
    %3897 = vdwg.mxu0
    %v3898 = vadd.f32 %v3833, %v3889
    %v3899 = vadd.f32 %v3834, %v3891
    %v3900 = vadd.f32 %v3835, %v3894
    %v3901 = vadd.f32 %v3836, %v3896
    %v3902 = vld [vmem:[%s2373] sm:$0x3]
    %v3903 = vld [vmem:[%s2373 + $0x4] sm:$0x3]
    %v3904 = vld [vmem:[%s2373 + $0x8] sm:$0x3]
    %v3905 = vld [vmem:[%s2373 + $0xc] sm:$0x3]
    %v3906 = vld [vmem:[%s2373 + $0x14] sm:$0x3]
    %v3907 = vld [vmem:[%s2373 + $0x18] sm:$0x3]
    %v3908 = vld [vmem:[%s2373 + $0x1c] sm:$0x3]
    %v3909 = vld [vmem:[%s2373 + $0x20] sm:$0x3]
    %s3910 = scalar_lea.vmem %s4, 28
    %v3911 = vld [vmem:[%s3910] sm:$0xf]
    %3913 = vst [vmem:[#allocation1] ss:$4 sm:$0xff] %v3902
    %s3915 = scalar_lea.vmem [#allocation1], 1
    %3916 = vst [vmem:[%s3915] ss:$4 sm:$0xff] %v3903
    %s3918 = scalar_lea.vmem [#allocation1], 2
    %3919 = vst [vmem:[%s3918] ss:$4 sm:$0xff] %v3904
    %s3921 = scalar_lea.vmem [#allocation1], 3
    %3922 = vst [vmem:[%s3921] ss:$4 sm:$0xff] %v3905
    %s3924 = scalar_lea.vmem [#allocation1], 32
    %3925 = vst [vmem:[%s3924] ss:$4 sm:$0xff] %v3906
    %s3927 = scalar_lea.vmem [#allocation1], 33
    %3928 = vst [vmem:[%s3927] ss:$4 sm:$0xff] %v3907
    %s3930 = scalar_lea.vmem [#allocation1], 34
    %3931 = vst [vmem:[%s3930] ss:$4 sm:$0xff] %v3908
    %s3933 = scalar_lea.vmem [#allocation1], 35
    %3934 = vst [vmem:[%s3933] ss:$4 sm:$0xff] %v3909
    %v3935 = vld.sshfl [vmem:[#allocation1] sm:$0xff pattern:$0x73625140]
    %v3937 = vld.sshfl [vmem:[#allocation1 + $0x20] sm:$0xff pattern:$0x73625140]
    %3939 = vrot.lane.b32.xlu0 %v3935, 120
    %v3940 = vpop.permute.xlu0 %3939
    %3941 = vrot.lane.b32.xlu0 %v3937, 120
    %v3942 = vpop.permute.xlu0 %3941
    %v3944 = vsel %vm3136, %v3940, 0
    %v3947 = vsel %vm3136, %v3942, 0
    %v3950 = vsel %vm3143, %v3911, 0
    %3952 = vmatpush.bf16.msra.mxu0 0
    %3953 = vmatpush.bf16.msra.mxu0 0
    %3954 = vmatpush.bf16.msra.mxu0 0
    %3955 = vmatpush.bf16.msra.mxu0 0
    %3956 = vmatpush.bf16.msra.mxu0 0
    %3957 = vmatpush.bf16.msra.mxu0 0
    %3958 = vmatpush.bf16.msra.mxu0 0
    %3959 = vmatpush.bf16.msra.mxu0 %v3950
    %3960 = vmatmul.bf16.gmra.mxu0 %v3944
    %v3961 = vpop.f32.mrf.mxu0
    %v3962 = vadd.f32 0.0, %v3961
    %v3963 = vpop.f32.mrf.mxu0
    %v3964 = vadd.f32 0.0, %v3963
    %3965 = vmatmul.bf16.gmra.mxu0 %v3947
    %v3966 = vpop.f32.mrf.mxu0
    %v3967 = vadd.f32 0.0, %v3966
    %v3968 = vpop.f32.mrf.mxu0
    %v3969 = vadd.f32 0.0, %v3968
    %3970 = vdwg.mxu0
    %v3971 = vadd.f32 %v3898, %v3962
    %v3972 = vadd.f32 %v3899, %v3964
    %v3973 = vadd.f32 %v3900, %v3967
    %v3974 = vadd.f32 %v3901, %v3969
    %v3975 = vld [vmem:[%s2373] sm:$0x7]
    %v3976 = vld [vmem:[%s2373 + $0x4] sm:$0x7]
    %v3977 = vld [vmem:[%s2373 + $0x8] sm:$0x7]
    %v3978 = vld [vmem:[%s2373 + $0xc] sm:$0x7]
    %v3979 = vld [vmem:[%s2373 + $0x14] sm:$0x7]
    %v3980 = vld [vmem:[%s2373 + $0x18] sm:$0x7]
    %v3981 = vld [vmem:[%s2373 + $0x1c] sm:$0x7]
    %v3982 = vld [vmem:[%s2373 + $0x20] sm:$0x7]
    %v3991 = vrot.slane %v3975, 2
    %v3992 = vrot.slane %v3976, 2
    %v3993 = vrot.slane %v3977, 2
    %v3994 = vrot.slane %v3978, 2
    %v3995 = vrot.slane %v3979, 2
    %v3996 = vrot.slane %v3980, 2
    %v3997 = vrot.slane %v3981, 2
    %v3998 = vrot.slane %v3982, 2
    %v4001 = vsel %vm134, %v3975, %v3991
    %v4002 = vsel %vm3236, %v3975, %v3991
    %v4004 = vrot.slane %v4002, 2
    %v4007 = vsel %vm134, %v3976, %v3992
    %v4008 = vsel %vm3236, %v3976, %v3992
    %v4010 = vrot.slane %v4008, 2
    %v4013 = vsel %vm134, %v3977, %v3993
    %v4014 = vsel %vm3236, %v3977, %v3993
    %v4016 = vrot.slane %v4014, 2
    %v4019 = vsel %vm134, %v3978, %v3994
    %v4020 = vsel %vm3236, %v3978, %v3994
    %v4022 = vrot.slane %v4020, 2
    %v4025 = vsel %vm134, %v3979, %v3995
    %v4026 = vsel %vm3236, %v3979, %v3995
    %v4028 = vrot.slane %v4026, 2
    %v4031 = vsel %vm134, %v3980, %v3996
    %v4032 = vsel %vm3236, %v3980, %v3996
    %v4034 = vrot.slane %v4032, 2
    %v4037 = vsel %vm134, %v3981, %v3997
    %v4038 = vsel %vm3236, %v3981, %v3997
    %v4040 = vrot.slane %v4038, 2
    %v4043 = vsel %vm134, %v3982, %v3998
    %v4044 = vsel %vm3236, %v3982, %v3998
    %v4046 = vrot.slane %v4044, 2
    %v4047 = vshrl.u32 %v4001, 16
    %v4049 = vrot.slane %v4047, 6
    %v4050 = vshll.u32 %v4001, 16
    %v4052 = vrot.slane %v4050, 7
    %v4053 = vor.u32 %v4049, %v4052
    %v4054 = vrot.slane %v4053, 2
    %v4056 = vshll.u32 %v4004, 16
    %v4058 = vrot.slane %v4056, 7
    %v4059 = vsel %vm3288, %v4054, %v4058
    %v4060 = vshrl.u32 %v4007, 16
    %v4062 = vrot.slane %v4060, 6
    %v4063 = vshll.u32 %v4007, 16
    %v4065 = vrot.slane %v4063, 7
    %v4066 = vor.u32 %v4062, %v4065
    %v4067 = vrot.slane %v4066, 2
    %v4069 = vshll.u32 %v4010, 16
    %v4071 = vrot.slane %v4069, 7
    %v4072 = vsel %vm3288, %v4067, %v4071
    %v4073 = vshrl.u32 %v4013, 16
    %v4075 = vrot.slane %v4073, 6
    %v4076 = vshll.u32 %v4013, 16
    %v4078 = vrot.slane %v4076, 7
    %v4079 = vor.u32 %v4075, %v4078
    %v4080 = vrot.slane %v4079, 2
    %v4082 = vshll.u32 %v4016, 16
    %v4084 = vrot.slane %v4082, 7
    %v4085 = vsel %vm3288, %v4080, %v4084
    %v4086 = vshrl.u32 %v4019, 16
    %v4088 = vrot.slane %v4086, 6
    %v4089 = vshll.u32 %v4019, 16
    %v4091 = vrot.slane %v4089, 7
    %v4092 = vor.u32 %v4088, %v4091
    %v4093 = vrot.slane %v4092, 2
    %v4095 = vshll.u32 %v4022, 16
    %v4097 = vrot.slane %v4095, 7
    %v4098 = vsel %vm3288, %v4093, %v4097
    %v4099 = vshrl.u32 %v4025, 16
    %v4101 = vrot.slane %v4099, 6
    %v4102 = vshll.u32 %v4025, 16
    %v4104 = vrot.slane %v4102, 7
    %v4105 = vor.u32 %v4101, %v4104
    %v4106 = vrot.slane %v4105, 2
    %v4108 = vshll.u32 %v4028, 16
    %v4110 = vrot.slane %v4108, 7
    %v4111 = vsel %vm3288, %v4106, %v4110
    %v4112 = vshrl.u32 %v4031, 16
    %v4114 = vrot.slane %v4112, 6
    %v4115 = vshll.u32 %v4031, 16
    %v4117 = vrot.slane %v4115, 7
    %v4118 = vor.u32 %v4114, %v4117
    %v4119 = vrot.slane %v4118, 2
    %v4121 = vshll.u32 %v4034, 16
    %v4123 = vrot.slane %v4121, 7
    %v4124 = vsel %vm3288, %v4119, %v4123
    %v4125 = vshrl.u32 %v4037, 16
    %v4127 = vrot.slane %v4125, 6
    %v4128 = vshll.u32 %v4037, 16
    %v4130 = vrot.slane %v4128, 7
    %v4131 = vor.u32 %v4127, %v4130
    %v4132 = vrot.slane %v4131, 2
    %v4134 = vshll.u32 %v4040, 16
    %v4136 = vrot.slane %v4134, 7
    %v4137 = vsel %vm3288, %v4132, %v4136
    %v4138 = vshrl.u32 %v4043, 16
    %v4140 = vrot.slane %v4138, 6
    %v4141 = vshll.u32 %v4043, 16
    %v4143 = vrot.slane %v4141, 7
    %v4144 = vor.u32 %v4140, %v4143
    %v4145 = vrot.slane %v4144, 2
    %v4147 = vshll.u32 %v4046, 16
    %v4149 = vrot.slane %v4147, 7
    %v4150 = vsel %vm3288, %v4145, %v4149
    %s4151 = scalar_lea.vmem %s4, 32
    %v4152 = vld [vmem:[%s4151] sm:$0xf]
    %4154 = vst [vmem:[#allocation1] ss:$4 sm:$0xff] %v4059
    %s4156 = scalar_lea.vmem [#allocation1], 1
    %4157 = vst [vmem:[%s4156] ss:$4 sm:$0xff] %v4072
    %s4159 = scalar_lea.vmem [#allocation1], 2
    %4160 = vst [vmem:[%s4159] ss:$4 sm:$0xff] %v4085
    %s4162 = scalar_lea.vmem [#allocation1], 3
    %4163 = vst [vmem:[%s4162] ss:$4 sm:$0xff] %v4098
    %s4165 = scalar_lea.vmem [#allocation1], 32
    %4166 = vst [vmem:[%s4165] ss:$4 sm:$0xff] %v4111
    %s4168 = scalar_lea.vmem [#allocation1], 33
    %4169 = vst [vmem:[%s4168] ss:$4 sm:$0xff] %v4124
    %s4171 = scalar_lea.vmem [#allocation1], 34
    %4172 = vst [vmem:[%s4171] ss:$4 sm:$0xff] %v4137
    %s4174 = scalar_lea.vmem [#allocation1], 35
    %4175 = vst [vmem:[%s4174] ss:$4 sm:$0xff] %v4150
    %v4176 = vld.sshfl [vmem:[#allocation1] sm:$0xff pattern:$0x73625140]
    %v4177 = vld.sshfl [vmem:[#allocation1 + $0x20] sm:$0xff pattern:$0x73625140]
    %v4178 = vsel %vm3136, %v4176, 0
    %v4180 = vsel %vm3136, %v4177, 0
    %v4183 = vsel %vm3143, %v4152, 0
    %4185 = vmatpush.bf16.msra.mxu0 0
    %4186 = vmatpush.bf16.msra.mxu0 0
    %4187 = vmatpush.bf16.msra.mxu0 0
    %4188 = vmatpush.bf16.msra.mxu0 0
    %4189 = vmatpush.bf16.msra.mxu0 0
    %4190 = vmatpush.bf16.msra.mxu0 0
    %4191 = vmatpush.bf16.msra.mxu0 0
    %4192 = vmatpush.bf16.msra.mxu0 %v4183
    %4193 = vmatmul.bf16.gmra.mxu0 %v4178
    %v4194 = vpop.f32.mrf.mxu0
    %v4195 = vadd.f32 0.0, %v4194
    %v4196 = vpop.f32.mrf.mxu0
    %v4197 = vadd.f32 0.0, %v4196
    %4198 = vmatmul.bf16.gmra.mxu0 %v4180
    %v4199 = vpop.f32.mrf.mxu0
    %v4200 = vadd.f32 0.0, %v4199
    %v4201 = vpop.f32.mrf.mxu0
    %v4202 = vadd.f32 0.0, %v4201
    %4203 = vdwg.mxu0
    %v4204 = vadd.f32 %v3971, %v4195
    %v4205 = vadd.f32 %v3972, %v4197
    %v4206 = vadd.f32 %v3973, %v4200
    %v4207 = vadd.f32 %v3974, %v4202
    %vm4208 = vcmask 261120
    %v4210 = vsel %vm4208, 1.0, 0
    %4212 = vmatpush.msra.mxu0 0.0
    %4213 = vmatpush.msra.mxu0 0.0
    %4214 = vmatpush.msra.mxu0 0.0
    %4215 = vmatpush.msra.mxu0 0.0
    %4216 = vmatpush.msra.mxu0 0.0
    %4217 = vmatpush.msra.mxu0 0.0
    %4218 = vmatpush.msra.mxu0 0.0
    %4219 = vmatpush.msra.mxu0 0.0
    %4220 = vmatpush.msra.mxu0 0.0
    %4221 = vmatpush.msra.mxu0 0.0
    %4222 = vmatpush.msra.mxu0 0.0
    %4223 = vmatpush.msra.mxu0 0.0
    %4224 = vmatpush.msra.mxu0 %v4207
    %4225 = vmatpush.msra.mxu0 %v4206
    %4226 = vmatpush.msra.mxu0 %v4205
    %4227 = vmatpush.msra.mxu0 %v4204
    %4228 = vmatmul.f32.gmra.mxu0 %v4210
    %v4229 = vpop.f32.mrf.mxu0
    %v4230 = vadd.f32 0.0, %v4229
    %4231 = vdwg.mxu0
    %v4232 = vmul.f32 %v4230, 0.03125
    %v4233 = vperm.slane %v4232, 0
    %v4234 = vsub.f32 %v4204, %v4233
    %v4235 = vsub.f32 %v4205, %v4233
    %v4236 = vsub.f32 %v4206, %v4233
    %v4237 = vsub.f32 %v4207, %v4233
    %v4238 = vmul.f32 %v4234, %v4234
    %v4239 = vmul.f32 %v4235, %v4235
    %v4240 = vmul.f32 %v4236, %v4236
    %v4241 = vmul.f32 %v4237, %v4237
    %4242 = vmatpush.msra.mxu0 0.0
    %4243 = vmatpush.msra.mxu0 0.0
    %4244 = vmatpush.msra.mxu0 0.0
    %4245 = vmatpush.msra.mxu0 0.0
    %4246 = vmatpush.msra.mxu0 0.0
    %4247 = vmatpush.msra.mxu0 0.0
    %4248 = vmatpush.msra.mxu0 0.0
    %4249 = vmatpush.msra.mxu0 0.0
    %4250 = vmatpush.msra.mxu0 0.0
    %4251 = vmatpush.msra.mxu0 0.0
    %4252 = vmatpush.msra.mxu0 0.0
    %4253 = vmatpush.msra.mxu0 0.0
    %4254 = vmatpush.msra.mxu0 %v4241
    %4255 = vmatpush.msra.mxu0 %v4240
    %4256 = vmatpush.msra.mxu0 %v4239
    %4257 = vmatpush.msra.mxu0 %v4238
    %4258 = vmatmul.f32.gmra.mxu0 %v4210
    %v4259 = vpop.f32.mrf.mxu0
    %v4260 = vadd.f32 0.0, %v4259
    %4261 = vdwg.mxu0
    %v4262 = vmul.f32 %v4260, 0.03125
    %v4263 = vld [vmem:[%s5] sm:$0x1]
    %v4264 = vadd.f32 %v4262, 1e-05
    %v4265 = vrsqrt.pop %v4264
    %v4266 = vmul.f32 %v4265, %v4264
    %v4267 = vmul.f32 %v4266, %v4265
    %v4268 = vmul.f32 0.5, %v4267
    %v4269 = vsub.f32 1.5, %v4268
    %v4270 = vmul.f32 %v4265, %v4269
    %vm4271 = vweird.f32 %v4264
    %vm4272 = vweird.f32 %v4265
    %vm4273 = vmor %vm4271, %vm4272
    %v4274 = vsel %vm4273, %v4265, %v4270
    %v4275 = vmul.f32 %v4263, %v4274
    %v4277 = vperm.slane %v4275, 0
    %v4279 = vmul.f32 %v4234, %v4277
    %v4280 = vmul.f32 %v4235, %v4277
    %v4281 = vmul.f32 %v4236, %v4277
    %v4282 = vmul.f32 %v4237, %v4277
    %v4283 = vld [vmem:[%s6] sm:$0x1]
    %v4285 = vperm.slane %v4283, 0
    %v4287 = vadd.f32 %v4279, %v4285
    %v4288 = vadd.f32 %v4280, %v4285
    %v4289 = vadd.f32 %v4281, %v4285
    %v4290 = vadd.f32 %v4282, %v4285
    %v4291 = vmax.f32 %v4287, 0.0
    %v4292 = vmax.f32 %v4288, 0.0
    %v4293 = vmax.f32 %v4289, 0.0
    %v4294 = vmax.f32 %v4290, 0.0
    %v4295 = vpack.c.bf16 %v4292, %v4291
    %v4296 = vpack.c.bf16 %v4294, %v4293
    %v4297 = vld [vmem:[%s7] sm:$0xf]
    %v4298 = vld [vmem:[%s7 + $0x4] sm:$0xf]
    %v4299 = vld [vmem:[%s8] sm:$0x1]
    %v4301 = vperm.slane %v4299, 0
    %v4305 = vunpack.c.l.b16 %v4297
    %v4306 = vunpack.c.l.b16 %v4298
    %v4307 = vpack.c.b16 %v4306, %v4305
    %vm4309 = vcmask 130048
    %v4311 = vsel %vm4309, %v4295, 0
    %v4314 = vsel %vm4309, %v4296, 0
    %4316 = vmatpush.bf16.msra.mxu0 0
    %4317 = vmatpush.bf16.msra.mxu0 0
    %4318 = vmatpush.bf16.msra.mxu0 0
    %4319 = vmatpush.bf16.msra.mxu0 0
    %4320 = vmatpush.bf16.msra.mxu0 0
    %4321 = vmatpush.bf16.msra.mxu0 0
    %4322 = vmatpush.bf16.msra.mxu0 0
    %4323 = vmatpush.bf16.msra.mxu0 %v4307
    %4324 = vmatmul.bf16.gmra.mxu0 %v4311
    %v4325 = vpop.f32.mrf.mxu0
    %v4326 = vadd.f32 %v4301, %v4325
    %v4327 = vpop.f32.mrf.mxu0
    %v4328 = vadd.f32 %v4301, %v4327
    %4329 = vmatmul.bf16.gmra.mxu0 %v4314
    %v4330 = vpop.f32.mrf.mxu0
    %v4331 = vadd.f32 %v4301, %v4330
    %v4332 = vpop.f32.mrf.mxu0
    %v4333 = vadd.f32 %v4301, %v4332
    %4334 = vdwg.mxu0
    %4335 = vst.msk [vmem:[#allocation3] sm:$0xff] %vm4208, %v4326
    %4336 = vst.msk [vmem:[#allocation3 + $0x8] sm:$0xff] %vm4208, %v4328
    %4337 = vst.msk [vmem:[#allocation3 + $0x10] sm:$0xff] %vm4208, %v4331
    %4338 = vst.msk [vmem:[#allocation3 + $0x18] sm:$0xff] %vm4208, %v4333
    // Predicated region
    $region38: #{conv_stem_forward.1} parent=1 // pred_check
      _
    $region39: #{conv_stem_forward.1} parent=1 // pred_check_branch
      %4340 = sbr.rel (0) target = $region41
    $region40: #{conv_stem_forward.1} parent=1 // pred_region
      %4342 = vsyncadd [#allocation4], 0
      %s4343 = sshll.u32 [#allocation3], 4
      %s4344 = int_to_ptr.vmem [resolvable:$true] %s4343
      %s4345 = sshll.u32 %s9, 4
      %s4346 = int_to_ptr.hbm [resolvable:$true] %s4345
      %4351 = dma.vmem_to_hbm [thread:$0]  %s4344, 512, %s4346, [#allocation4], 128, 128, 8
    $region41: #{conv_stem_forward.1} parent=1 // pred_fallthru
      _
    // Predicated region
    $region42: #{conv_stem_forward.1} parent=1 // pred_check
      _
    $region43: #{conv_stem_forward.1} parent=1 // pred_check_branch
      %4353 = sbr.rel (0) target = $region45
    $region44: #{conv_stem_forward.1} parent=1 // pred_region
      %4355 = dma.done [#allocation4], 512
    $region45: #{conv_stem_forward.1} parent=1 // pred_fallthru
      _
    %4356 = vsyncpa [#allocation4], 1

</llo_original>
